<compile_context>
chip_gen: v5e
topology: v5e:2x2
jax: 0.10.0
libtpu: 0.0.40
codegen_flags: <defaults>
</compile_context>

<pallas_src>
import functools

import jax
import jax.numpy as jnp
from jax.experimental import pallas as pl
from jax.experimental.pallas import tpu as pltpu

_NEG = -1e30


def _round_up(v, m):
    return (v + m - 1) // m * m


def _largest_divisor_tile(hw_pad, candidates):
    for t in candidates:
        if hw_pad % t == 0:
            return t
    return 128


# --------------------------------------------------------------------------
# Kernel 1: CAM attention matrix + fused K projection.
#   attn_c = softmax(rowmax(E) - E),  E = X X^T       (per batch element)
#   K      = Wk @ X + bk                              (streamed per key tile)
# --------------------------------------------------------------------------
def _cam_k_kernel(x_ref, wk_ref, bk_ref, attn_ref, k_ref, ec_scr):
    ki = pl.program_id(1)

    @pl.when(ki == 0)
    def _init():
        ec_scr[...] = jnp.zeros_like(ec_scr)

    xk = x_ref[0]                                            # (C, TC); padded cols are 0
    # K projection for this key tile (reused by the PAM kernel; computed once).
    k_ref[0] = (jnp.dot(wk_ref[...], xk, preferred_element_type=jnp.float32)
                + bk_ref[...]).astype(k_ref.dtype)           # (C8, TC)
    # Channel-energy accumulation; zero-padded columns contribute exactly zero.
    ec_scr[...] += jax.lax.dot_general(
        xk, xk, (((1,), (1,)), ((), ())),
        preferred_element_type=jnp.float32)                  # (C, C)

    @pl.when(ki == pl.num_programs(1) - 1)
    def _final():
        e = ec_scr[...]
        e_new = jnp.max(e, axis=-1, keepdims=True) - e
        p = jnp.exp(e_new - jnp.max(e_new, axis=-1, keepdims=True))
        attn_ref[0] = (p / jnp.sum(p, axis=-1, keepdims=True)).astype(attn_ref.dtype)


# --------------------------------------------------------------------------
# Kernel 2: flash-style PAM (online softmax) + fused CAM apply + residuals
#   out = gamma_p * (Wv @ (X @ attn_p^T) + bv) + gamma_c * (attn_c @ X) + 2 * X
# --------------------------------------------------------------------------
def _dan_kernel(g_ref, xq_ref, xk_ref, kp_ref, ac_ref, wq_ref, bq_ref,
                wv_ref, bv_ref, o_ref, q_scr, m_scr, l_scr, acc_scr,
                *, hw, needs_mask):
    ki = pl.program_id(2)
    nk = pl.num_programs(2)
    tk = xk_ref.shape[2]

    @pl.when(ki == 0)
    def _init():
        xq = xq_ref[0]                                       # (C, TQ)
        q = jnp.dot(wq_ref[...], xq,
                    preferred_element_type=jnp.float32) + bq_ref[...]
        q_scr[...] = q.astype(q_scr.dtype)                   # (C8, TQ), persists over k
        m_scr[...] = jnp.full_like(m_scr, _NEG)
        l_scr[...] = jnp.zeros_like(l_scr)
        acc_scr[...] = jnp.zeros_like(acc_scr)

    xk = xk_ref[0]                                           # (C, TK)
    k_blk = kp_ref[0]                                        # (C8, TK), precomputed

    def _attn_step(mask_pad):
        # sT[t, q] = sum_c K[c, t] * Q[c, q]  -> (TK, TQ); softmax runs over t
        # (sublanes), so the X@P matmul below stays lane-dense in (C, TQ).
        sT = jax.lax.dot_general(k_blk, q_scr[...], (((0,), (0,)), ((), ())),
                                 preferred_element_type=jnp.float32)
        if mask_pad:
            k_pos = ki * tk + jax.lax.broadcasted_iota(jnp.int32, (tk, 1), 0)
            sT = jnp.where(k_pos < hw, sT, _NEG)
        m_prev = m_scr[...]                                  # (1, TQ)
        m_new = jnp.maximum(m_prev, jnp.max(sT, axis=0, keepdims=True))
        alpha = jnp.exp(m_prev - m_new)
        p = jnp.exp(sT - m_new)                              # (TK, TQ)
        l_scr[...] = alpha * l_scr[...] + jnp.sum(p, axis=0, keepdims=True)
        # Accumulate X @ P; the Wv projection is applied once per q tile at the end.
        acc_scr[...] = alpha * acc_scr[...] + jnp.dot(
            xk, p.astype(xk.dtype), preferred_element_type=jnp.float32)
        m_scr[...] = m_new

    if needs_mask:
        # Zero-padded key columns only exist in the last key tile (pad < 128 <= TK)
        # and that tile always keeps at least one real key, so the online softmax
        # never sees an all-masked tile.  Interior tiles skip the mask entirely.
        @pl.when(ki == nk - 1)
        def _masked():
            _attn_step(True)

        @pl.when(ki < nk - 1)
        def _unmasked():
            _attn_step(False)
    else:
        _attn_step(False)

    @pl.when(ki == nk - 1)
    def _final():
        xq = xq_ref[0]
        # PAM: out_p = Wv @ (X @ attn^T) + bv   (attention rows sum to 1 -> bias once).
        ctx = (acc_scr[...] / l_scr[...]).astype(xq.dtype)   # (C, TQ)
        out_p = jnp.dot(wv_ref[...], ctx,
                        preferred_element_type=jnp.float32) + bv_ref[...]
        # CAM apply: out_c = attn_c @ X.
        out_c = jnp.dot(ac_ref[0], xq, preferred_element_type=jnp.float32)
        o_ref[0] = (g_ref[0, 0] * out_p + g_ref[0, 1] * out_c
                    + 2.0 * xq.astype(jnp.float32)).astype(o_ref.dtype)


# --------------------------------------------------------------------------
# Wrapper
# --------------------------------------------------------------------------
@functools.partial(jax.jit, static_argnames=("compute_dtype",))
def dan_forward(x, wq, bq, wk, bk, wv, bv, gamma_p, gamma_c,
                *, compute_dtype=jnp.bfloat16):
    B, C, H, W = x.shape
    HW = H * W
    C8 = wq.shape[0]
    cd = jnp.dtype(compute_dtype)
    out_dtype = x.dtype

    HW_pad = _round_up(HW, 128)
    needs_mask = HW_pad != HW
    TQ = _largest_divisor_tile(HW_pad, (512, 256, 128))         # PAM query tile
    TK = _largest_divisor_tile(HW_pad, (256, 128))              # PAM key tile
    TC = _largest_divisor_tile(HW_pad, (1024, 512, 256, 128))   # CAM / K-proj tile
    NQ, NK, NC = HW_pad // TQ, HW_pad // TK, HW_pad // TC

    x_flat = x.reshape(B, C, HW).astype(cd)
    if needs_mask:
        x_flat = jnp.pad(x_flat, ((0, 0), (0, 0), (0, HW_pad - HW)))

    wq_c = wq.astype(cd)
    wk_c = wk.astype(cd)
    wv_c = wv.astype(cd)
    bq_c = bq.reshape(C8, 1).astype(jnp.float32)
    bk_c = bk.reshape(C8, 1).astype(jnp.float32)
    bv_c = bv.reshape(C, 1).astype(jnp.float32)
    gammas = jnp.stack([jnp.asarray(gamma_p, jnp.float32).reshape(()),
                        jnp.asarray(gamma_c, jnp.float32).reshape(())]).reshape(1, 2)

    vmem_lim = 40 * 1024 * 1024   # stay well inside v7x's 64 MiB physical VMEM

    # ---- kernel 1: CAM channel attention (B, C, C) + K projection (B, C8, HW_pad) ----
    attn_c, k_proj = pl.pallas_call(
        _cam_k_kernel,
        out_shape=(jax.ShapeDtypeStruct((B, C, C), cd),
                   jax.ShapeDtypeStruct((B, C8, HW_pad), cd)),
        grid_spec=pltpu.PrefetchScalarGridSpec(
            num_scalar_prefetch=0,
            grid=(B, NC),
            in_specs=[pl.BlockSpec((1, C, TC), lambda b, k: (b, 0, k)),
                      pl.BlockSpec((C8, C), lambda b, k: (0, 0)),
                      pl.BlockSpec((C8, 1), lambda b, k: (0, 0))],
            out_specs=(pl.BlockSpec((1, C, C), lambda b, k: (b, 0, 0)),
                       pl.BlockSpec((1, C8, TC), lambda b, k: (b, 0, k))),
            scratch_shapes=[pltpu.VMEM((C, C), jnp.float32)]),
        compiler_params=pltpu.CompilerParams(
            dimension_semantics=("parallel", "arbitrary"),
            vmem_limit_bytes=vmem_lim),
    )(x_flat, wk_c, bk_c)

    # ---- kernel 2: flash-style PAM + fused CAM apply + residuals ----
    # NOTE: the grid-invariant operands (gammas, attn_c, wq, bq, wv, bv) could be
    # single-buffered via pipeline_mode=pl.Buffered(1) to save VMEM at very large
    # C; left default-buffered here for portability.
    out_flat = pl.pallas_call(
        functools.partial(_dan_kernel, hw=HW, needs_mask=needs_mask),
        out_shape=jax.ShapeDtypeStruct((B, C, HW_pad), out_dtype),
        grid_spec=pltpu.PrefetchScalarGridSpec(
            num_scalar_prefetch=0,
            grid=(B, NQ, NK),
            in_specs=[
                pl.BlockSpec((1, 2), lambda b, q, k: (0, 0),
                             memory_space=pltpu.MemorySpace.SMEM),     # gammas
                pl.BlockSpec((1, C, TQ), lambda b, q, k: (b, 0, q)),   # x, q tile
                pl.BlockSpec((1, C, TK), lambda b, q, k: (b, 0, k)),   # x, k tile
                pl.BlockSpec((1, C8, TK), lambda b, q, k: (b, 0, k)),  # K, k tile
                pl.BlockSpec((1, C, C), lambda b, q, k: (b, 0, 0)),    # attn_c
                pl.BlockSpec((C8, C), lambda b, q, k: (0, 0)),         # wq
                pl.BlockSpec((C8, 1), lambda b, q, k: (0, 0)),         # bq
                pl.BlockSpec((C, C), lambda b, q, k: (0, 0)),          # wv
                pl.BlockSpec((C, 1), lambda b, q, k: (0, 0)),          # bv
            ],
            out_specs=pl.BlockSpec((1, C, TQ), lambda b, q, k: (b, 0, q)),
            scratch_shapes=[
                pltpu.VMEM((C8, TQ), cd),          # Q tile (persists over key axis)
                pltpu.VMEM((1, TQ), jnp.float32),  # running max
                pltpu.VMEM((1, TQ), jnp.float32),  # running denominator
                pltpu.VMEM((C, TQ), jnp.float32),  # X @ P accumulator
            ]),
        compiler_params=pltpu.CompilerParams(
            dimension_semantics=("parallel", "parallel", "arbitrary"),
            vmem_limit_bytes=vmem_lim),
    )(gammas, x_flat, x_flat, k_proj, attn_c, wq_c, bq_c, wv_c, bv_c)

    if needs_mask:
        out_flat = out_flat[:, :, :HW]
    return out_flat.reshape(B, C, H, W)


# --------------------------------------------------------------------------
# Pure-JAX reference mirroring the PyTorch forward (full-precision matmuls)
# --------------------------------------------------------------------------
def dan_reference(x, wq, bq, wk, bk, wv, bv, gamma_p, gamma_c):
    B, C, H, W = x.shape
    HW = H * W
    xf = x.reshape(B, C, HW)
    hp = jax.lax.Precision.HIGHEST

    Q = jnp.einsum('oc,bci->boi', wq, xf, precision=hp) + bq[None, :, None]
    K = jnp.einsum('oc,bci->boi', wk, xf, precision=hp) + bk[None, :, None]
    V = jnp.einsum('oc,bci->boi', wv, xf, precision=hp) + bv[None, :, None]
    energy = jnp.einsum('bci,bcj->bij', Q, K, precision=hp)
    attn = jax.nn.softmax(energy, axis=-1)
    out_p = jnp.einsum('bcj,bij->bci', V, attn, precision=hp)
    p_out = gamma_p * out_p + xf

    energy_c = jnp.einsum('bci,bdi->bcd', xf, xf, precision=hp)
    e_new = jnp.max(energy_c, axis=-1, keepdims=True) - energy_c
    attn_c = jax.nn.softmax(e_new, axis=-1)
    out_c = jnp.einsum('bcd,bdi->bci', attn_c, xf, precision=hp)
    c_out = gamma_c * out_c + xf

    return (p_out + c_out).reshape(B, C, H, W)


if __name__ == "__main__":
    # Evaluate the kernel's f32 matmuls and the pure-JAX reference at full f32
    # precision so the comparison is not dominated by the TPU's default
    # (bfloat16-pass) matmul precision.
    jax.config.update("jax_default_matmul_precision", "highest")

    key = jax.random.PRNGKey(0)
    B, C, H, W = 2, 16, 8, 8
    C8 = max(C // 8, 1)

    ks = jax.random.split(key, 7)
    x = jax.random.normal(ks[0], (B, C, H, W), dtype=jnp.float32)
    wq = jax.random.normal(ks[1], (C8, C), dtype=jnp.float32) * 0.1
    bq = jax.random.normal(ks[2], (C8,), dtype=jnp.float32) * 0.1
    wk = jax.random.normal(ks[3], (C8, C), dtype=jnp.float32) * 0.1
    bk = jax.random.normal(ks[4], (C8,), dtype=jnp.float32) * 0.1
    wv = jax.random.normal(ks[5], (C, C), dtype=jnp.float32) * 0.1
    bv = jax.random.normal(ks[6], (C,), dtype=jnp.float32) * 0.1

    gp0 = jnp.zeros((), jnp.float32)
    gc0 = jnp.zeros((), jnp.float32)
    gp1 = jnp.asarray(0.5, jnp.float32)
    gc1 = jnp.asarray(0.75, jnp.float32)

    # 1) gamma = 0 (module init), f32 path: output must equal 2 * x exactly.
    out0 = jax.block_until_ready(
        dan_forward(x, wq, bq, wk, bk, wv, bv, gp0, gc0, compute_dtype=jnp.float32))
    assert out0.shape == (B, C, H, W)
    err0 = float(jnp.max(jnp.abs(out0 - 2.0 * x)))
    assert jnp.allclose(out0, 2.0 * x, atol=1e-5, rtol=1e-5), f"gamma=0 max err {err0}"

    # 2) f32 path, non-zero gammas, vs pure-JAX reference.
    out1 = jax.block_until_ready(
        dan_forward(x, wq, bq, wk, bk, wv, bv, gp1, gc1, compute_dtype=jnp.float32))
    ref1 = dan_reference(x, wq, bq, wk, bk, wv, bv, gp1, gc1)
    err1 = float(jnp.max(jnp.abs(out1 - ref1)))
    assert jnp.allclose(out1, ref1, atol=2e-2, rtol=2e-2), f"f32 max err {err1}"

    # 3) Multi-tile online-softmax path (HW not a multiple of 128 -> padding +
    #    several key/query tiles), f32.
    x2 = jax.random.normal(jax.random.PRNGKey(1), (1, C, 24, 24), dtype=jnp.float32)
    out3 = jax.block_until_ready(
        dan_forward(x2, wq, bq, wk, bk, wv, bv, gp1, gc1, compute_dtype=jnp.float32))
    ref3 = dan_reference(x2, wq, bq, wk, bk, wv, bv, gp1, gc1)
    err3 = float(jnp.max(jnp.abs(out3 - ref3)))
    assert jnp.allclose(out3, ref3, atol=2e-2, rtol=2e-2), f"multi-tile max err {err3}"

    # 4) bf16 matmul-input path vs a reference evaluated on bf16-rounded inputs.
    out2 = jax.block_until_ready(
        dan_forward(x, wq, bq, wk, bk, wv, bv, gp1, gc1, compute_dtype=jnp.bfloat16))
    rnd = lambda a: a.astype(jnp.bfloat16).astype(jnp.float32)
    ref2 = dan_reference(rnd(x), rnd(wq), rnd(bq), rnd(wk), rnd(bk),
                         rnd(wv), rnd(bv), gp1, gc1)
    err2 = float(jnp.max(jnp.abs(out2 - ref2)))
    assert jnp.allclose(out2, ref2, atol=4e-2, rtol=4e-2), f"bf16 max err {err2}"

    print("KERNEL_OK")
</pallas_src>

<mosaic_0001>
module attributes {stable_mosaic.version = 11 : i64} {
  func.func @_cam_k_kernel(%arg0: i32, %arg1: i32, %arg2: memref<1x16x128xf32, #tpu.memory_space<vmem>>, %arg3: memref<2x16xf32, #tpu.memory_space<vmem>>, %arg4: memref<2x1xf32, #tpu.memory_space<vmem>>, %arg5: memref<1x16x16xf32, #tpu.memory_space<vmem>>, %arg6: memref<1x2x128xf32, #tpu.memory_space<vmem>>, %arg7: memref<16x16xf32, #tpu.memory_space<vmem>>) attributes {dimension_semantics = [#tpu.dimension_semantics<parallel>, #tpu.dimension_semantics<arbitrary>], iteration_bounds = array<i64: 2, 1>, scalar_prefetch = 0 : i64, scratch_operands = 1 : i64, tpu.core_type = #tpu.core_type<tc>, window_params = [{transform_indices = @transform_0, window_bounds = array<i64: 1, 16, 128>}, {pipeline_mode = #tpu.pipeline_mode<synchronous>, transform_indices = @transform_1, window_bounds = array<i64: 2, 16>}, {pipeline_mode = #tpu.pipeline_mode<synchronous>, transform_indices = @transform_2, window_bounds = array<i64: 2, 1>}, {transform_indices = @transform_3, window_bounds = array<i64: 1, 16, 16>}, {transform_indices = @transform_4, window_bounds = array<i64: 1, 2, 128>}]} {
    %c0_i32 = arith.constant 0 : i32
    %0 = arith.cmpi eq, %arg1, %c0_i32 : i32
    %1 = arith.extui %0 : i1 to i32
    %c0_i32_0 = arith.constant 0 : i32
    %2 = arith.cmpi ne, %1, %c0_i32_0 : i32
    scf.if %2 {
      %cst_17 = arith.constant 0.000000e+00 : f32
      %20 = vector.broadcast %cst_17 : f32 to vector<16x16xf32>
      %c0_18 = arith.constant 0 : index
      %c0_19 = arith.constant 0 : index
      %21 = vector.load %arg7[%c0_18, %c0_19] : memref<16x16xf32, #tpu.memory_space<vmem>>, vector<16x16xf32>
      tpu.vector_store %arg7[%c0_18, %c0_19], %20 {strides = array<i32>} : memref<16x16xf32, #tpu.memory_space<vmem>>, vector<16x16xf32>,
    } else {
    }
    %c0 = arith.constant 0 : index
    %c0_1 = arith.constant 0 : index
    %c0_2 = arith.constant 0 : index
    %3 = vector.load %arg2[%c0, %c0_1, %c0_2] : memref<1x16x128xf32, #tpu.memory_space<vmem>>, vector<1x16x128xf32>
    %4 = vector.shape_cast %3 : vector<1x16x128xf32> to vector<16x128xf32>
    %c0_3 = arith.constant 0 : index
    %c0_4 = arith.constant 0 : index
    %5 = vector.load %arg3[%c0_3, %c0_4] : memref<2x16xf32, #tpu.memory_space<vmem>>, vector<2x16xf32>
    %cst = arith.constant dense<0.000000e+00> : vector<2x128xf32>
    %6 = tpu.matmul %5, %4, %cst {dimension_numbers = #tpu.dot_dimension_numbers<[1], [0], [0], [1], [0, 0, 1, 1], [], []>, precision = #tpu.contract_precision<fp32>} : vector<2x16xf32>, vector<16x128xf32>, vector<2x128xf32> -> vector<2x128xf32>
    %c0_5 = arith.constant 0 : index
    %c0_6 = arith.constant 0 : index
    %7 = vector.load %arg4[%c0_5, %c0_6] : memref<2x1xf32, #tpu.memory_space<vmem>>, vector<2x1xf32>
    %8 = vector.broadcast %7 : vector<2x1xf32> to vector<2x128xf32>
    %9 = arith.addf %6, %8 : vector<2x128xf32>
    %c0_7 = arith.constant 0 : index
    %c0_8 = arith.constant 0 : index
    %c0_9 = arith.constant 0 : index
    %10 = vector.load %arg6[%c0_7, %c0_8, %c0_9] : memref<1x2x128xf32, #tpu.memory_space<vmem>>, vector<1x2x128xf32>
    %11 = vector.shape_cast %10 : vector<1x2x128xf32> to vector<2x128xf32>
    %12 = vector.shape_cast %9 : vector<2x128xf32> to vector<1x2x128xf32>
    tpu.vector_store %arg6[%c0_7, %c0_8, %c0_9], %12 {strides = array<i32>} : memref<1x2x128xf32, #tpu.memory_space<vmem>>, vector<1x2x128xf32>,
    %c0_10 = arith.constant 0 : index
    %c0_11 = arith.constant 0 : index
    %13 = vector.load %arg7[%c0_10, %c0_11] : memref<16x16xf32, #tpu.memory_space<vmem>>, vector<16x16xf32>
    %cst_12 = arith.constant dense<0.000000e+00> : vector<16x16xf32>
    %14 = tpu.matmul %4, %4, %cst_12 {dimension_numbers = #tpu.dot_dimension_numbers<[1], [1], [0], [0], [0, 0, 1, 0], [], []>, precision = #tpu.contract_precision<fp32>} : vector<16x128xf32>, vector<16x128xf32>, vector<16x16xf32> -> vector<16x16xf32>
    %15 = arith.addf %13, %14 : vector<16x16xf32>
    %c0_13 = arith.constant 0 : index
    %c0_14 = arith.constant 0 : index
    %16 = vector.load %arg7[%c0_13, %c0_14] : memref<16x16xf32, #tpu.memory_space<vmem>>, vector<16x16xf32>
    tpu.vector_store %arg7[%c0_13, %c0_14], %15 {strides = array<i32>} : memref<16x16xf32, #tpu.memory_space<vmem>>, vector<16x16xf32>,
    %c0_i32_15 = arith.constant 0 : i32
    %17 = arith.cmpi eq, %arg1, %c0_i32_15 : i32
    %18 = arith.extui %17 : i1 to i32
    %c0_i32_16 = arith.constant 0 : i32
    %19 = arith.cmpi ne, %18, %c0_i32_16 : i32
    scf.if %19 {
      %c0_17 = arith.constant 0 : index
      %c0_18 = arith.constant 0 : index
      %20 = vector.load %arg7[%c0_17, %c0_18] : memref<16x16xf32, #tpu.memory_space<vmem>>, vector<16x16xf32>
      %cst_19 = arith.constant dense<0xFF800000> : vector<16xf32>
      %21 = vector.multi_reduction <maximumf>, %20, %cst_19 [1] : vector<16x16xf32> to vector<16xf32>
      %22 = vector.shape_cast %21 : vector<16xf32> to vector<16x1xf32>
      %23 = vector.broadcast %22 : vector<16x1xf32> to vector<16x16xf32>
      %24 = arith.subf %23, %20 : vector<16x16xf32>
      %cst_20 = arith.constant dense<0xFF800000> : vector<16xf32>
      %25 = vector.multi_reduction <maximumf>, %24, %cst_20 [1] : vector<16x16xf32> to vector<16xf32>
      %26 = vector.shape_cast %25 : vector<16xf32> to vector<16x1xf32>
      %27 = vector.broadcast %26 : vector<16x1xf32> to vector<16x16xf32>
      %28 = arith.subf %24, %27 : vector<16x16xf32>
      %29 = math.exp %28 : vector<16x16xf32>
      %cst_21 = arith.constant dense<0.000000e+00> : vector<16xf32>
      %30 = vector.multi_reduction <add>, %29, %cst_21 [1] : vector<16x16xf32> to vector<16xf32>
      %31 = vector.shape_cast %30 : vector<16xf32> to vector<16x1xf32>
      %32 = vector.broadcast %31 : vector<16x1xf32> to vector<16x16xf32>
      %33 = arith.divf %29, %32 : vector<16x16xf32>
      %c0_22 = arith.constant 0 : index
      %c0_23 = arith.constant 0 : index
      %c0_24 = arith.constant 0 : index
      %34 = vector.load %arg5[%c0_22, %c0_23, %c0_24] : memref<1x16x16xf32, #tpu.memory_space<vmem>>, vector<1x16x16xf32>
      %35 = vector.shape_cast %34 : vector<1x16x16xf32> to vector<16x16xf32>
      %36 = vector.shape_cast %33 : vector<16x16xf32> to vector<1x16x16xf32>
      tpu.vector_store %arg5[%c0_22, %c0_23, %c0_24], %36 {strides = array<i32>} : memref<1x16x16xf32, #tpu.memory_space<vmem>>, vector<1x16x16xf32>,
    } else {
    }
    return
  }
  func.func @transform_0(%arg0: i32, %arg1: i32) -> (i32, i32, i32) {
    %c0_i32 = arith.constant 0 : i32
    %c0_i32_0 = arith.constant 0 : i32
    return %arg0, %c0_i32, %arg1 : i32, i32, i32
  }
  func.func @transform_1(%arg0: i32, %arg1: i32) -> (i32, i32) {
    %c0_i32 = arith.constant 0 : i32
    %c0_i32_0 = arith.constant 0 : i32
    %c0_i32_1 = arith.constant 0 : i32
    return %c0_i32, %c0_i32_0 : i32, i32
  }
  func.func @transform_2(%arg0: i32, %arg1: i32) -> (i32, i32) {
    %c0_i32 = arith.constant 0 : i32
    %c0_i32_0 = arith.constant 0 : i32
    %c0_i32_1 = arith.constant 0 : i32
    return %c0_i32, %c0_i32_0 : i32, i32
  }
  func.func @transform_3(%arg0: i32, %arg1: i32) -> (i32, i32, i32) {
    %c0_i32 = arith.constant 0 : i32
    %c0_i32_0 = arith.constant 0 : i32
    %c0_i32_1 = arith.constant 0 : i32
    return %arg0, %c0_i32, %c0_i32_0 : i32, i32, i32
  }
  func.func @transform_4(%arg0: i32, %arg1: i32) -> (i32, i32, i32) {
    %c0_i32 = arith.constant 0 : i32
    %c0_i32_0 = arith.constant 0 : i32
    return %arg0, %c0_i32, %arg1 : i32, i32, i32
  }
}

module attributes {stable_mosaic.version = 11 : i64} {
  func.func @_dan_kernel(%arg0: i32, %arg1: i32, %arg2: i32, %arg3: memref<1x2xf32, #tpu.memory_space<smem>>, %arg4: memref<1x16x128xf32, #tpu.memory_space<vmem>>, %arg5: memref<1x16x128xf32, #tpu.memory_space<vmem>>, %arg6: memref<1x2x128xf32, #tpu.memory_space<vmem>>, %arg7: memref<1x16x16xf32, #tpu.memory_space<vmem>>, %arg8: memref<2x16xf32, #tpu.memory_space<vmem>>, %arg9: memref<2x1xf32, #tpu.memory_space<vmem>>, %arg10: memref<16x16xf32, #tpu.memory_space<vmem>>, %arg11: memref<16x1xf32, #tpu.memory_space<vmem>>, %arg12: memref<1x16x128xf32, #tpu.memory_space<vmem>>, %arg13: memref<2x128xf32, #tpu.memory_space<vmem>>, %arg14: memref<1x128xf32, #tpu.memory_space<vmem>>, %arg15: memref<1x128xf32, #tpu.memory_space<vmem>>, %arg16: memref<16x128xf32, #tpu.memory_space<vmem>>) attributes {dimension_semantics = [#tpu.dimension_semantics<parallel>, #tpu.dimension_semantics<parallel>, #tpu.dimension_semantics<arbitrary>], iteration_bounds = array<i64: 2, 1, 1>, scalar_prefetch = 0 : i64, scratch_operands = 4 : i64, tpu.core_type = #tpu.core_type<tc>, window_params = [{transform_indices = @transform_0, window_bounds = array<i64: 1, 2>}, {transform_indices = @transform_1, window_bounds = array<i64: 1, 16, 128>}, {transform_indices = @transform_2, window_bounds = array<i64: 1, 16, 128>}, {transform_indices = @transform_3, window_bounds = array<i64: 1, 2, 128>}, {transform_indices = @transform_4, window_bounds = array<i64: 1, 16, 16>}, {pipeline_mode = #tpu.pipeline_mode<synchronous>, transform_indices = @transform_5, window_bounds = array<i64: 2, 16>}, {pipeline_mode = #tpu.pipeline_mode<synchronous>, transform_indices = @transform_6, window_bounds = array<i64: 2, 1>}, {pipeline_mode = #tpu.pipeline_mode<synchronous>, transform_indices = @transform_7, window_bounds = array<i64: 16, 16>}, {pipeline_mode = #tpu.pipeline_mode<synchronous>, transform_indices = @transform_8, window_bounds = array<i64: 16, 1>}, {transform_indices = @transform_9, window_bounds = array<i64: 1, 16, 128>}]} {
    %c0_i32 = arith.constant 0 : i32
    %0 = arith.cmpi eq, %arg2, %c0_i32 : i32
    %1 = arith.extui %0 : i1 to i32
    %c0_i32_0 = arith.constant 0 : i32
    %2 = arith.cmpi ne, %1, %c0_i32_0 : i32
    scf.if %2 {
      %c0_12 = arith.constant 0 : index
      %c0_13 = arith.constant 0 : index
      %c0_14 = arith.constant 0 : index
      %16 = vector.load %arg4[%c0_12, %c0_13, %c0_14] : memref<1x16x128xf32, #tpu.memory_space<vmem>>, vector<1x16x128xf32>
      %17 = vector.shape_cast %16 : vector<1x16x128xf32> to vector<16x128xf32>
      %c0_15 = arith.constant 0 : index
      %c0_16 = arith.constant 0 : index
      %18 = vector.load %arg8[%c0_15, %c0_16] : memref<2x16xf32, #tpu.memory_space<vmem>>, vector<2x16xf32>
      %cst = arith.constant dense<0.000000e+00> : vector<2x128xf32>
      %19 = tpu.matmul %18, %17, %cst {dimension_numbers = #tpu.dot_dimension_numbers<[1], [0], [0], [1], [0, 0, 1, 1], [], []>, precision = #tpu.contract_precision<fp32>} : vector<2x16xf32>, vector<16x128xf32>, vector<2x128xf32> -> vector<2x128xf32>
      %c0_17 = arith.constant 0 : index
      %c0_18 = arith.constant 0 : index
      %20 = vector.load %arg9[%c0_17, %c0_18] : memref<2x1xf32, #tpu.memory_space<vmem>>, vector<2x1xf32>
      %21 = vector.broadcast %20 : vector<2x1xf32> to vector<2x128xf32>
      %22 = arith.addf %19, %21 : vector<2x128xf32>
      %c0_19 = arith.constant 0 : index
      %c0_20 = arith.constant 0 : index
      %23 = vector.load %arg13[%c0_19, %c0_20] : memref<2x128xf32, #tpu.memory_space<vmem>>, vector<2x128xf32>
      tpu.vector_store %arg13[%c0_19, %c0_20], %22 {strides = array<i32>} : memref<2x128xf32, #tpu.memory_space<vmem>>, vector<2x128xf32>,
      %cst_21 = arith.constant -1.000000e+30 : f32
      %24 = vector.broadcast %cst_21 : f32 to vector<1x128xf32>
      %c0_22 = arith.constant 0 : index
      %c0_23 = arith.constant 0 : index
      %25 = vector.load %arg14[%c0_22, %c0_23] : memref<1x128xf32, #tpu.memory_space<vmem>>, vector<1x128xf32>
      tpu.vector_store %arg14[%c0_22, %c0_23], %24 {strides = array<i32>} : memref<1x128xf32, #tpu.memory_space<vmem>>, vector<1x128xf32>,
      %cst_24 = arith.constant 0.000000e+00 : f32
      %26 = vector.broadcast %cst_24 : f32 to vector<1x128xf32>
      %c0_25 = arith.constant 0 : index
      %c0_26 = arith.constant 0 : index
      %27 = vector.load %arg15[%c0_25, %c0_26] : memref<1x128xf32, #tpu.memory_space<vmem>>, vector<1x128xf32>
      tpu.vector_store %arg15[%c0_25, %c0_26], %26 {strides = array<i32>} : memref<1x128xf32, #tpu.memory_space<vmem>>, vector<1x128xf32>,
      %cst_27 = arith.constant 0.000000e+00 : f32
      %28 = vector.broadcast %cst_27 : f32 to vector<16x128xf32>
      %c0_28 = arith.constant 0 : index
      %c0_29 = arith.constant 0 : index
      %29 = vector.load %arg16[%c0_28, %c0_29] : memref<16x128xf32, #tpu.memory_space<vmem>>, vector<16x128xf32>
      tpu.vector_store %arg16[%c0_28, %c0_29], %28 {strides = array<i32>} : memref<16x128xf32, #tpu.memory_space<vmem>>, vector<16x128xf32>,
    } else {
    }
    %c0 = arith.constant 0 : index
    %c0_1 = arith.constant 0 : index
    %c0_2 = arith.constant 0 : index
    %3 = vector.load %arg5[%c0, %c0_1, %c0_2] : memref<1x16x128xf32, #tpu.memory_space<vmem>>, vector<1x16x128xf32>
    %4 = vector.shape_cast %3 : vector<1x16x128xf32> to vector<16x128xf32>
    %c0_3 = arith.constant 0 : index
    %c0_4 = arith.constant 0 : index
    %c0_5 = arith.constant 0 : index
    %5 = vector.load %arg6[%c0_3, %c0_4, %c0_5] : memref<1x2x128xf32, #tpu.memory_space<vmem>>, vector<1x2x128xf32>
    %6 = vector.shape_cast %5 : vector<1x2x128xf32> to vector<2x128xf32>
    %c0_i32_6 = arith.constant 0 : i32
    %7 = arith.cmpi eq, %arg2, %c0_i32_6 : i32
    %8 = arith.extui %7 : i1 to i32
    %c0_i32_7 = arith.constant 0 : i32
    %9 = arith.cmpi ne, %8, %c0_i32_7 : i32
    scf.if %9 {
      %c0_12 = arith.constant 0 : index
      %c0_13 = arith.constant 0 : index
      %16 = vector.load %arg13[%c0_12, %c0_13] : memref<2x128xf32, #tpu.memory_space<vmem>>, vector<2x128xf32>
      %cst = arith.constant dense<0.000000e+00> : vector<128x128xf32>
      %17 = tpu.matmul %6, %16, %cst {dimension_numbers = #tpu.dot_dimension_numbers<[0], [0], [1], [1], [0, 1, 1, 1], [], []>, precision = #tpu.contract_precision<fp32>} : vector<2x128xf32>, vector<2x128xf32>, vector<128x128xf32> -> vector<128x128xf32>
      %c128_i32 = arith.constant 128 : i32
      %18 = arith.muli %arg2, %c128_i32 : i32
      %19 = tpu.iota {dimensions = array<i32: 0>} : vector<128x1xi32>
      %20 = vector.broadcast %18 : i32 to vector<128x1xi32>
      %21 = arith.addi %20, %19 : vector<128x1xi32>
      %c64_i32 = arith.constant 64 : i32
      %22 = vector.broadcast %c64_i32 : i32 to vector<128x1xi32>
      %23 = arith.cmpi slt, %21, %22 : vector<128x1xi32>
      %cst_14 = arith.constant -1.000000e+30 : f32
      %24 = vector.shape_cast %23 : vector<128x1xi1> to vector<128x1xi1>
      %25 = vector.broadcast %24 : vector<128x1xi1> to vector<128x128xi1>
      %26 = vector.broadcast %cst_14 : f32 to vector<128x128xf32>
      %27 = arith.select %25, %17, %26 : vector<128x128xi1>, vector<128x128xf32>
      %c0_15 = arith.constant 0 : index
      %c0_16 = arith.constant 0 : index
      %28 = vector.load %arg14[%c0_15, %c0_16] : memref<1x128xf32, #tpu.memory_space<vmem>>, vector<1x128xf32>
      %cst_17 = arith.constant dense<0xFF800000> : vector<128xf32>
      %29 = vector.multi_reduction <maximumf>, %27, %cst_17 [0] : vector<128x128xf32> to vector<128xf32>
      %30 = vector.shape_cast %29 : vector<128xf32> to vector<1x128xf32>
      %31 = arith.maximumf %28, %30 : vector<1x128xf32>
      %32 = arith.subf %28, %31 : vector<1x128xf32>
      %33 = math.exp %32 : vector<1x128xf32>
      %34 = vector.broadcast %31 : vector<1x128xf32> to vector<128x128xf32>
      %35 = arith.subf %27, %34 : vector<128x128xf32>
      %36 = math.exp %35 : vector<128x128xf32>
      %c0_18 = arith.constant 0 : index
      %c0_19 = arith.constant 0 : index
      %37 = vector.load %arg15[%c0_18, %c0_19] : memref<1x128xf32, #tpu.memory_space<vmem>>, vector<1x128xf32>
      %38 = arith.mulf %33, %37 : vector<1x128xf32>
      %cst_20 = arith.constant dense<0.000000e+00> : vector<128xf32>
      %39 = vector.multi_reduction <add>, %36, %cst_20 [0] : vector<128x128xf32> to vector<128xf32>
      %40 = vector.shape_cast %39 : vector<128xf32> to vector<1x128xf32>
      %41 = arith.addf %38, %40 : vector<1x128xf32>
      %c0_21 = arith.constant 0 : index
      %c0_22 = arith.constant 0 : index
      %42 = vector.load %arg15[%c0_21, %c0_22] : memref<1x128xf32, #tpu.memory_space<vmem>>, vector<1x128xf32>
      tpu.vector_store %arg15[%c0_21, %c0_22], %41 {strides = array<i32>} : memref<1x128xf32, #tpu.memory_space<vmem>>, vector<1x128xf32>,
      %c0_23 = arith.constant 0 : index
      %c0_24 = arith.constant 0 : index
      %43 = vector.load %arg16[%c0_23, %c0_24] : memref<16x128xf32, #tpu.memory_space<vmem>>, vector<16x128xf32>
      %44 = vector.broadcast %33 : vector<1x128xf32> to vector<16x128xf32>
      %45 = arith.mulf %44, %43 : vector<16x128xf32>
      %cst_25 = arith.constant dense<0.000000e+00> : vector<16x128xf32>
      %46 = tpu.matmul %4, %36, %cst_25 {dimension_numbers = #tpu.dot_dimension_numbers<[1], [0], [0], [1], [0, 0, 1, 1], [], []>, precision = #tpu.contract_precision<fp32>} : vector<16x128xf32>, vector<128x128xf32>, vector<16x128xf32> -> vector<16x128xf32>
      %47 = arith.addf %45, %46 : vector<16x128xf32>
      %c0_26 = arith.constant 0 : index
      %c0_27 = arith.constant 0 : index
      %48 = vector.load %arg16[%c0_26, %c0_27] : memref<16x128xf32, #tpu.memory_space<vmem>>, vector<16x128xf32>
      tpu.vector_store %arg16[%c0_26, %c0_27], %47 {strides = array<i32>} : memref<16x128xf32, #tpu.memory_space<vmem>>, vector<16x128xf32>,
      %c0_28 = arith.constant 0 : index
      %c0_29 = arith.constant 0 : index
      %49 = vector.load %arg14[%c0_28, %c0_29] : memref<1x128xf32, #tpu.memory_space<vmem>>, vector<1x128xf32>
      tpu.vector_store %arg14[%c0_28, %c0_29], %31 {strides = array<i32>} : memref<1x128xf32, #tpu.memory_space<vmem>>, vector<1x128xf32>,
    } else {
    }
    %c0_i32_8 = arith.constant 0 : i32
    %10 = arith.cmpi slt, %arg2, %c0_i32_8 : i32
    %11 = arith.extui %10 : i1 to i32
    %c0_i32_9 = arith.constant 0 : i32
    %12 = arith.cmpi ne, %11, %c0_i32_9 : i32
    scf.if %12 {
      %c0_12 = arith.constant 0 : index
      %c0_13 = arith.constant 0 : index
      %16 = vector.load %arg13[%c0_12, %c0_13] : memref<2x128xf32, #tpu.memory_space<vmem>>, vector<2x128xf32>
      %cst = arith.constant dense<0.000000e+00> : vector<128x128xf32>
      %17 = tpu.matmul %6, %16, %cst {dimension_numbers = #tpu.dot_dimension_numbers<[0], [0], [1], [1], [0, 1, 1, 1], [], []>, precision = #tpu.contract_precision<fp32>} : vector<2x128xf32>, vector<2x128xf32>, vector<128x128xf32> -> vector<128x128xf32>
      %c0_14 = arith.constant 0 : index
      %c0_15 = arith.constant 0 : index
      %18 = vector.load %arg14[%c0_14, %c0_15] : memref<1x128xf32, #tpu.memory_space<vmem>>, vector<1x128xf32>
      %cst_16 = arith.constant dense<0xFF800000> : vector<128xf32>
      %19 = vector.multi_reduction <maximumf>, %17, %cst_16 [0] : vector<128x128xf32> to vector<128xf32>
      %20 = vector.shape_cast %19 : vector<128xf32> to vector<1x128xf32>
      %21 = arith.maximumf %18, %20 : vector<1x128xf32>
      %22 = arith.subf %18, %21 : vector<1x128xf32>
      %23 = math.exp %22 : vector<1x128xf32>
      %24 = vector.broadcast %21 : vector<1x128xf32> to vector<128x128xf32>
      %25 = arith.subf %17, %24 : vector<128x128xf32>
      %26 = math.exp %25 : vector<128x128xf32>
      %c0_17 = arith.constant 0 : index
      %c0_18 = arith.constant 0 : index
      %27 = vector.load %arg15[%c0_17, %c0_18] : memref<1x128xf32, #tpu.memory_space<vmem>>, vector<1x128xf32>
      %28 = arith.mulf %23, %27 : vector<1x128xf32>
      %cst_19 = arith.constant dense<0.000000e+00> : vector<128xf32>
      %29 = vector.multi_reduction <add>, %26, %cst_19 [0] : vector<128x128xf32> to vector<128xf32>
      %30 = vector.shape_cast %29 : vector<128xf32> to vector<1x128xf32>
      %31 = arith.addf %28, %30 : vector<1x128xf32>
      %c0_20 = arith.constant 0 : index
      %c0_21 = arith.constant 0 : index
      %32 = vector.load %arg15[%c0_20, %c0_21] : memref<1x128xf32, #tpu.memory_space<vmem>>, vector<1x128xf32>
      tpu.vector_store %arg15[%c0_20, %c0_21], %31 {strides = array<i32>} : memref<1x128xf32, #tpu.memory_space<vmem>>, vector<1x128xf32>,
      %c0_22 = arith.constant 0 : index
      %c0_23 = arith.constant 0 : index
      %33 = vector.load %arg16[%c0_22, %c0_23] : memref<16x128xf32, #tpu.memory_space<vmem>>, vector<16x128xf32>
      %34 = vector.broadcast %23 : vector<1x128xf32> to vector<16x128xf32>
      %35 = arith.mulf %34, %33 : vector<16x128xf32>
      %cst_24 = arith.constant dense<0.000000e+00> : vector<16x128xf32>
      %36 = tpu.matmul %4, %26, %cst_24 {dimension_numbers = #tpu.dot_dimension_numbers<[1], [0], [0], [1], [0, 0, 1, 1], [], []>, precision = #tpu.contract_precision<fp32>} : vector<16x128xf32>, vector<128x128xf32>, vector<16x128xf32> -> vector<16x128xf32>
      %37 = arith.addf %35, %36 : vector<16x128xf32>
      %c0_25 = arith.constant 0 : index
      %c0_26 = arith.constant 0 : index
      %38 = vector.load %arg16[%c0_25, %c0_26] : memref<16x128xf32, #tpu.memory_space<vmem>>, vector<16x128xf32>
      tpu.vector_store %arg16[%c0_25, %c0_26], %37 {strides = array<i32>} : memref<16x128xf32, #tpu.memory_space<vmem>>, vector<16x128xf32>,
      %c0_27 = arith.constant 0 : index
      %c0_28 = arith.constant 0 : index
      %39 = vector.load %arg14[%c0_27, %c0_28] : memref<1x128xf32, #tpu.memory_space<vmem>>, vector<1x128xf32>
      tpu.vector_store %arg14[%c0_27, %c0_28], %21 {strides = array<i32>} : memref<1x128xf32, #tpu.memory_space<vmem>>, vector<1x128xf32>,
    } else {
    }
    %c0_i32_10 = arith.constant 0 : i32
    %13 = arith.cmpi eq, %arg2, %c0_i32_10 : i32
    %14 = arith.extui %13 : i1 to i32
    %c0_i32_11 = arith.constant 0 : i32
    %15 = arith.cmpi ne, %14, %c0_i32_11 : i32
    scf.if %15 {
      %c0_12 = arith.constant 0 : index
      %c0_13 = arith.constant 0 : index
      %c0_14 = arith.constant 0 : index
      %16 = vector.load %arg4[%c0_12, %c0_13, %c0_14] : memref<1x16x128xf32, #tpu.memory_space<vmem>>, vector<1x16x128xf32>
      %17 = vector.shape_cast %16 : vector<1x16x128xf32> to vector<16x128xf32>
      %c0_15 = arith.constant 0 : index
      %c0_16 = arith.constant 0 : index
      %18 = vector.load %arg16[%c0_15, %c0_16] : memref<16x128xf32, #tpu.memory_space<vmem>>, vector<16x128xf32>
      %c0_17 = arith.constant 0 : index
      %c0_18 = arith.constant 0 : index
      %19 = vector.load %arg15[%c0_17, %c0_18] : memref<1x128xf32, #tpu.memory_space<vmem>>, vector<1x128xf32>
      %20 = vector.broadcast %19 : vector<1x128xf32> to vector<16x128xf32>
      %21 = arith.divf %18, %20 : vector<16x128xf32>
      %c0_19 = arith.constant 0 : index
      %c0_20 = arith.constant 0 : index
      %22 = vector.load %arg10[%c0_19, %c0_20] : memref<16x16xf32, #tpu.memory_space<vmem>>, vector<16x16xf32>
      %cst = arith.constant dense<0.000000e+00> : vector<16x128xf32>
      %23 = tpu.matmul %22, %21, %cst {dimension_numbers = #tpu.dot_dimension_numbers<[1], [0], [0], [1], [0, 0, 1, 1], [], []>, precision = #tpu.contract_precision<fp32>} : vector<16x16xf32>, vector<16x128xf32>, vector<16x128xf32> -> vector<16x128xf32>
      %c0_21 = arith.constant 0 : index
      %c0_22 = arith.constant 0 : index
      %24 = vector.load %arg11[%c0_21, %c0_22] : memref<16x1xf32, #tpu.memory_space<vmem>>, vector<16x1xf32>
      %25 = vector.broadcast %24 : vector<16x1xf32> to vector<16x128xf32>
      %26 = arith.addf %23, %25 : vector<16x128xf32>
      %c0_23 = arith.constant 0 : index
      %c0_24 = arith.constant 0 : index
      %c0_25 = arith.constant 0 : index
      %27 = vector.load %arg7[%c0_23, %c0_24, %c0_25] : memref<1x16x16xf32, #tpu.memory_space<vmem>>, vector<1x16x16xf32>
      %28 = vector.shape_cast %27 : vector<1x16x16xf32> to vector<16x16xf32>
      %cst_26 = arith.constant dense<0.000000e+00> : vector<16x128xf32>
      %29 = tpu.matmul %28, %17, %cst_26 {dimension_numbers = #tpu.dot_dimension_numbers<[1], [0], [0], [1], [0, 0, 1, 1], [], []>, precision = #tpu.contract_precision<fp32>} : vector<16x16xf32>, vector<16x128xf32>, vector<16x128xf32> -> vector<16x128xf32>
      %c0_27 = arith.constant 0 : index
      %c0_28 = arith.constant 0 : index
      %30 = memref.load %arg3[%c0_27, %c0_28] : memref<1x2xf32, #tpu.memory_space<smem>>
      %31 = vector.broadcast %30 : f32 to vector<16x128xf32>
      %32 = arith.mulf %31, %26 : vector<16x128xf32>
      %c0_29 = arith.constant 0 : index
      %c1 = arith.constant 1 : index
      %33 = memref.load %arg3[%c0_29, %c1] : memref<1x2xf32, #tpu.memory_space<smem>>
      %34 = vector.broadcast %33 : f32 to vector<16x128xf32>
      %35 = arith.mulf %34, %29 : vector<16x128xf32>
      %36 = arith.addf %32, %35 : vector<16x128xf32>
      %cst_30 = arith.constant 2.000000e+00 : f32
      %37 = vector.broadcast %cst_30 : f32 to vector<16x128xf32>
      %38 = arith.mulf %37, %17 : vector<16x128xf32>
      %39 = arith.addf %36, %38 : vector<16x128xf32>
      %c0_31 = arith.constant 0 : index
      %c0_32 = arith.constant 0 : index
      %c0_33 = arith.constant 0 : index
      %40 = vector.load %arg12[%c0_31, %c0_32, %c0_33] : memref<1x16x128xf32, #tpu.memory_space<vmem>>, vector<1x16x128xf32>
      %41 = vector.shape_cast %40 : vector<1x16x128xf32> to vector<16x128xf32>
      %42 = vector.shape_cast %39 : vector<16x128xf32> to vector<1x16x128xf32>
      tpu.vector_store %arg12[%c0_31, %c0_32, %c0_33], %42 {strides = array<i32>} : memref<1x16x128xf32, #tpu.memory_space<vmem>>, vector<1x16x128xf32>,
    } else {
    }
    return
  }
  func.func @transform_0(%arg0: i32, %arg1: i32, %arg2: i32) -> (i32, i32) {
    %c0_i32 = arith.constant 0 : i32
    %c0_i32_0 = arith.constant 0 : i32
    %c0_i32_1 = arith.constant 0 : i32
    return %c0_i32, %c0_i32_0 : i32, i32
  }
  func.func @transform_1(%arg0: i32, %arg1: i32, %arg2: i32) -> (i32, i32, i32) {
    %c0_i32 = arith.constant 0 : i32
    %c0_i32_0 = arith.constant 0 : i32
    return %arg0, %c0_i32, %arg1 : i32, i32, i32
  }
  func.func @transform_2(%arg0: i32, %arg1: i32, %arg2: i32) -> (i32, i32, i32) {
    %c0_i32 = arith.constant 0 : i32
    %c0_i32_0 = arith.constant 0 : i32
    return %arg0, %c0_i32, %arg2 : i32, i32, i32
  }
  func.func @transform_3(%arg0: i32, %arg1: i32, %arg2: i32) -> (i32, i32, i32) {
    %c0_i32 = arith.constant 0 : i32
    %c0_i32_0 = arith.constant 0 : i32
    return %arg0, %c0_i32, %arg2 : i32, i32, i32
  }
  func.func @transform_4(%arg0: i32, %arg1: i32, %arg2: i32) -> (i32, i32, i32) {
    %c0_i32 = arith.constant 0 : i32
    %c0_i32_0 = arith.constant 0 : i32
    %c0_i32_1 = arith.constant 0 : i32
    return %arg0, %c0_i32, %c0_i32_0 : i32, i32, i32
  }
  func.func @transform_5(%arg0: i32, %arg1: i32, %arg2: i32) -> (i32, i32) {
    %c0_i32 = arith.constant 0 : i32
    %c0_i32_0 = arith.constant 0 : i32
    %c0_i32_1 = arith.constant 0 : i32
    return %c0_i32, %c0_i32_0 : i32, i32
  }
  func.func @transform_6(%arg0: i32, %arg1: i32, %arg2: i32) -> (i32, i32) {
    %c0_i32 = arith.constant 0 : i32
    %c0_i32_0 = arith.constant 0 : i32
    %c0_i32_1 = arith.constant 0 : i32
    return %c0_i32, %c0_i32_0 : i32, i32
  }
  func.func @transform_7(%arg0: i32, %arg1: i32, %arg2: i32) -> (i32, i32) {
    %c0_i32 = arith.constant 0 : i32
    %c0_i32_0 = arith.constant 0 : i32
    %c0_i32_1 = arith.constant 0 : i32
    return %c0_i32, %c0_i32_0 : i32, i32
  }
  func.func @transform_8(%arg0: i32, %arg1: i32, %arg2: i32) -> (i32, i32) {
    %c0_i32 = arith.constant 0 : i32
    %c0_i32_0 = arith.constant 0 : i32
    %c0_i32_1 = arith.constant 0 : i32
    return %c0_i32, %c0_i32_0 : i32, i32
  }
  func.func @transform_9(%arg0: i32, %arg1: i32, %arg2: i32) -> (i32, i32, i32) {
    %c0_i32 = arith.constant 0 : i32
    %c0_i32_0 = arith.constant 0 : i32
    return %arg0, %c0_i32, %arg1 : i32, i32, i32
  }
}

</mosaic_0001>

<llo_original>
// kernel: dan_forward.2
$region0: #{dan_forward.2}
  #allocation0 [shape = 'u32[]', space=smem, size = 0x4, offset = 0x4, fixed_abs, tag = 'smem constant byte address 0x4 - core index']
  #allocation1 [shape = 'u32[72,128]{1,0:T(1,128)}', space=vmem, size = 0x9000, scoped, tag = 'internal scratch']
  #allocation2 [shape = 'f32[16,16]{1,0:T(8,128)}', space=vmem, size = 0x2000, scoped, tag = 'scratch operand']
  %s0 = inlined_call_operand.vmem [shape: f32[2,16,128], index: 0, kind: input, shape index: {}]
  %s1 = inlined_call_operand.vmem [shape: f32[2,16], index: 1, kind: input, shape index: {}]
  %s2 = inlined_call_operand.vmem [shape: f32[2,1], index: 2, kind: input, shape index: {}]
  %s3 = inlined_call_operand.vmem [shape: f32[2,16,16], index: 3, kind: output, shape index: {0}]
  %s4 = inlined_call_operand.vmem [shape: f32[2,2,128], index: 4, kind: output, shape index: {1}]
  %5 = xla_tuple %s3, %s4
  %s6 = sld [smem:[#allocation0]]
  $region61: #{dan_forward.2} parent=0
    _
  %s8 = ssub.s32 1, %s6
  %s9 = scalar_select 0, %s8, %s6
  loop: start=0, step=1, limit=4
  $region2: #{dan_forward.2} parent=0 // loop_pre_header
    _
  $region3: #{dan_forward.2} parent=0 // loop_header
    %s11 = sphi 0, %s15
    %p12 = scmp.ge.s32.totalorder %s11, 4
    %s18 = sphi 0, %s30
    %s19 = sphi 0, %s26
    %s20 = sphi 0, %s18
    %s21 = sphi 0, %s19
    %s22 = sphi 0, %s20
    %s23 = sphi 0, %s21
    %s35 = sphi 0, %s37
    %s38 = sphi 0, %s35
    %s39 = sphi 0, %s38
    %s55 = sphi 0, %s39
    %s59 = sphi 0, %s59
    %s61 = sphi 0, %s59
    %s62 = sphi 0, %s61
    %s76 = sphi 0, %s62
    %s80 = sphi 0, %s80
    %s82 = sphi 0, %s80
    %s83 = sphi 0, %s82
    %s97 = sphi 0, %s83
    %s103 = sphi 0, %s105
    %s106 = sphi 0, %s103
    %s107 = sphi 0, %s106
    %s123 = sphi 0, %s107
    %s131 = sphi 0, %s133
    %s134 = sphi 0, %s131
    %s135 = sphi 0, %s134
    %s151 = sphi 0, %s135
  $region4: #{dan_forward.2} parent=0 // loop_header_branch
    %14 = sbr.rel (%p12) target = $region8
  $region5: #{dan_forward.2} parent=0 // loop_body
    %s16 = ssub.s32 %s11, 1
    %s17 = ssub.s32 %s11, 2
    %s24 = sadd.s32 1, %s19
    %p25 = scmp.ge.s32.totalorder %s24, 1
    %s26 = scalar_select %p25, 0, %s24
    %s27 = sadd.s32 1, %s18
    %s28 = scalar_select %p25, %s27, %s18
    %p29 = scmp.ge.s32.totalorder %s28, 2
    %s30 = scalar_select %p29, 0, %s28
    %s31 = ssub.s32 %s18, %s30
    %s32 = ssub.s32 %s19, %s26
    %s33 = sor.u32 %s31, %s32
    %p34 = scmp.eq.s32.totalorder %s33, 0
    %s36 = sadd.s32 %s35, 1
    %s37 = scalar_select %p34, %s35, %s36
    %p40 = pneg %p34
    %p41 = scmp.eq.s32.totalorder %s11, 1
    %p42 = por %p40, %p41
    %p43 = scmp.ne.s32.totalorder %s35, %s38
    %p44 = scmp.eq.s32.totalorder %s11, 0
    %p45 = por %p43, %p44
    %p46 = scmp.ne.s32.totalorder %s35, %s38
    %p47 = scmp.eq.s32.totalorder %s16, 1
    %p48 = por %p46, %p47
    %p49 = scmp.ne.s32.totalorder %s38, %s39
    %p50 = scmp.eq.s32.totalorder %s16, 0
    %p51 = por %p49, %p50
    %p52 = scmp.ne.s32.totalorder %s38, %s39
    %p53 = scmp.eq.s32.totalorder %s17, 1
    %p54 = por %p52, %p53
    %p56 = scmp.ne.s32.totalorder %s39, %s55
    %p57 = scmp.eq.s32.totalorder %s17, 0
    %p58 = por %p56, %p57
    %s60 = sadd.s32 %s59, 1
    %p63 = scmp.eq.s32.totalorder %s11, 1
    %p64 = scmp.ne.s32.totalorder %s59, %s61
    %p65 = scmp.eq.s32.totalorder %s11, 0
    %p66 = por %p64, %p65
    %p67 = scmp.ne.s32.totalorder %s59, %s61
    %p68 = scmp.eq.s32.totalorder %s16, 1
    %p69 = por %p67, %p68
    %p70 = scmp.ne.s32.totalorder %s61, %s62
    %p71 = scmp.eq.s32.totalorder %s16, 0
    %p72 = por %p70, %p71
    %p73 = scmp.ne.s32.totalorder %s61, %s62
    %p74 = scmp.eq.s32.totalorder %s17, 1
    %p75 = por %p73, %p74
    %p77 = scmp.ne.s32.totalorder %s62, %s76
    %p78 = scmp.eq.s32.totalorder %s17, 0
    %p79 = por %p77, %p78
    %s81 = sadd.s32 %s80, 1
    %p84 = scmp.eq.s32.totalorder %s11, 1
    %p85 = scmp.ne.s32.totalorder %s80, %s82
    %p86 = scmp.eq.s32.totalorder %s11, 0
    %p87 = por %p85, %p86
    %p88 = scmp.ne.s32.totalorder %s80, %s82
    %p89 = scmp.eq.s32.totalorder %s16, 1
    %p90 = por %p88, %p89
    %p91 = scmp.ne.s32.totalorder %s82, %s83
    %p92 = scmp.eq.s32.totalorder %s16, 0
    %p93 = por %p91, %p92
    %p94 = scmp.ne.s32.totalorder %s82, %s83
    %p95 = scmp.eq.s32.totalorder %s17, 1
    %p96 = por %p94, %p95
    %p98 = scmp.ne.s32.totalorder %s83, %s97
    %p99 = scmp.eq.s32.totalorder %s17, 0
    %p100 = por %p98, %p99
    %s101 = ssub.s32 %s18, %s30
    %p102 = scmp.eq.s32.totalorder %s101, 0
    %s104 = sadd.s32 %s103, 1
    %s105 = scalar_select %p102, %s103, %s104
    %p108 = pneg %p102
    %p109 = scmp.eq.s32.totalorder %s11, 1
    %p110 = por %p108, %p109
    %p111 = scmp.ne.s32.totalorder %s103, %s106
    %p112 = scmp.eq.s32.totalorder %s11, 0
    %p113 = por %p111, %p112
    %p114 = scmp.ne.s32.totalorder %s103, %s106
    %p115 = scmp.eq.s32.totalorder %s16, 1
    %p116 = por %p114, %p115
    %p117 = scmp.ne.s32.totalorder %s106, %s107
    %p118 = scmp.eq.s32.totalorder %s16, 0
    %p119 = por %p117, %p118
    %p120 = scmp.ne.s32.totalorder %s106, %s107
    %p121 = scmp.eq.s32.totalorder %s17, 1
    %p122 = por %p120, %p121
    %p124 = scmp.ne.s32.totalorder %s107, %s123
    %p125 = scmp.eq.s32.totalorder %s17, 0
    %p126 = por %p124, %p125
    %s127 = ssub.s32 %s18, %s30
    %s128 = ssub.s32 %s19, %s26
    %s129 = sor.u32 %s127, %s128
    %p130 = scmp.eq.s32.totalorder %s129, 0
    %s132 = sadd.s32 %s131, 1
    %s133 = scalar_select %p130, %s131, %s132
    %p136 = pneg %p130
    %p137 = scmp.eq.s32.totalorder %s11, 1
    %p138 = por %p136, %p137
    %p139 = scmp.ne.s32.totalorder %s131, %s134
    %p140 = scmp.eq.s32.totalorder %s11, 0
    %p141 = por %p139, %p140
    %p142 = scmp.ne.s32.totalorder %s131, %s134
    %p143 = scmp.eq.s32.totalorder %s16, 1
    %p144 = por %p142, %p143
    %p145 = scmp.ne.s32.totalorder %s134, %s135
    %p146 = scmp.eq.s32.totalorder %s16, 0
    %p147 = por %p145, %p146
    %p148 = scmp.ne.s32.totalorder %s134, %s135
    %p149 = scmp.eq.s32.totalorder %s17, 1
    %p150 = por %p148, %p149
    %p152 = scmp.ne.s32.totalorder %s135, %s151
    %p153 = scmp.eq.s32.totalorder %s17, 0
    %p154 = por %p152, %p153
    %p155 = scmp.le.s32.totalorder 1, %s11
    %p156 = scmp.lt.s32.totalorder %s11, 3
    %p157 = pnand %p155, %p156
    %p158 = pneg %p157
    // Predicated region
    $region9: #{dan_forward.2} parent=5 // pred_check
      _
    $region10: #{dan_forward.2} parent=5 // pred_check_branch
      %160 = sbr.rel (%p157) target = $region12
    $region11: #{dan_forward.2} parent=5 // pred_region
      %s161 = ssub.s32 %s11, 1
      // Predicated region
      $region13: #{dan_forward.2} parent=11 // pred_check
        %p162 = pneg %p72
      $region14: #{dan_forward.2} parent=11 // pred_check_branch
        %164 = sbr.rel (%p162) target = $region16
      $region15: #{dan_forward.2} parent=11 // pred_region
        _
      $region16: #{dan_forward.2} parent=11 // pred_fallthru
        _
      // Predicated region
      $region17: #{dan_forward.2} parent=11 // pred_check
        %p165 = pneg %p93
      $region18: #{dan_forward.2} parent=11 // pred_check_branch
        %167 = sbr.rel (%p165) target = $region20
      $region19: #{dan_forward.2} parent=11 // pred_region
        _
      $region20: #{dan_forward.2} parent=11 // pred_fallthru
        _
    $region12: #{dan_forward.2} parent=5 // pred_fallthru
      _
    %p168 = scmp.lt.s32.totalorder %s11, 2
    // Predicated region
    $region21: #{dan_forward.2} parent=5 // pred_check
      %p169 = pneg %p168
    $region22: #{dan_forward.2} parent=5 // pred_check_branch
      %171 = sbr.rel (%p169) target = $region24
    $region23: #{dan_forward.2} parent=5 // pred_region
      // Predicated region
      $region25: #{dan_forward.2} parent=23 // pred_check
        %p172 = pneg %p45
      $region26: #{dan_forward.2} parent=23 // pred_check_branch
        %174 = sbr.rel (%p172) target = $region28
      $region27: #{dan_forward.2} parent=23 // pred_region
        %p175 = scmp.lt.s32.totalorder %s18, 1
        %s176 = scalar_select %p175, %s18, 1
        %p177 = scmp.lt.s32.totalorder %s19, 0
        %s178 = scalar_select %p177, %s19, 0
        %s179 = smul.addr %s176, 2
        %s180 = sadd.s32 %s178, %s179
        %s181 = smul.addr %s180, 8
        %s182 = scalar_lea.vmem %s0, %s181
      $region28: #{dan_forward.2} parent=23 // pred_fallthru
        _
    $region24: #{dan_forward.2} parent=5 // pred_fallthru
      _
    %p183 = scmp.le.s32.totalorder 1, %s11
    %p184 = scmp.lt.s32.totalorder %s11, 3
    %p185 = pnand %p183, %p184
    %p186 = pneg %p185
    // Predicated region
    $region29: #{dan_forward.2} parent=5 // pred_check
      _
    $region30: #{dan_forward.2} parent=5 // pred_check_branch
      %188 = sbr.rel (%p185) target = $region32
    $region31: #{dan_forward.2} parent=5 // pred_region
      %s189 = ssub.s32 %s11, 1
      %p190 = scmp.lt.s32.totalorder %s20, 1
      %s191 = scalar_select %p190, %s20, 1
      %p192 = scmp.lt.s32.totalorder %s21, 0
      %s193 = scalar_select %p192, %s21, 0
      %s194 = smul.addr %s191, 2
      %s195 = sadd.s32 %s193, %s194
      %s196 = smul.addr %s195, 8
      %s197 = scalar_lea.vmem %s0, %s196
      %p198 = pneg %p51
      %p199 = pneg %p48
      %p200 = pneg %p72
      %p201 = pneg %p69
      %p202 = pneg %p93
      %p203 = pneg %p90
      %p204 = pneg %p119
      %p205 = pneg %p116
      %p206 = scmp.lt.s32.totalorder %s20, 1
      %s207 = scalar_select %p206, %s20, 1
      %s208 = smul.addr %s207, 2
      %s209 = smul.addr %s208, 8
      %s210 = scalar_lea.vmem %s3, %s209
      %p211 = pneg %p147
      %p212 = pneg %p144
      %p213 = scmp.lt.s32.totalorder %s20, 1
      %s214 = scalar_select %p213, %s20, 1
      %p215 = scmp.lt.s32.totalorder %s21, 0
      %s216 = scalar_select %p215, %s21, 0
      %s217 = sadd.s32 %s216, %s214
      %s218 = smul.addr %s217, 2
      %s219 = scalar_lea.vmem %s4, %s218
      %p220 = scmp.lt.s32.totalorder %s20, 1
      %s221 = scalar_select %p220, %s20, 1
      %p222 = scmp.lt.s32.totalorder %s21, 0
      %s223 = scalar_select %p222, %s21, 0
      %s224 = smul.addr %s221, 2
      %s225 = sadd.s32 %s223, %s224
      %s226 = smul.addr %s225, 8
      %s227 = scalar_lea.vmem %s0, %s226
      %p228 = scmp.lt.s32.totalorder %s20, 1
      %s229 = scalar_select %p228, %s20, 1
      %s230 = smul.addr %s229, 2
      %s231 = smul.addr %s230, 8
      %s232 = scalar_lea.vmem %s3, %s231
      %p233 = scmp.lt.s32.totalorder %s20, 1
      %s234 = scalar_select %p233, %s20, 1
      %p235 = scmp.lt.s32.totalorder %s21, 0
      %s236 = scalar_select %p235, %s21, 0
      %s237 = sadd.s32 %s236, %s234
      %s238 = smul.addr %s237, 2
      %s239 = scalar_lea.vmem %s4, %s238
      %p240 = scmp.eq.s32.totalorder %s21, 0
      // Predicated region
      $region33: #{dan_forward.2} parent=31 // pred_check
        %p241 = pneg %p240
      $region34: #{dan_forward.2} parent=31 // pred_check_branch
        %243 = sbr.rel (%p241) target = $region36
      $region35: #{dan_forward.2} parent=31 // pred_region
        %vm244 = vcmask 130048
        %245 = vst.msk [vmem:[#allocation2] sm:$0xff] %vm244, 0.0
        %246 = vst.msk [vmem:[#allocation2 + $0x8] sm:$0xff] %vm244, 0.0
      $region36: #{dan_forward.2} parent=31 // pred_fallthru
        _
      %v247 = vld [vmem:[%s227] sm:$0xff]
      %v248 = vld [vmem:[%s227 + $0x8] sm:$0xff]
      %v249 = vld [vmem:[%s1] sm:$0x3]
      %v250 = vld [vmem:[%s2] sm:$0x3]
      %252 = vset.pattern.permute.xlu0 0
      %253 = vperm.xlu0 %252, %v250
      %v254 = vpop.permute.xlu0 %253
      %vm256 = vcmask 130048
      %v258 = vsel %vm256, %v249, 0
      %260 = vmatpush.msra.mxu0 0.0
      %261 = vmatpush.msra.mxu0 0.0
      %262 = vmatpush.msra.mxu0 0.0
      %263 = vmatpush.msra.mxu0 0.0
      %264 = vmatpush.msra.mxu0 0.0
      %265 = vmatpush.msra.mxu0 0.0
      %266 = vmatpush.msra.mxu0 0.0
      %267 = vmatpush.msra.mxu0 0.0
      %268 = vmatpush.msra.mxu0 0.0
      %269 = vmatpush.msra.mxu0 0.0
      %270 = vmatpush.msra.mxu0 0.0
      %271 = vmatpush.msra.mxu0 0.0
      %272 = vmatpush.msra.mxu0 0.0
      %273 = vmatpush.msra.mxu0 0.0
      %v274 = vand.u32 %v248, 4294901760
      %275 = vmatpush.msra.mxu0 %v274
      %v276 = vand.u32 %v247, 4294901760
      %277 = vmatpush.msra.mxu0 %v276
      %v278 = vand.u32 %v258, 4294901760
      %v279 = vsub.f32 %v258, %v278
      %v280 = vand.u32 %v279, 4294901760
      %v281 = vsub.f32 %v279, %v280
      %v282 = vand.u32 %v281, 4294901760
      %283 = vmatmul.f32.gmra.mxu0 %v282
      %v284 = vpop.f32.mrf.mxu0
      %v285 = vadd.f32 %v254, %v284
      %286 = vdwg.mxu0
      %287 = vmatpush.msra.mxu0 0.0
      %288 = vmatpush.msra.mxu0 0.0
      %289 = vmatpush.msra.mxu0 0.0
      %290 = vmatpush.msra.mxu0 0.0
      %291 = vmatpush.msra.mxu0 0.0
      %292 = vmatpush.msra.mxu0 0.0
      %293 = vmatpush.msra.mxu0 0.0
      %294 = vmatpush.msra.mxu0 0.0
      %295 = vmatpush.msra.mxu0 0.0
      %296 = vmatpush.msra.mxu0 0.0
      %297 = vmatpush.msra.mxu0 0.0
      %298 = vmatpush.msra.mxu0 0.0
      %299 = vmatpush.msra.mxu0 0.0
      %300 = vmatpush.msra.mxu0 0.0
      %v301 = vand.u32 %v248, 4294901760
      %v302 = vsub.f32 %v248, %v301
      %v303 = vand.u32 %v302, 4294901760
      %v304 = vsub.f32 %v302, %v303
      %v305 = vand.u32 %v304, 4294901760
      %306 = vmatpush.msra.mxu0 %v305
      %v307 = vand.u32 %v247, 4294901760
      %v308 = vsub.f32 %v247, %v307
      %v309 = vand.u32 %v308, 4294901760
      %v310 = vsub.f32 %v308, %v309
      %v311 = vand.u32 %v310, 4294901760
      %312 = vmatpush.msra.mxu0 %v311
      %v313 = vand.u32 %v258, 4294901760
      %314 = vmatmul.f32.gmra.mxu0 %v313
      %v315 = vpop.f32.mrf.mxu0
      %v316 = vadd.f32 %v285, %v315
      %317 = vdwg.mxu0
      %318 = vmatpush.msra.mxu0 0.0
      %319 = vmatpush.msra.mxu0 0.0
      %320 = vmatpush.msra.mxu0 0.0
      %321 = vmatpush.msra.mxu0 0.0
      %322 = vmatpush.msra.mxu0 0.0
      %323 = vmatpush.msra.mxu0 0.0
      %324 = vmatpush.msra.mxu0 0.0
      %325 = vmatpush.msra.mxu0 0.0
      %326 = vmatpush.msra.mxu0 0.0
      %327 = vmatpush.msra.mxu0 0.0
      %328 = vmatpush.msra.mxu0 0.0
      %329 = vmatpush.msra.mxu0 0.0
      %330 = vmatpush.msra.mxu0 0.0
      %331 = vmatpush.msra.mxu0 0.0
      %v332 = vand.u32 %v248, 4294901760
      %v333 = vsub.f32 %v248, %v332
      %334 = vmatpush.msra.mxu0 %v333
      %v335 = vand.u32 %v247, 4294901760
      %v336 = vsub.f32 %v247, %v335
      %337 = vmatpush.msra.mxu0 %v336
      %v338 = vand.u32 %v258, 4294901760
      %v339 = vsub.f32 %v258, %v338
      %340 = vmatmul.f32.gmra.mxu0 %v339
      %v341 = vpop.f32.mrf.mxu0
      %v342 = vadd.f32 %v316, %v341
      %343 = vdwg.mxu0
      %344 = vmatpush.msra.mxu0 0.0
      %345 = vmatpush.msra.mxu0 0.0
      %346 = vmatpush.msra.mxu0 0.0
      %347 = vmatpush.msra.mxu0 0.0
      %348 = vmatpush.msra.mxu0 0.0
      %349 = vmatpush.msra.mxu0 0.0
      %350 = vmatpush.msra.mxu0 0.0
      %351 = vmatpush.msra.mxu0 0.0
      %352 = vmatpush.msra.mxu0 0.0
      %353 = vmatpush.msra.mxu0 0.0
      %354 = vmatpush.msra.mxu0 0.0
      %355 = vmatpush.msra.mxu0 0.0
      %356 = vmatpush.msra.mxu0 0.0
      %357 = vmatpush.msra.mxu0 0.0
      %v358 = vand.u32 %v248, 4294901760
      %359 = vmatpush.msra.mxu0 %v358
      %v360 = vand.u32 %v247, 4294901760
      %361 = vmatpush.msra.mxu0 %v360
      %v362 = vand.u32 %v258, 4294901760
      %v363 = vsub.f32 %v258, %v362
      %v364 = vand.u32 %v363, 4294901760
      %365 = vmatmul.f32.gmra.mxu0 %v364
      %v366 = vpop.f32.mrf.mxu0
      %v367 = vadd.f32 %v342, %v366
      %368 = vdwg.mxu0
      %369 = vmatpush.msra.mxu0 0.0
      %370 = vmatpush.msra.mxu0 0.0
      %371 = vmatpush.msra.mxu0 0.0
      %372 = vmatpush.msra.mxu0 0.0
      %373 = vmatpush.msra.mxu0 0.0
      %374 = vmatpush.msra.mxu0 0.0
      %375 = vmatpush.msra.mxu0 0.0
      %376 = vmatpush.msra.mxu0 0.0
      %377 = vmatpush.msra.mxu0 0.0
      %378 = vmatpush.msra.mxu0 0.0
      %379 = vmatpush.msra.mxu0 0.0
      %380 = vmatpush.msra.mxu0 0.0
      %381 = vmatpush.msra.mxu0 0.0
      %382 = vmatpush.msra.mxu0 0.0
      %v383 = vand.u32 %v248, 4294901760
      %v384 = vsub.f32 %v248, %v383
      %v385 = vand.u32 %v384, 4294901760
      %386 = vmatpush.msra.mxu0 %v385
      %v387 = vand.u32 %v247, 4294901760
      %v388 = vsub.f32 %v247, %v387
      %v389 = vand.u32 %v388, 4294901760
      %390 = vmatpush.msra.mxu0 %v389
      %v391 = vand.u32 %v258, 4294901760
      %392 = vmatmul.f32.gmra.mxu0 %v391
      %v393 = vpop.f32.mrf.mxu0
      %v394 = vadd.f32 %v367, %v393
      %395 = vdwg.mxu0
      %396 = vmatpush.msra.mxu0 0.0
      %397 = vmatpush.msra.mxu0 0.0
      %398 = vmatpush.msra.mxu0 0.0
      %399 = vmatpush.msra.mxu0 0.0
      %400 = vmatpush.msra.mxu0 0.0
      %401 = vmatpush.msra.mxu0 0.0
      %402 = vmatpush.msra.mxu0 0.0
      %403 = vmatpush.msra.mxu0 0.0
      %404 = vmatpush.msra.mxu0 0.0
      %405 = vmatpush.msra.mxu0 0.0
      %406 = vmatpush.msra.mxu0 0.0
      %407 = vmatpush.msra.mxu0 0.0
      %408 = vmatpush.msra.mxu0 0.0
      %409 = vmatpush.msra.mxu0 0.0
      %v410 = vand.u32 %v248, 4294901760
      %411 = vmatpush.msra.mxu0 %v410
      %v412 = vand.u32 %v247, 4294901760
      %413 = vmatpush.msra.mxu0 %v412
      %v414 = vand.u32 %v258, 4294901760
      %415 = vmatmul.f32.gmra.mxu0 %v414
      %v416 = vpop.f32.mrf.mxu0
      %v417 = vadd.f32 %v394, %v416
      %418 = vdwg.mxu0
      %419 = vst [vmem:[%s239] sm:$0x3] %v417
      %v420 = vld [vmem:[#allocation2] sm:$0xff]
      %v421 = vld [vmem:[#allocation2 + $0x8] sm:$0xff]
      %422 = vmatpush.xpose.msra.mxu0 0.0
      %423 = vmatpush.xpose.msra.mxu0 0.0
      %424 = vmatpush.xpose.msra.mxu0 0.0
      %425 = vmatpush.xpose.msra.mxu0 0.0
      %426 = vmatpush.xpose.msra.mxu0 0.0
      %427 = vmatpush.xpose.msra.mxu0 0.0
      %428 = vmatpush.xpose.msra.mxu0 0.0
      %429 = vmatpush.xpose.msra.mxu0 0.0
      %430 = vmatpush.xpose.msra.mxu0 0.0
      %431 = vmatpush.xpose.msra.mxu0 0.0
      %432 = vmatpush.xpose.msra.mxu0 0.0
      %433 = vmatpush.xpose.msra.mxu0 0.0
      %434 = vmatpush.xpose.msra.mxu0 0.0
      %435 = vmatpush.xpose.msra.mxu0 0.0
      %v436 = vand.u32 %v248, 4294901760
      %437 = vmatpush.xpose.msra.mxu0 %v436
      %v438 = vand.u32 %v247, 4294901760
      %439 = vmatpush.xpose.msra.mxu0 %v438
      %v440 = vand.u32 %v247, 4294901760
      %v441 = vsub.f32 %v247, %v440
      %v442 = vand.u32 %v441, 4294901760
      %v443 = vsub.f32 %v441, %v442
      %v444 = vand.u32 %v443, 4294901760
      %445 = vmatmul.f32.gmra.mxu0 %v444
      %v446 = vpop.f32.mrf.mxu0
      %v447 = vadd.f32 0.0, %v446
      %v448 = vand.u32 %v248, 4294901760
      %v449 = vsub.f32 %v248, %v448
      %v450 = vand.u32 %v449, 4294901760
      %v451 = vsub.f32 %v449, %v450
      %v452 = vand.u32 %v451, 4294901760
      %453 = vmatmul.f32.gmra.mxu0 %v452
      %v454 = vpop.f32.mrf.mxu0
      %v455 = vadd.f32 0.0, %v454
      %456 = vdwg.mxu0
      %457 = vmatpush.xpose.msra.mxu0 0.0
      %458 = vmatpush.xpose.msra.mxu0 0.0
      %459 = vmatpush.xpose.msra.mxu0 0.0
      %460 = vmatpush.xpose.msra.mxu0 0.0
      %461 = vmatpush.xpose.msra.mxu0 0.0
      %462 = vmatpush.xpose.msra.mxu0 0.0
      %463 = vmatpush.xpose.msra.mxu0 0.0
      %464 = vmatpush.xpose.msra.mxu0 0.0
      %465 = vmatpush.xpose.msra.mxu0 0.0
      %466 = vmatpush.xpose.msra.mxu0 0.0
      %467 = vmatpush.xpose.msra.mxu0 0.0
      %468 = vmatpush.xpose.msra.mxu0 0.0
      %469 = vmatpush.xpose.msra.mxu0 0.0
      %470 = vmatpush.xpose.msra.mxu0 0.0
      %v471 = vand.u32 %v248, 4294901760
      %v472 = vsub.f32 %v248, %v471
      %v473 = vand.u32 %v472, 4294901760
      %v474 = vsub.f32 %v472, %v473
      %v475 = vand.u32 %v474, 4294901760
      %476 = vmatpush.xpose.msra.mxu0 %v475
      %v477 = vand.u32 %v247, 4294901760
      %v478 = vsub.f32 %v247, %v477
      %v479 = vand.u32 %v478, 4294901760
      %v480 = vsub.f32 %v478, %v479
      %v481 = vand.u32 %v480, 4294901760
      %482 = vmatpush.xpose.msra.mxu0 %v481
      %v483 = vand.u32 %v247, 4294901760
      %484 = vmatmul.f32.gmra.mxu0 %v483
      %v485 = vpop.f32.mrf.mxu0
      %v486 = vadd.f32 %v447, %v485
      %v487 = vand.u32 %v248, 4294901760
      %488 = vmatmul.f32.gmra.mxu0 %v487
      %v489 = vpop.f32.mrf.mxu0
      %v490 = vadd.f32 %v455, %v489
      %491 = vdwg.mxu0
      %492 = vmatpush.xpose.msra.mxu0 0.0
      %493 = vmatpush.xpose.msra.mxu0 0.0
      %494 = vmatpush.xpose.msra.mxu0 0.0
      %495 = vmatpush.xpose.msra.mxu0 0.0
      %496 = vmatpush.xpose.msra.mxu0 0.0
      %497 = vmatpush.xpose.msra.mxu0 0.0
      %498 = vmatpush.xpose.msra.mxu0 0.0
      %499 = vmatpush.xpose.msra.mxu0 0.0
      %500 = vmatpush.xpose.msra.mxu0 0.0
      %501 = vmatpush.xpose.msra.mxu0 0.0
      %502 = vmatpush.xpose.msra.mxu0 0.0
      %503 = vmatpush.xpose.msra.mxu0 0.0
      %504 = vmatpush.xpose.msra.mxu0 0.0
      %505 = vmatpush.xpose.msra.mxu0 0.0
      %v506 = vand.u32 %v248, 4294901760
      %v507 = vsub.f32 %v248, %v506
      %508 = vmatpush.xpose.msra.mxu0 %v507
      %v509 = vand.u32 %v247, 4294901760
      %v510 = vsub.f32 %v247, %v509
      %511 = vmatpush.xpose.msra.mxu0 %v510
      %v512 = vand.u32 %v247, 4294901760
      %v513 = vsub.f32 %v247, %v512
      %514 = vmatmul.f32.gmra.mxu0 %v513
      %v515 = vpop.f32.mrf.mxu0
      %v516 = vadd.f32 %v486, %v515
      %v517 = vand.u32 %v248, 4294901760
      %v518 = vsub.f32 %v248, %v517
      %519 = vmatmul.f32.gmra.mxu0 %v518
      %v520 = vpop.f32.mrf.mxu0
      %v521 = vadd.f32 %v490, %v520
      %522 = vdwg.mxu0
      %523 = vmatpush.xpose.msra.mxu0 0.0
      %524 = vmatpush.xpose.msra.mxu0 0.0
      %525 = vmatpush.xpose.msra.mxu0 0.0
      %526 = vmatpush.xpose.msra.mxu0 0.0
      %527 = vmatpush.xpose.msra.mxu0 0.0
      %528 = vmatpush.xpose.msra.mxu0 0.0
      %529 = vmatpush.xpose.msra.mxu0 0.0
      %530 = vmatpush.xpose.msra.mxu0 0.0
      %531 = vmatpush.xpose.msra.mxu0 0.0
      %532 = vmatpush.xpose.msra.mxu0 0.0
      %533 = vmatpush.xpose.msra.mxu0 0.0
      %534 = vmatpush.xpose.msra.mxu0 0.0
      %535 = vmatpush.xpose.msra.mxu0 0.0
      %536 = vmatpush.xpose.msra.mxu0 0.0
      %v537 = vand.u32 %v248, 4294901760
      %538 = vmatpush.xpose.msra.mxu0 %v537
      %v539 = vand.u32 %v247, 4294901760
      %540 = vmatpush.xpose.msra.mxu0 %v539
      %v541 = vand.u32 %v247, 4294901760
      %v542 = vsub.f32 %v247, %v541
      %v543 = vand.u32 %v542, 4294901760
      %544 = vmatmul.f32.gmra.mxu0 %v543
      %v545 = vpop.f32.mrf.mxu0
      %v546 = vadd.f32 %v516, %v545
      %v547 = vand.u32 %v248, 4294901760
      %v548 = vsub.f32 %v248, %v547
      %v549 = vand.u32 %v548, 4294901760
      %550 = vmatmul.f32.gmra.mxu0 %v549
      %v551 = vpop.f32.mrf.mxu0
      %v552 = vadd.f32 %v521, %v551
      %553 = vdwg.mxu0
      %554 = vmatpush.xpose.msra.mxu0 0.0
      %555 = vmatpush.xpose.msra.mxu0 0.0
      %556 = vmatpush.xpose.msra.mxu0 0.0
      %557 = vmatpush.xpose.msra.mxu0 0.0
      %558 = vmatpush.xpose.msra.mxu0 0.0
      %559 = vmatpush.xpose.msra.mxu0 0.0
      %560 = vmatpush.xpose.msra.mxu0 0.0
      %561 = vmatpush.xpose.msra.mxu0 0.0
      %562 = vmatpush.xpose.msra.mxu0 0.0
      %563 = vmatpush.xpose.msra.mxu0 0.0
      %564 = vmatpush.xpose.msra.mxu0 0.0
      %565 = vmatpush.xpose.msra.mxu0 0.0
      %566 = vmatpush.xpose.msra.mxu0 0.0
      %567 = vmatpush.xpose.msra.mxu0 0.0
      %v568 = vand.u32 %v248, 4294901760
      %v569 = vsub.f32 %v248, %v568
      %v570 = vand.u32 %v569, 4294901760
      %571 = vmatpush.xpose.msra.mxu0 %v570
      %v572 = vand.u32 %v247, 4294901760
      %v573 = vsub.f32 %v247, %v572
      %v574 = vand.u32 %v573, 4294901760
      %575 = vmatpush.xpose.msra.mxu0 %v574
      %v576 = vand.u32 %v247, 4294901760
      %577 = vmatmul.f32.gmra.mxu0 %v576
      %v578 = vpop.f32.mrf.mxu0
      %v579 = vadd.f32 %v546, %v578
      %v580 = vand.u32 %v248, 4294901760
      %581 = vmatmul.f32.gmra.mxu0 %v580
      %v582 = vpop.f32.mrf.mxu0
      %v583 = vadd.f32 %v552, %v582
      %584 = vdwg.mxu0
      %585 = vmatpush.xpose.msra.mxu0 0.0
      %586 = vmatpush.xpose.msra.mxu0 0.0
      %587 = vmatpush.xpose.msra.mxu0 0.0
      %588 = vmatpush.xpose.msra.mxu0 0.0
      %589 = vmatpush.xpose.msra.mxu0 0.0
      %590 = vmatpush.xpose.msra.mxu0 0.0
      %591 = vmatpush.xpose.msra.mxu0 0.0
      %592 = vmatpush.xpose.msra.mxu0 0.0
      %593 = vmatpush.xpose.msra.mxu0 0.0
      %594 = vmatpush.xpose.msra.mxu0 0.0
      %595 = vmatpush.xpose.msra.mxu0 0.0
      %596 = vmatpush.xpose.msra.mxu0 0.0
      %597 = vmatpush.xpose.msra.mxu0 0.0
      %598 = vmatpush.xpose.msra.mxu0 0.0
      %v599 = vand.u32 %v248, 4294901760
      %600 = vmatpush.xpose.msra.mxu0 %v599
      %v601 = vand.u32 %v247, 4294901760
      %602 = vmatpush.xpose.msra.mxu0 %v601
      %v603 = vand.u32 %v247, 4294901760
      %604 = vmatmul.f32.gmra.mxu0 %v603
      %v605 = vpop.f32.mrf.mxu0
      %v606 = vadd.f32 %v579, %v605
      %v607 = vand.u32 %v248, 4294901760
      %608 = vmatmul.f32.gmra.mxu0 %v607
      %v609 = vpop.f32.mrf.mxu0
      %v610 = vadd.f32 %v583, %v609
      %611 = vdwg.mxu0
      %v612 = vadd.f32 %v420, %v606
      %v613 = vadd.f32 %v421, %v610
      %614 = vst.msk [vmem:[#allocation2] sm:$0xff] %vm256, %v612
      %615 = vst.msk [vmem:[#allocation2 + $0x8] sm:$0xff] %vm256, %v613
      // Predicated region
      $region37: #{dan_forward.2} parent=31 // pred_check
        %p616 = pneg %p240
      $region38: #{dan_forward.2} parent=31 // pred_check_branch
        %618 = sbr.rel (%p616) target = $region40
      $region39: #{dan_forward.2} parent=31 // pred_region
        %v619 = vld [vmem:[#allocation2] sm:$0xff]
        %v620 = vld [vmem:[#allocation2 + $0x8] sm:$0xff]
        %v621 = vsel %vm256, %v619, -inf
        %622 = vmax.xlane.f32.xlu0 %v621
        %v623 = vpop.xlane.xlu0 %622
        %v624 = vsel %vm256, %v620, -inf
        %625 = vmax.xlane.f32.xlu0 %v624
        %v626 = vpop.xlane.xlu0 %625
        %v627 = vsub.f32 %v623, %v619
        %v628 = vsub.f32 %v626, %v620
        %v629 = vsel %vm256, %v627, -inf
        %630 = vmax.xlane.f32.xlu0 %v629
        %v631 = vpop.xlane.xlu0 %630
        %v632 = vsel %vm256, %v628, -inf
        %633 = vmax.xlane.f32.xlu0 %v632
        %v634 = vpop.xlane.xlu0 %633
        %v635 = vsub.f32 %v627, %v631
        %v636 = vsub.f32 %v628, %v634
        %v637 = vmul.f32 %v635, 1.442695
        %v638 = vpow.pop %v637
        %v639 = vmul.f32 %v636, 1.442695
        %v640 = vpow.pop %v639
        %v641 = vsel %vm256, %v638, 0.0
        %642 = vadd.xlane.f32.xlu0 %v641
        %v643 = vpop.xlane.xlu0 %642
        %v644 = vsel %vm256, %v640, 0.0
        %645 = vadd.xlane.f32.xlu0 %v644
        %v646 = vpop.xlane.xlu0 %645
        %v647 = vrcp.pop %v643
        %v648 = vmul.f32 %v643, %v647
        %v649 = vsub.f32 1.0, %v648
        %v650 = vmul.f32 %v647, %v649
        %v651 = vadd.f32 %v647, %v650
        %vm652 = vweird.f32 %v643
        %vm653 = vweird.f32 %v647
        %vm654 = vmor %vm652, %vm653
        %v655 = vsel %vm654, %v647, %v651
        %v656 = vand.u32 2147483647, %v643
        %vm657 = vcmp.eq.f32.partialorder %v656, 8.507059e+37
        %v658 = vand.u32 %v643, 2147483648
        %v659 = vor.u32 1.1754944e-38, %v658
        %v660 = vsel %vm657, %v659, %v655
        %v661 = vmul.f32 %v638, %v660
        %v662 = vrcp.pop %v646
        %v663 = vmul.f32 %v646, %v662
        %v664 = vsub.f32 1.0, %v663
        %v665 = vmul.f32 %v662, %v664
        %v666 = vadd.f32 %v662, %v665
        %vm667 = vweird.f32 %v646
        %vm668 = vweird.f32 %v662
        %vm669 = vmor %vm667, %vm668
        %v670 = vsel %vm669, %v662, %v666
        %v671 = vand.u32 2147483647, %v646
        %vm672 = vcmp.eq.f32.partialorder %v671, 8.507059e+37
        %v673 = vand.u32 %v646, 2147483648
        %v674 = vor.u32 1.1754944e-38, %v673
        %v675 = vsel %vm672, %v674, %v670
        %v676 = vmul.f32 %v640, %v675
        %677 = vst.msk [vmem:[%s232] sm:$0xff] %vm256, %v661
        %678 = vst.msk [vmem:[%s232 + $0x8] sm:$0xff] %vm256, %v676
      $region40: #{dan_forward.2} parent=31 // pred_fallthru
        _
      %p679 = scmp.lt.s32.totalorder %s20, 1
      %s680 = scalar_select %p679, %s20, 1
      %s681 = smul.addr %s680, 2
      %s682 = smul.addr %s681, 8
      %s683 = scalar_lea.vmem %s3, %s682
      %p684 = scmp.lt.s32.totalorder %s20, 1
      %s685 = scalar_select %p684, %s20, 1
      %p686 = scmp.lt.s32.totalorder %s21, 0
      %s687 = scalar_select %p686, %s21, 0
      %s688 = sadd.s32 %s687, %s685
      %s689 = smul.addr %s688, 2
      %s690 = scalar_lea.vmem %s4, %s689
      // Predicated region
      $region41: #{dan_forward.2} parent=31 // pred_check
        %p691 = pneg %p116
      $region42: #{dan_forward.2} parent=31 // pred_check_branch
        %693 = sbr.rel (%p691) target = $region44
      $region43: #{dan_forward.2} parent=31 // pred_region
        _
      $region44: #{dan_forward.2} parent=31 // pred_fallthru
        _
      // Predicated region
      $region45: #{dan_forward.2} parent=31 // pred_check
        %p694 = pneg %p144
      $region46: #{dan_forward.2} parent=31 // pred_check_branch
        %696 = sbr.rel (%p694) target = $region48
      $region47: #{dan_forward.2} parent=31 // pred_region
        _
      $region48: #{dan_forward.2} parent=31 // pred_fallthru
        _
    $region32: #{dan_forward.2} parent=5 // pred_fallthru
      _
    %p697 = scmp.le.s32.totalorder 2, %s11
    // Predicated region
    $region49: #{dan_forward.2} parent=5 // pred_check
      %p698 = pneg %p697
    $region50: #{dan_forward.2} parent=5 // pred_check_branch
      %700 = sbr.rel (%p698) target = $region52
    $region51: #{dan_forward.2} parent=5 // pred_region
      %s701 = ssub.s32 %s11, 2
      // Predicated region
      $region53: #{dan_forward.2} parent=51 // pred_check
        %p702 = pneg %p122
      $region54: #{dan_forward.2} parent=51 // pred_check_branch
        %704 = sbr.rel (%p702) target = $region56
      $region55: #{dan_forward.2} parent=51 // pred_region
        %p705 = scmp.lt.s32.totalorder %s22, 1
        %s706 = scalar_select %p705, %s22, 1
        %s707 = smul.addr %s706, 2
        %s708 = smul.addr %s707, 8
        %s709 = scalar_lea.vmem %s3, %s708
      $region56: #{dan_forward.2} parent=51 // pred_fallthru
        _
      // Predicated region
      $region57: #{dan_forward.2} parent=51 // pred_check
        %p710 = pneg %p150
      $region58: #{dan_forward.2} parent=51 // pred_check_branch
        %712 = sbr.rel (%p710) target = $region60
      $region59: #{dan_forward.2} parent=51 // pred_region
        %p713 = scmp.lt.s32.totalorder %s22, 1
        %s714 = scalar_select %p713, %s22, 1
        %p715 = scmp.lt.s32.totalorder %s23, 0
        %s716 = scalar_select %p715, %s23, 0
        %s717 = sadd.s32 %s716, %s714
        %s718 = smul.addr %s717, 2
        %s719 = scalar_lea.vmem %s4, %s718
      $region60: #{dan_forward.2} parent=51 // pred_fallthru
        _
    $region52: #{dan_forward.2} parent=5 // pred_fallthru
      _
  $region6: #{dan_forward.2} parent=0 // loop_footer
    %s15 = sadd.s32 1, %s11
  $region7: #{dan_forward.2} parent=0 // loop_footer_branch
    %10 = sbr.rel target = $region3
  $region8: #{dan_forward.2} parent=0 // loop_exit
    _

// kernel: dan_forward.3
$region0: #{dan_forward.3}
  #allocation0 [shape = 'u32[]', space=smem, size = 0x4, offset = 0x4, fixed_abs, tag = 'smem constant byte address 0x4 - core index']
  #allocation1 [shape = 'u32[72,128]{1,0:T(1,128)}', space=vmem, size = 0x9000, scoped, tag = 'internal scratch']
  #allocation2 [shape = 'f32[2,128]{1,0:T(2,128)}', space=vmem, size = 0x400, scoped, tag = 'scratch operand']
  #allocation3 [shape = 'f32[1,128]{1,0:T(1,128)}', space=vmem, size = 0x200, scoped, tag = 'scratch operand']
  #allocation4 [shape = 'f32[1,128]{1,0:T(1,128)}', space=vmem, size = 0x200, scoped, tag = 'scratch operand']
  #allocation5 [shape = 'f32[16,128]{1,0:T(8,128)}', space=vmem, size = 0x2000, scoped, tag = 'scratch operand']
  %s0 = inlined_call_operand.vmem [shape: f32[1,2], index: 0, kind: input, shape index: {}]
  %s1 = inlined_call_operand.vmem [shape: f32[2,16,128], index: 1, kind: input, shape index: {}, may-alias: {1,2}]
  %s2 = inlined_call_operand.vmem [shape: f32[2,16,128], index: 2, kind: input, shape index: {}, may-alias: {1,2}]
  %s3 = inlined_call_operand.vmem [shape: f32[2,2,128], index: 3, kind: input, shape index: {}]
  %s4 = inlined_call_operand.vmem [shape: f32[2,16,16], index: 4, kind: input, shape index: {}]
  %s5 = inlined_call_operand.vmem [shape: f32[2,16], index: 5, kind: input, shape index: {}]
  %s6 = inlined_call_operand.vmem [shape: f32[2,1], index: 6, kind: input, shape index: {}]
  %s7 = inlined_call_operand.vmem [shape: f32[16,16], index: 7, kind: input, shape index: {}]
  %s8 = inlined_call_operand.vmem [shape: f32[16,1], index: 8, kind: input, shape index: {}]
  %s9 = inlined_call_operand.vmem [shape: f32[2,16,128], index: 9, kind: output, shape index: {}]
  %s10 = sld [smem:[#allocation0]]
  $region89: #{dan_forward.3} parent=0
    _
  %s12 = ssub.s32 1, %s10
  %s13 = scalar_select 0, %s12, %s10
  $region1: #{dan_forward.3} parent=0
    #allocation6 [shape = 'u8[512]{0}', space=smem, size = 0x200, scoped, tag = 'input window, operand 0, single buffered']
    #allocation7 [shape = 's32[2]{0}', space=sflag, size = 0x8, scoped, tag = 'scoped memory for dan_forward.3']
    %14 = vsyncpa [#allocation7], 0
    loop: start=0, step=1, limit=4
    $region2: #{dan_forward.3} parent=1 // loop_pre_header
      _
    $region3: #{dan_forward.3} parent=1 // loop_header
      %s16 = sphi 0, %s20
      %p17 = scmp.ge.s32.totalorder %s16, 4
      %s23 = sphi 0, %s42
      %s24 = sphi 0, %s38
      %s25 = sphi 0, %s34
      %s26 = sphi 0, %s23
      %s27 = sphi 0, %s24
      %s28 = sphi 0, %s25
      %s29 = sphi 0, %s26
      %s30 = sphi 0, %s27
      %s31 = sphi 0, %s28
      %s43 = sphi 0, %s43
      %s45 = sphi 0, %s43
      %s46 = sphi 0, %s45
      %s60 = sphi 0, %s46
      %s68 = sphi 0, %s70
      %s71 = sphi 0, %s68
      %s72 = sphi 0, %s71
      %s88 = sphi 0, %s72
      %s96 = sphi 0, %s98
      %s99 = sphi 0, %s96
      %s100 = sphi 0, %s99
      %s116 = sphi 0, %s100
      %s124 = sphi 0, %s126
      %s127 = sphi 0, %s124
      %s128 = sphi 0, %s127
      %s144 = sphi 0, %s128
      %s150 = sphi 0, %s152
      %s153 = sphi 0, %s150
      %s154 = sphi 0, %s153
      %s170 = sphi 0, %s154
      %s174 = sphi 0, %s174
      %s176 = sphi 0, %s174
      %s177 = sphi 0, %s176
      %s191 = sphi 0, %s177
      %s195 = sphi 0, %s195
      %s197 = sphi 0, %s195
      %s198 = sphi 0, %s197
      %s212 = sphi 0, %s198
      %s216 = sphi 0, %s216
      %s218 = sphi 0, %s216
      %s219 = sphi 0, %s218
      %s233 = sphi 0, %s219
      %s237 = sphi 0, %s237
      %s239 = sphi 0, %s237
      %s240 = sphi 0, %s239
      %s254 = sphi 0, %s240
      %s262 = sphi 0, %s264
      %s265 = sphi 0, %s262
      %s266 = sphi 0, %s265
      %s282 = sphi 0, %s266
    $region4: #{dan_forward.3} parent=1 // loop_header_branch
      %19 = sbr.rel (%p17) target = $region8
    $region5: #{dan_forward.3} parent=1 // loop_body
      %s21 = ssub.s32 %s16, 1
      %s22 = ssub.s32 %s16, 2
      %s32 = sadd.s32 1, %s25
      %p33 = scmp.ge.s32.totalorder %s32, 1
      %s34 = scalar_select %p33, 0, %s32
      %s35 = sadd.s32 1, %s24
      %s36 = scalar_select %p33, %s35, %s24
      %p37 = scmp.ge.s32.totalorder %s36, 1
      %s38 = scalar_select %p37, 0, %s36
      %s39 = sadd.s32 1, %s23
      %s40 = scalar_select %p37, %s39, %s23
      %p41 = scmp.ge.s32.totalorder %s40, 2
      %s42 = scalar_select %p41, 0, %s40
      %s44 = sadd.s32 %s43, 1
      %p47 = scmp.eq.s32.totalorder %s16, 1
      %p48 = scmp.ne.s32.totalorder %s43, %s45
      %p49 = scmp.eq.s32.totalorder %s16, 0
      %p50 = por %p48, %p49
      %p51 = scmp.ne.s32.totalorder %s43, %s45
      %p52 = scmp.eq.s32.totalorder %s21, 1
      %p53 = por %p51, %p52
      %p54 = scmp.ne.s32.totalorder %s45, %s46
      %p55 = scmp.eq.s32.totalorder %s21, 0
      %p56 = por %p54, %p55
      %p57 = scmp.ne.s32.totalorder %s45, %s46
      %p58 = scmp.eq.s32.totalorder %s22, 1
      %p59 = por %p57, %p58
      %p61 = scmp.ne.s32.totalorder %s46, %s60
      %p62 = scmp.eq.s32.totalorder %s22, 0
      %p63 = por %p61, %p62
      %s64 = ssub.s32 %s23, %s42
      %s65 = ssub.s32 %s24, %s38
      %s66 = sor.u32 %s64, %s65
      %p67 = scmp.eq.s32.totalorder %s66, 0
      %s69 = sadd.s32 %s68, 1
      %s70 = scalar_select %p67, %s68, %s69
      %p73 = pneg %p67
      %p74 = scmp.eq.s32.totalorder %s16, 1
      %p75 = por %p73, %p74
      %p76 = scmp.ne.s32.totalorder %s68, %s71
      %p77 = scmp.eq.s32.totalorder %s16, 0
      %p78 = por %p76, %p77
      %p79 = scmp.ne.s32.totalorder %s68, %s71
      %p80 = scmp.eq.s32.totalorder %s21, 1
      %p81 = por %p79, %p80
      %p82 = scmp.ne.s32.totalorder %s71, %s72
      %p83 = scmp.eq.s32.totalorder %s21, 0
      %p84 = por %p82, %p83
      %p85 = scmp.ne.s32.totalorder %s71, %s72
      %p86 = scmp.eq.s32.totalorder %s22, 1
      %p87 = por %p85, %p86
      %p89 = scmp.ne.s32.totalorder %s72, %s88
      %p90 = scmp.eq.s32.totalorder %s22, 0
      %p91 = por %p89, %p90
      %s92 = ssub.s32 %s23, %s42
      %s93 = ssub.s32 %s25, %s34
      %s94 = sor.u32 %s92, %s93
      %p95 = scmp.eq.s32.totalorder %s94, 0
      %s97 = sadd.s32 %s96, 1
      %s98 = scalar_select %p95, %s96, %s97
      %p101 = pneg %p95
      %p102 = scmp.eq.s32.totalorder %s16, 1
      %p103 = por %p101, %p102
      %p104 = scmp.ne.s32.totalorder %s96, %s99
      %p105 = scmp.eq.s32.totalorder %s16, 0
      %p106 = por %p104, %p105
      %p107 = scmp.ne.s32.totalorder %s96, %s99
      %p108 = scmp.eq.s32.totalorder %s21, 1
      %p109 = por %p107, %p108
      %p110 = scmp.ne.s32.totalorder %s99, %s100
      %p111 = scmp.eq.s32.totalorder %s21, 0
      %p112 = por %p110, %p111
      %p113 = scmp.ne.s32.totalorder %s99, %s100
      %p114 = scmp.eq.s32.totalorder %s22, 1
      %p115 = por %p113, %p114
      %p117 = scmp.ne.s32.totalorder %s100, %s116
      %p118 = scmp.eq.s32.totalorder %s22, 0
      %p119 = por %p117, %p118
      %s120 = ssub.s32 %s23, %s42
      %s121 = ssub.s32 %s25, %s34
      %s122 = sor.u32 %s120, %s121
      %p123 = scmp.eq.s32.totalorder %s122, 0
      %s125 = sadd.s32 %s124, 1
      %s126 = scalar_select %p123, %s124, %s125
      %p129 = pneg %p123
      %p130 = scmp.eq.s32.totalorder %s16, 1
      %p131 = por %p129, %p130
      %p132 = scmp.ne.s32.totalorder %s124, %s127
      %p133 = scmp.eq.s32.totalorder %s16, 0
      %p134 = por %p132, %p133
      %p135 = scmp.ne.s32.totalorder %s124, %s127
      %p136 = scmp.eq.s32.totalorder %s21, 1
      %p137 = por %p135, %p136
      %p138 = scmp.ne.s32.totalorder %s127, %s128
      %p139 = scmp.eq.s32.totalorder %s21, 0
      %p140 = por %p138, %p139
      %p141 = scmp.ne.s32.totalorder %s127, %s128
      %p142 = scmp.eq.s32.totalorder %s22, 1
      %p143 = por %p141, %p142
      %p145 = scmp.ne.s32.totalorder %s128, %s144
      %p146 = scmp.eq.s32.totalorder %s22, 0
      %p147 = por %p145, %p146
      %s148 = ssub.s32 %s23, %s42
      %p149 = scmp.eq.s32.totalorder %s148, 0
      %s151 = sadd.s32 %s150, 1
      %s152 = scalar_select %p149, %s150, %s151
      %p155 = pneg %p149
      %p156 = scmp.eq.s32.totalorder %s16, 1
      %p157 = por %p155, %p156
      %p158 = scmp.ne.s32.totalorder %s150, %s153
      %p159 = scmp.eq.s32.totalorder %s16, 0
      %p160 = por %p158, %p159
      %p161 = scmp.ne.s32.totalorder %s150, %s153
      %p162 = scmp.eq.s32.totalorder %s21, 1
      %p163 = por %p161, %p162
      %p164 = scmp.ne.s32.totalorder %s153, %s154
      %p165 = scmp.eq.s32.totalorder %s21, 0
      %p166 = por %p164, %p165
      %p167 = scmp.ne.s32.totalorder %s153, %s154
      %p168 = scmp.eq.s32.totalorder %s22, 1
      %p169 = por %p167, %p168
      %p171 = scmp.ne.s32.totalorder %s154, %s170
      %p172 = scmp.eq.s32.totalorder %s22, 0
      %p173 = por %p171, %p172
      %s175 = sadd.s32 %s174, 1
      %p178 = scmp.eq.s32.totalorder %s16, 1
      %p179 = scmp.ne.s32.totalorder %s174, %s176
      %p180 = scmp.eq.s32.totalorder %s16, 0
      %p181 = por %p179, %p180
      %p182 = scmp.ne.s32.totalorder %s174, %s176
      %p183 = scmp.eq.s32.totalorder %s21, 1
      %p184 = por %p182, %p183
      %p185 = scmp.ne.s32.totalorder %s176, %s177
      %p186 = scmp.eq.s32.totalorder %s21, 0
      %p187 = por %p185, %p186
      %p188 = scmp.ne.s32.totalorder %s176, %s177
      %p189 = scmp.eq.s32.totalorder %s22, 1
      %p190 = por %p188, %p189
      %p192 = scmp.ne.s32.totalorder %s177, %s191
      %p193 = scmp.eq.s32.totalorder %s22, 0
      %p194 = por %p192, %p193
      %s196 = sadd.s32 %s195, 1
      %p199 = scmp.eq.s32.totalorder %s16, 1
      %p200 = scmp.ne.s32.totalorder %s195, %s197
      %p201 = scmp.eq.s32.totalorder %s16, 0
      %p202 = por %p200, %p201
      %p203 = scmp.ne.s32.totalorder %s195, %s197
      %p204 = scmp.eq.s32.totalorder %s21, 1
      %p205 = por %p203, %p204
      %p206 = scmp.ne.s32.totalorder %s197, %s198
      %p207 = scmp.eq.s32.totalorder %s21, 0
      %p208 = por %p206, %p207
      %p209 = scmp.ne.s32.totalorder %s197, %s198
      %p210 = scmp.eq.s32.totalorder %s22, 1
      %p211 = por %p209, %p210
      %p213 = scmp.ne.s32.totalorder %s198, %s212
      %p214 = scmp.eq.s32.totalorder %s22, 0
      %p215 = por %p213, %p214
      %s217 = sadd.s32 %s216, 1
      %p220 = scmp.eq.s32.totalorder %s16, 1
      %p221 = scmp.ne.s32.totalorder %s216, %s218
      %p222 = scmp.eq.s32.totalorder %s16, 0
      %p223 = por %p221, %p222
      %p224 = scmp.ne.s32.totalorder %s216, %s218
      %p225 = scmp.eq.s32.totalorder %s21, 1
      %p226 = por %p224, %p225
      %p227 = scmp.ne.s32.totalorder %s218, %s219
      %p228 = scmp.eq.s32.totalorder %s21, 0
      %p229 = por %p227, %p228
      %p230 = scmp.ne.s32.totalorder %s218, %s219
      %p231 = scmp.eq.s32.totalorder %s22, 1
      %p232 = por %p230, %p231
      %p234 = scmp.ne.s32.totalorder %s219, %s233
      %p235 = scmp.eq.s32.totalorder %s22, 0
      %p236 = por %p234, %p235
      %s238 = sadd.s32 %s237, 1
      %p241 = scmp.eq.s32.totalorder %s16, 1
      %p242 = scmp.ne.s32.totalorder %s237, %s239
      %p243 = scmp.eq.s32.totalorder %s16, 0
      %p244 = por %p242, %p243
      %p245 = scmp.ne.s32.totalorder %s237, %s239
      %p246 = scmp.eq.s32.totalorder %s21, 1
      %p247 = por %p245, %p246
      %p248 = scmp.ne.s32.totalorder %s239, %s240
      %p249 = scmp.eq.s32.totalorder %s21, 0
      %p250 = por %p248, %p249
      %p251 = scmp.ne.s32.totalorder %s239, %s240
      %p252 = scmp.eq.s32.totalorder %s22, 1
      %p253 = por %p251, %p252
      %p255 = scmp.ne.s32.totalorder %s240, %s254
      %p256 = scmp.eq.s32.totalorder %s22, 0
      %p257 = por %p255, %p256
      %s258 = ssub.s32 %s23, %s42
      %s259 = ssub.s32 %s24, %s38
      %s260 = sor.u32 %s258, %s259
      %p261 = scmp.eq.s32.totalorder %s260, 0
      %s263 = sadd.s32 %s262, 1
      %s264 = scalar_select %p261, %s262, %s263
      %p267 = pneg %p261
      %p268 = scmp.eq.s32.totalorder %s16, 1
      %p269 = por %p267, %p268
      %p270 = scmp.ne.s32.totalorder %s262, %s265
      %p271 = scmp.eq.s32.totalorder %s16, 0
      %p272 = por %p270, %p271
      %p273 = scmp.ne.s32.totalorder %s262, %s265
      %p274 = scmp.eq.s32.totalorder %s21, 1
      %p275 = por %p273, %p274
      %p276 = scmp.ne.s32.totalorder %s265, %s266
      %p277 = scmp.eq.s32.totalorder %s21, 0
      %p278 = por %p276, %p277
      %p279 = scmp.ne.s32.totalorder %s265, %s266
      %p280 = scmp.eq.s32.totalorder %s22, 1
      %p281 = por %p279, %p280
      %p283 = scmp.ne.s32.totalorder %s266, %s282
      %p284 = scmp.eq.s32.totalorder %s22, 0
      %p285 = por %p283, %p284
      %p286 = scmp.le.s32.totalorder 1, %s16
      %p287 = scmp.lt.s32.totalorder %s16, 3
      %p288 = pnand %p286, %p287
      %p289 = pneg %p288
      // Predicated region
      $region9: #{dan_forward.3} parent=5 // pred_check
        _
      $region10: #{dan_forward.3} parent=5 // pred_check_branch
        %291 = sbr.rel (%p288) target = $region12
      $region11: #{dan_forward.3} parent=5 // pred_region
        %s292 = ssub.s32 %s16, 1
        // Predicated region
        $region13: #{dan_forward.3} parent=11 // pred_check
          %p293 = pneg %p56
        $region14: #{dan_forward.3} parent=11 // pred_check_branch
          %295 = sbr.rel (%p293) target = $region16
        $region15: #{dan_forward.3} parent=11 // pred_region
          %297 = vsyncadd [#allocation7], 0
          %s299 = sshll.u32 %s0, 4
          %s300 = int_to_ptr.vmem [resolvable:$true] %s299
          %302 = dma.vmem_to_smem %s300, 16, [#allocation6], [#allocation7]
        $region16: #{dan_forward.3} parent=11 // pred_fallthru
          _
        // Predicated region
        $region17: #{dan_forward.3} parent=11 // pred_check
          %p303 = pneg %p187
        $region18: #{dan_forward.3} parent=11 // pred_check_branch
          %305 = sbr.rel (%p303) target = $region20
        $region19: #{dan_forward.3} parent=11 // pred_region
          _
        $region20: #{dan_forward.3} parent=11 // pred_fallthru
          _
        // Predicated region
        $region21: #{dan_forward.3} parent=11 // pred_check
          %p306 = pneg %p208
        $region22: #{dan_forward.3} parent=11 // pred_check_branch
          %308 = sbr.rel (%p306) target = $region24
        $region23: #{dan_forward.3} parent=11 // pred_region
          _
        $region24: #{dan_forward.3} parent=11 // pred_fallthru
          _
        // Predicated region
        $region25: #{dan_forward.3} parent=11 // pred_check
          %p309 = pneg %p229
        $region26: #{dan_forward.3} parent=11 // pred_check_branch
          %311 = sbr.rel (%p309) target = $region28
        $region27: #{dan_forward.3} parent=11 // pred_region
          _
        $region28: #{dan_forward.3} parent=11 // pred_fallthru
          _
        // Predicated region
        $region29: #{dan_forward.3} parent=11 // pred_check
          %p312 = pneg %p250
        $region30: #{dan_forward.3} parent=11 // pred_check_branch
          %314 = sbr.rel (%p312) target = $region32
        $region31: #{dan_forward.3} parent=11 // pred_region
          _
        $region32: #{dan_forward.3} parent=11 // pred_fallthru
          _
      $region12: #{dan_forward.3} parent=5 // pred_fallthru
        _
      %p315 = scmp.lt.s32.totalorder %s16, 2
      // Predicated region
      $region33: #{dan_forward.3} parent=5 // pred_check
        %p316 = pneg %p315
      $region34: #{dan_forward.3} parent=5 // pred_check_branch
        %318 = sbr.rel (%p316) target = $region36
      $region35: #{dan_forward.3} parent=5 // pred_region
        // Predicated region
        $region37: #{dan_forward.3} parent=35 // pred_check
          %p319 = pneg %p78
        $region38: #{dan_forward.3} parent=35 // pred_check_branch
          %321 = sbr.rel (%p319) target = $region40
        $region39: #{dan_forward.3} parent=35 // pred_region
          %p322 = scmp.lt.s32.totalorder %s23, 1
          %s323 = scalar_select %p322, %s23, 1
          %p324 = scmp.lt.s32.totalorder %s24, 0
          %s325 = scalar_select %p324, %s24, 0
          %s326 = smul.addr %s323, 2
          %s327 = sadd.s32 %s325, %s326
          %s328 = smul.addr %s327, 8
          %s329 = scalar_lea.vmem %s1, %s328
        $region40: #{dan_forward.3} parent=35 // pred_fallthru
          _
        // Predicated region
        $region41: #{dan_forward.3} parent=35 // pred_check
          %p330 = pneg %p106
        $region42: #{dan_forward.3} parent=35 // pred_check_branch
          %332 = sbr.rel (%p330) target = $region44
        $region43: #{dan_forward.3} parent=35 // pred_region
          %p333 = scmp.lt.s32.totalorder %s23, 1
          %s334 = scalar_select %p333, %s23, 1
          %p335 = scmp.lt.s32.totalorder %s25, 0
          %s336 = scalar_select %p335, %s25, 0
          %s337 = smul.addr %s334, 2
          %s338 = sadd.s32 %s336, %s337
          %s339 = smul.addr %s338, 8
          %s340 = scalar_lea.vmem %s2, %s339
        $region44: #{dan_forward.3} parent=35 // pred_fallthru
          _
        // Predicated region
        $region45: #{dan_forward.3} parent=35 // pred_check
          %p341 = pneg %p134
        $region46: #{dan_forward.3} parent=35 // pred_check_branch
          %343 = sbr.rel (%p341) target = $region48
        $region47: #{dan_forward.3} parent=35 // pred_region
          %p344 = scmp.lt.s32.totalorder %s23, 1
          %s345 = scalar_select %p344, %s23, 1
          %p346 = scmp.lt.s32.totalorder %s25, 0
          %s347 = scalar_select %p346, %s25, 0
          %s348 = sadd.s32 %s347, %s345
          %s349 = smul.addr %s348, 2
          %s350 = scalar_lea.vmem %s3, %s349
        $region48: #{dan_forward.3} parent=35 // pred_fallthru
          _
        // Predicated region
        $region49: #{dan_forward.3} parent=35 // pred_check
          %p351 = pneg %p160
        $region50: #{dan_forward.3} parent=35 // pred_check_branch
          %353 = sbr.rel (%p351) target = $region52
        $region51: #{dan_forward.3} parent=35 // pred_region
          %p354 = scmp.lt.s32.totalorder %s23, 1
          %s355 = scalar_select %p354, %s23, 1
          %s356 = smul.addr %s355, 2
          %s357 = smul.addr %s356, 8
          %s358 = scalar_lea.vmem %s4, %s357
        $region52: #{dan_forward.3} parent=35 // pred_fallthru
          _
      $region36: #{dan_forward.3} parent=5 // pred_fallthru
        _
      %p359 = scmp.le.s32.totalorder 1, %s16
      %p360 = scmp.lt.s32.totalorder %s16, 3
      %p361 = pnand %p359, %p360
      %p362 = pneg %p361
      // Predicated region
      $region53: #{dan_forward.3} parent=5 // pred_check
        _
      $region54: #{dan_forward.3} parent=5 // pred_check_branch
        %364 = sbr.rel (%p361) target = $region56
      $region55: #{dan_forward.3} parent=5 // pred_region
        %s365 = ssub.s32 %s16, 1
        // Predicated region
        $region57: #{dan_forward.3} parent=55 // pred_check
          %p366 = pneg %p56
        $region58: #{dan_forward.3} parent=55 // pred_check_branch
          %368 = sbr.rel (%p366) target = $region60
        $region59: #{dan_forward.3} parent=55 // pred_region
          %370 = dma.done [#allocation7], 16
        $region60: #{dan_forward.3} parent=55 // pred_fallthru
          _
        %371 = sfence
        %p372 = pneg %p56
        %p373 = pneg %p53
        %p374 = scmp.lt.s32.totalorder %s26, 1
        %s375 = scalar_select %p374, %s26, 1
        %p376 = scmp.lt.s32.totalorder %s27, 0
        %s377 = scalar_select %p376, %s27, 0
        %s378 = smul.addr %s375, 2
        %s379 = sadd.s32 %s377, %s378
        %s380 = smul.addr %s379, 8
        %s381 = scalar_lea.vmem %s1, %s380
        %p382 = pneg %p84
        %p383 = pneg %p81
        %p384 = scmp.lt.s32.totalorder %s26, 1
        %s385 = scalar_select %p384, %s26, 1
        %p386 = scmp.lt.s32.totalorder %s28, 0
        %s387 = scalar_select %p386, %s28, 0
        %s388 = smul.addr %s385, 2
        %s389 = sadd.s32 %s387, %s388
        %s390 = smul.addr %s389, 8
        %s391 = scalar_lea.vmem %s2, %s390
        %p392 = pneg %p112
        %p393 = pneg %p109
        %p394 = scmp.lt.s32.totalorder %s26, 1
        %s395 = scalar_select %p394, %s26, 1
        %p396 = scmp.lt.s32.totalorder %s28, 0
        %s397 = scalar_select %p396, %s28, 0
        %s398 = sadd.s32 %s397, %s395
        %s399 = smul.addr %s398, 2
        %s400 = scalar_lea.vmem %s3, %s399
        %p401 = pneg %p140
        %p402 = pneg %p137
        %p403 = scmp.lt.s32.totalorder %s26, 1
        %s404 = scalar_select %p403, %s26, 1
        %s405 = smul.addr %s404, 2
        %s406 = smul.addr %s405, 8
        %s407 = scalar_lea.vmem %s4, %s406
        %p408 = pneg %p166
        %p409 = pneg %p163
        %p410 = pneg %p187
        %p411 = pneg %p184
        %p412 = pneg %p208
        %p413 = pneg %p205
        %p414 = pneg %p229
        %p415 = pneg %p226
        %p416 = pneg %p250
        %p417 = pneg %p247
        %p418 = pneg %p278
        %p419 = pneg %p275
        %p420 = scmp.lt.s32.totalorder %s26, 1
        %s421 = scalar_select %p420, %s26, 1
        %p422 = scmp.lt.s32.totalorder %s27, 0
        %s423 = scalar_select %p422, %s27, 0
        %s424 = smul.addr %s421, 2
        %s425 = sadd.s32 %s423, %s424
        %s426 = smul.addr %s425, 8
        %s427 = scalar_lea.vmem %s9, %s426
        %p428 = scmp.lt.s32.totalorder %s26, 1
        %s429 = scalar_select %p428, %s26, 1
        %p430 = scmp.lt.s32.totalorder %s27, 0
        %s431 = scalar_select %p430, %s27, 0
        %s432 = smul.addr %s429, 2
        %s433 = sadd.s32 %s431, %s432
        %s434 = smul.addr %s433, 8
        %s435 = scalar_lea.vmem %s1, %s434
        %p436 = scmp.lt.s32.totalorder %s26, 1
        %s437 = scalar_select %p436, %s26, 1
        %p438 = scmp.lt.s32.totalorder %s28, 0
        %s439 = scalar_select %p438, %s28, 0
        %s440 = smul.addr %s437, 2
        %s441 = sadd.s32 %s439, %s440
        %s442 = smul.addr %s441, 8
        %s443 = scalar_lea.vmem %s2, %s442
        %p444 = scmp.lt.s32.totalorder %s26, 1
        %s445 = scalar_select %p444, %s26, 1
        %p446 = scmp.lt.s32.totalorder %s28, 0
        %s447 = scalar_select %p446, %s28, 0
        %s448 = sadd.s32 %s447, %s445
        %s449 = smul.addr %s448, 2
        %s450 = scalar_lea.vmem %s3, %s449
        %p451 = scmp.lt.s32.totalorder %s26, 1
        %s452 = scalar_select %p451, %s26, 1
        %s453 = smul.addr %s452, 2
        %s454 = smul.addr %s453, 8
        %s455 = scalar_lea.vmem %s4, %s454
        %p456 = scmp.lt.s32.totalorder %s26, 1
        %s457 = scalar_select %p456, %s26, 1
        %p458 = scmp.lt.s32.totalorder %s27, 0
        %s459 = scalar_select %p458, %s27, 0
        %s460 = smul.addr %s457, 2
        %s461 = sadd.s32 %s459, %s460
        %s462 = smul.addr %s461, 8
        %s463 = scalar_lea.vmem %s9, %s462
        %p464 = scmp.eq.s32.totalorder %s28, 0
        // Predicated region
        $region61: #{dan_forward.3} parent=55 // pred_check
          %p465 = pneg %p464
        $region62: #{dan_forward.3} parent=55 // pred_check_branch
          %467 = sbr.rel (%p465) target = $region64
        $region63: #{dan_forward.3} parent=55 // pred_region
          %v468 = vld [vmem:[%s435] sm:$0xff]
          %v469 = vld [vmem:[%s435 + $0x8] sm:$0xff]
          %v470 = vld [vmem:[%s5] sm:$0x3]
          %v471 = vld [vmem:[%s6] sm:$0x3]
          %473 = vset.pattern.permute.xlu0 0
          %474 = vperm.xlu0 %473, %v471
          %v475 = vpop.permute.xlu0 %474
          %vm477 = vcmask 130048
          %v479 = vsel %vm477, %v470, 0
          %481 = vmatpush.msra.mxu0 0.0
          %482 = vmatpush.msra.mxu0 0.0
          %483 = vmatpush.msra.mxu0 0.0
          %484 = vmatpush.msra.mxu0 0.0
          %485 = vmatpush.msra.mxu0 0.0
          %486 = vmatpush.msra.mxu0 0.0
          %487 = vmatpush.msra.mxu0 0.0
          %488 = vmatpush.msra.mxu0 0.0
          %489 = vmatpush.msra.mxu0 0.0
          %490 = vmatpush.msra.mxu0 0.0
          %491 = vmatpush.msra.mxu0 0.0
          %492 = vmatpush.msra.mxu0 0.0
          %493 = vmatpush.msra.mxu0 0.0
          %494 = vmatpush.msra.mxu0 0.0
          %v495 = vand.u32 %v469, 4294901760
          %496 = vmatpush.msra.mxu0 %v495
          %v497 = vand.u32 %v468, 4294901760
          %498 = vmatpush.msra.mxu0 %v497
          %v499 = vand.u32 %v479, 4294901760
          %v500 = vsub.f32 %v479, %v499
          %v501 = vand.u32 %v500, 4294901760
          %v502 = vsub.f32 %v500, %v501
          %v503 = vand.u32 %v502, 4294901760
          %504 = vmatmul.f32.gmra.mxu0 %v503
          %v505 = vpop.f32.mrf.mxu0
          %v506 = vadd.f32 %v475, %v505
          %507 = vdwg.mxu0
          %508 = vmatpush.msra.mxu0 0.0
          %509 = vmatpush.msra.mxu0 0.0
          %510 = vmatpush.msra.mxu0 0.0
          %511 = vmatpush.msra.mxu0 0.0
          %512 = vmatpush.msra.mxu0 0.0
          %513 = vmatpush.msra.mxu0 0.0
          %514 = vmatpush.msra.mxu0 0.0
          %515 = vmatpush.msra.mxu0 0.0
          %516 = vmatpush.msra.mxu0 0.0
          %517 = vmatpush.msra.mxu0 0.0
          %518 = vmatpush.msra.mxu0 0.0
          %519 = vmatpush.msra.mxu0 0.0
          %520 = vmatpush.msra.mxu0 0.0
          %521 = vmatpush.msra.mxu0 0.0
          %v522 = vand.u32 %v469, 4294901760
          %v523 = vsub.f32 %v469, %v522
          %v524 = vand.u32 %v523, 4294901760
          %v525 = vsub.f32 %v523, %v524
          %v526 = vand.u32 %v525, 4294901760
          %527 = vmatpush.msra.mxu0 %v526
          %v528 = vand.u32 %v468, 4294901760
          %v529 = vsub.f32 %v468, %v528
          %v530 = vand.u32 %v529, 4294901760
          %v531 = vsub.f32 %v529, %v530
          %v532 = vand.u32 %v531, 4294901760
          %533 = vmatpush.msra.mxu0 %v532
          %v534 = vand.u32 %v479, 4294901760
          %535 = vmatmul.f32.gmra.mxu0 %v534
          %v536 = vpop.f32.mrf.mxu0
          %v537 = vadd.f32 %v506, %v536
          %538 = vdwg.mxu0
          %539 = vmatpush.msra.mxu0 0.0
          %540 = vmatpush.msra.mxu0 0.0
          %541 = vmatpush.msra.mxu0 0.0
          %542 = vmatpush.msra.mxu0 0.0
          %543 = vmatpush.msra.mxu0 0.0
          %544 = vmatpush.msra.mxu0 0.0
          %545 = vmatpush.msra.mxu0 0.0
          %546 = vmatpush.msra.mxu0 0.0
          %547 = vmatpush.msra.mxu0 0.0
          %548 = vmatpush.msra.mxu0 0.0
          %549 = vmatpush.msra.mxu0 0.0
          %550 = vmatpush.msra.mxu0 0.0
          %551 = vmatpush.msra.mxu0 0.0
          %552 = vmatpush.msra.mxu0 0.0
          %v553 = vand.u32 %v469, 4294901760
          %v554 = vsub.f32 %v469, %v553
          %555 = vmatpush.msra.mxu0 %v554
          %v556 = vand.u32 %v468, 4294901760
          %v557 = vsub.f32 %v468, %v556
          %558 = vmatpush.msra.mxu0 %v557
          %v559 = vand.u32 %v479, 4294901760
          %v560 = vsub.f32 %v479, %v559
          %561 = vmatmul.f32.gmra.mxu0 %v560
          %v562 = vpop.f32.mrf.mxu0
          %v563 = vadd.f32 %v537, %v562
          %564 = vdwg.mxu0
          %565 = vmatpush.msra.mxu0 0.0
          %566 = vmatpush.msra.mxu0 0.0
          %567 = vmatpush.msra.mxu0 0.0
          %568 = vmatpush.msra.mxu0 0.0
          %569 = vmatpush.msra.mxu0 0.0
          %570 = vmatpush.msra.mxu0 0.0
          %571 = vmatpush.msra.mxu0 0.0
          %572 = vmatpush.msra.mxu0 0.0
          %573 = vmatpush.msra.mxu0 0.0
          %574 = vmatpush.msra.mxu0 0.0
          %575 = vmatpush.msra.mxu0 0.0
          %576 = vmatpush.msra.mxu0 0.0
          %577 = vmatpush.msra.mxu0 0.0
          %578 = vmatpush.msra.mxu0 0.0
          %v579 = vand.u32 %v469, 4294901760
          %580 = vmatpush.msra.mxu0 %v579
          %v581 = vand.u32 %v468, 4294901760
          %582 = vmatpush.msra.mxu0 %v581
          %v583 = vand.u32 %v479, 4294901760
          %v584 = vsub.f32 %v479, %v583
          %v585 = vand.u32 %v584, 4294901760
          %586 = vmatmul.f32.gmra.mxu0 %v585
          %v587 = vpop.f32.mrf.mxu0
          %v588 = vadd.f32 %v563, %v587
          %589 = vdwg.mxu0
          %590 = vmatpush.msra.mxu0 0.0
          %591 = vmatpush.msra.mxu0 0.0
          %592 = vmatpush.msra.mxu0 0.0
          %593 = vmatpush.msra.mxu0 0.0
          %594 = vmatpush.msra.mxu0 0.0
          %595 = vmatpush.msra.mxu0 0.0
          %596 = vmatpush.msra.mxu0 0.0
          %597 = vmatpush.msra.mxu0 0.0
          %598 = vmatpush.msra.mxu0 0.0
          %599 = vmatpush.msra.mxu0 0.0
          %600 = vmatpush.msra.mxu0 0.0
          %601 = vmatpush.msra.mxu0 0.0
          %602 = vmatpush.msra.mxu0 0.0
          %603 = vmatpush.msra.mxu0 0.0
          %v604 = vand.u32 %v469, 4294901760
          %v605 = vsub.f32 %v469, %v604
          %v606 = vand.u32 %v605, 4294901760
          %607 = vmatpush.msra.mxu0 %v606
          %v608 = vand.u32 %v468, 4294901760
          %v609 = vsub.f32 %v468, %v608
          %v610 = vand.u32 %v609, 4294901760
          %611 = vmatpush.msra.mxu0 %v610
          %v612 = vand.u32 %v479, 4294901760
          %613 = vmatmul.f32.gmra.mxu0 %v612
          %v614 = vpop.f32.mrf.mxu0
          %v615 = vadd.f32 %v588, %v614
          %616 = vdwg.mxu0
          %617 = vmatpush.msra.mxu0 0.0
          %618 = vmatpush.msra.mxu0 0.0
          %619 = vmatpush.msra.mxu0 0.0
          %620 = vmatpush.msra.mxu0 0.0
          %621 = vmatpush.msra.mxu0 0.0
          %622 = vmatpush.msra.mxu0 0.0
          %623 = vmatpush.msra.mxu0 0.0
          %624 = vmatpush.msra.mxu0 0.0
          %625 = vmatpush.msra.mxu0 0.0
          %626 = vmatpush.msra.mxu0 0.0
          %627 = vmatpush.msra.mxu0 0.0
          %628 = vmatpush.msra.mxu0 0.0
          %629 = vmatpush.msra.mxu0 0.0
          %630 = vmatpush.msra.mxu0 0.0
          %v631 = vand.u32 %v469, 4294901760
          %632 = vmatpush.msra.mxu0 %v631
          %v633 = vand.u32 %v468, 4294901760
          %634 = vmatpush.msra.mxu0 %v633
          %v635 = vand.u32 %v479, 4294901760
          %636 = vmatmul.f32.gmra.mxu0 %v635
          %v637 = vpop.f32.mrf.mxu0
          %v638 = vadd.f32 %v615, %v637
          %639 = vdwg.mxu0
          %640 = vst [vmem:[#allocation2] sm:$0x3] %v638
          %641 = vst [vmem:[#allocation3] sm:$0x1] -1e+30
          %642 = vst [vmem:[#allocation4] sm:$0x1] 0.0
          %643 = vst [vmem:[#allocation5] sm:$0xff] 0.0
          %644 = vst [vmem:[#allocation5 + $0x8] sm:$0xff] 0.0
        $region64: #{dan_forward.3} parent=55 // pred_fallthru
          _
        %v645 = vld [vmem:[%s443] sm:$0xff]
        %v646 = vld [vmem:[%s443 + $0x8] sm:$0xff]
        %v647 = vld [vmem:[%s450] sm:$0x3]
        // Predicated region
        $region65: #{dan_forward.3} parent=55 // pred_check
          %p648 = pneg %p464
        $region66: #{dan_forward.3} parent=55 // pred_check_branch
          %650 = sbr.rel (%p648) target = $region68
        $region67: #{dan_forward.3} parent=55 // pred_region
          %v651 = vld [vmem:[#allocation2] sm:$0x3]
          %652 = vxpose.xlu0.b32.start [1/16] %v647, 128
          %653 = vxpose.xlu0.b32.cont [2/16] 0.0, 128
          %654 = vxpose.xlu0.b32.cont [3/16] 0.0, 128
          %655 = vxpose.xlu0.b32.cont [4/16] 0.0, 128
          %656 = vxpose.xlu0.b32.cont [5/16] 0.0, 128
          %657 = vxpose.xlu0.b32.cont [6/16] 0.0, 128
          %658 = vxpose.xlu0.b32.cont [7/16] 0.0, 128
          %659 = vxpose.xlu0.b32.cont [8/16] 0.0, 128
          %660 = vxpose.xlu0.b32.cont [9/16] 0.0, 128
          %661 = vxpose.xlu0.b32.cont [10/16] 0.0, 128
          %662 = vxpose.xlu0.b32.cont [11/16] 0.0, 128
          %663 = vxpose.xlu0.b32.cont [12/16] 0.0, 128
          %664 = vxpose.xlu0.b32.cont [13/16] 0.0, 128
          %665 = vxpose.xlu0.b32.cont [14/16] 0.0, 128
          %666 = vxpose.xlu0.b32.cont [15/16] 0.0, 128
          %667 = vxpose.xlu0.b32.end [16/16] 0.0, 128
          %v668 = vpop.trf.xlu0
          %v669 = vpop.trf.xlu0
          %v670 = vpop.trf.xlu0
          %v671 = vpop.trf.xlu0
          %v672 = vpop.trf.xlu0
          %v673 = vpop.trf.xlu0
          %v674 = vpop.trf.xlu0
          %v675 = vpop.trf.xlu0
          %v676 = vpop.trf.xlu0
          %v677 = vpop.trf.xlu0
          %v678 = vpop.trf.xlu0
          %v679 = vpop.trf.xlu0
          %v680 = vpop.trf.xlu0
          %v681 = vpop.trf.xlu0
          %v682 = vpop.trf.xlu0
          %v683 = vpop.trf.xlu0
          %vm684 = vcmask 15360
          %v686 = vsel %vm684, %v668, 0
          %v689 = vsel %vm684, %v669, 0
          %v692 = vsel %vm684, %v670, 0
          %v695 = vsel %vm684, %v671, 0
          %v698 = vsel %vm684, %v672, 0
          %v701 = vsel %vm684, %v673, 0
          %v704 = vsel %vm684, %v674, 0
          %v707 = vsel %vm684, %v675, 0
          %v710 = vsel %vm684, %v676, 0
          %v713 = vsel %vm684, %v677, 0
          %v716 = vsel %vm684, %v678, 0
          %v719 = vsel %vm684, %v679, 0
          %v722 = vsel %vm684, %v680, 0
          %v725 = vsel %vm684, %v681, 0
          %v728 = vsel %vm684, %v682, 0
          %v731 = vsel %vm684, %v683, 0
          %vm733 = vcmask 1041408
          %v735 = vsel %vm733, %v651, 0
          %737 = vmatpush.msra.mxu0 0.0
          %738 = vmatpush.msra.mxu0 0.0
          %739 = vmatpush.msra.mxu0 0.0
          %740 = vmatpush.msra.mxu0 0.0
          %741 = vmatpush.msra.mxu0 0.0
          %742 = vmatpush.msra.mxu0 0.0
          %743 = vmatpush.msra.mxu0 0.0
          %744 = vmatpush.msra.mxu0 0.0
          %745 = vmatpush.msra.mxu0 0.0
          %746 = vmatpush.msra.mxu0 0.0
          %747 = vmatpush.msra.mxu0 0.0
          %748 = vmatpush.msra.mxu0 0.0
          %749 = vmatpush.msra.mxu0 0.0
          %750 = vmatpush.msra.mxu0 0.0
          %751 = vmatpush.msra.mxu0 0.0
          %v752 = vand.u32 %v735, 4294901760
          %753 = vmatpush.msra.mxu0 %v752
          %v754 = vand.u32 %v686, 4294901760
          %v755 = vsub.f32 %v686, %v754
          %v756 = vand.u32 %v755, 4294901760
          %v757 = vsub.f32 %v755, %v756
          %v758 = vand.u32 %v757, 4294901760
          %759 = vmatmul.f32.gmra.mxu0 %v758
          %v760 = vpop.f32.mrf.mxu0
          %v761 = vadd.f32 0.0, %v760
          %v762 = vand.u32 %v689, 4294901760
          %v763 = vsub.f32 %v689, %v762
          %v764 = vand.u32 %v763, 4294901760
          %v765 = vsub.f32 %v763, %v764
          %v766 = vand.u32 %v765, 4294901760
          %767 = vmatmul.f32.gmra.mxu0 %v766
          %v768 = vpop.f32.mrf.mxu0
          %v769 = vadd.f32 0.0, %v768
          %v770 = vand.u32 %v692, 4294901760
          %v771 = vsub.f32 %v692, %v770
          %v772 = vand.u32 %v771, 4294901760
          %v773 = vsub.f32 %v771, %v772
          %v774 = vand.u32 %v773, 4294901760
          %775 = vmatmul.f32.gmra.mxu0 %v774
          %v776 = vpop.f32.mrf.mxu0
          %v777 = vadd.f32 0.0, %v776
          %v778 = vand.u32 %v695, 4294901760
          %v779 = vsub.f32 %v695, %v778
          %v780 = vand.u32 %v779, 4294901760
          %v781 = vsub.f32 %v779, %v780
          %v782 = vand.u32 %v781, 4294901760
          %783 = vmatmul.f32.gmra.mxu0 %v782
          %v784 = vpop.f32.mrf.mxu0
          %v785 = vadd.f32 0.0, %v784
          %v786 = vand.u32 %v698, 4294901760
          %v787 = vsub.f32 %v698, %v786
          %v788 = vand.u32 %v787, 4294901760
          %v789 = vsub.f32 %v787, %v788
          %v790 = vand.u32 %v789, 4294901760
          %791 = vmatmul.f32.gmra.mxu0 %v790
          %v792 = vpop.f32.mrf.mxu0
          %v793 = vadd.f32 0.0, %v792
          %v794 = vand.u32 %v701, 4294901760
          %v795 = vsub.f32 %v701, %v794
          %v796 = vand.u32 %v795, 4294901760
          %v797 = vsub.f32 %v795, %v796
          %v798 = vand.u32 %v797, 4294901760
          %799 = vmatmul.f32.gmra.mxu0 %v798
          %v800 = vpop.f32.mrf.mxu0
          %v801 = vadd.f32 0.0, %v800
          %v802 = vand.u32 %v704, 4294901760
          %v803 = vsub.f32 %v704, %v802
          %v804 = vand.u32 %v803, 4294901760
          %v805 = vsub.f32 %v803, %v804
          %v806 = vand.u32 %v805, 4294901760
          %807 = vmatmul.f32.gmra.mxu0 %v806
          %v808 = vpop.f32.mrf.mxu0
          %v809 = vadd.f32 0.0, %v808
          %v810 = vand.u32 %v707, 4294901760
          %v811 = vsub.f32 %v707, %v810
          %v812 = vand.u32 %v811, 4294901760
          %v813 = vsub.f32 %v811, %v812
          %v814 = vand.u32 %v813, 4294901760
          %815 = vmatmul.f32.gmra.mxu0 %v814
          %v816 = vpop.f32.mrf.mxu0
          %v817 = vadd.f32 0.0, %v816
          %v818 = vand.u32 %v710, 4294901760
          %v819 = vsub.f32 %v710, %v818
          %v820 = vand.u32 %v819, 4294901760
          %v821 = vsub.f32 %v819, %v820
          %v822 = vand.u32 %v821, 4294901760
          %823 = vmatmul.f32.gmra.mxu0 %v822
          %v824 = vpop.f32.mrf.mxu0
          %v825 = vadd.f32 0.0, %v824
          %v826 = vand.u32 %v713, 4294901760
          %v827 = vsub.f32 %v713, %v826
          %v828 = vand.u32 %v827, 4294901760
          %v829 = vsub.f32 %v827, %v828
          %v830 = vand.u32 %v829, 4294901760
          %831 = vmatmul.f32.gmra.mxu0 %v830
          %v832 = vpop.f32.mrf.mxu0
          %v833 = vadd.f32 0.0, %v832
          %v834 = vand.u32 %v716, 4294901760
          %v835 = vsub.f32 %v716, %v834
          %v836 = vand.u32 %v835, 4294901760
          %v837 = vsub.f32 %v835, %v836
          %v838 = vand.u32 %v837, 4294901760
          %839 = vmatmul.f32.gmra.mxu0 %v838
          %v840 = vpop.f32.mrf.mxu0
          %v841 = vadd.f32 0.0, %v840
          %v842 = vand.u32 %v719, 4294901760
          %v843 = vsub.f32 %v719, %v842
          %v844 = vand.u32 %v843, 4294901760
          %v845 = vsub.f32 %v843, %v844
          %v846 = vand.u32 %v845, 4294901760
          %847 = vmatmul.f32.gmra.mxu0 %v846
          %v848 = vpop.f32.mrf.mxu0
          %v849 = vadd.f32 0.0, %v848
          %v850 = vand.u32 %v722, 4294901760
          %v851 = vsub.f32 %v722, %v850
          %v852 = vand.u32 %v851, 4294901760
          %v853 = vsub.f32 %v851, %v852
          %v854 = vand.u32 %v853, 4294901760
          %855 = vmatmul.f32.gmra.mxu0 %v854
          %v856 = vpop.f32.mrf.mxu0
          %v857 = vadd.f32 0.0, %v856
          %v858 = vand.u32 %v725, 4294901760
          %v859 = vsub.f32 %v725, %v858
          %v860 = vand.u32 %v859, 4294901760
          %v861 = vsub.f32 %v859, %v860
          %v862 = vand.u32 %v861, 4294901760
          %863 = vmatmul.f32.gmra.mxu0 %v862
          %v864 = vpop.f32.mrf.mxu0
          %v865 = vadd.f32 0.0, %v864
          %v866 = vand.u32 %v728, 4294901760
          %v867 = vsub.f32 %v728, %v866
          %v868 = vand.u32 %v867, 4294901760
          %v869 = vsub.f32 %v867, %v868
          %v870 = vand.u32 %v869, 4294901760
          %871 = vmatmul.f32.gmra.mxu0 %v870
          %v872 = vpop.f32.mrf.mxu0
          %v873 = vadd.f32 0.0, %v872
          %v874 = vand.u32 %v731, 4294901760
          %v875 = vsub.f32 %v731, %v874
          %v876 = vand.u32 %v875, 4294901760
          %v877 = vsub.f32 %v875, %v876
          %v878 = vand.u32 %v877, 4294901760
          %879 = vmatmul.f32.gmra.mxu0 %v878
          %v880 = vpop.f32.mrf.mxu0
          %v881 = vadd.f32 0.0, %v880
          %882 = vdwg.mxu0
          %883 = vmatpush.msra.mxu0 0.0
          %884 = vmatpush.msra.mxu0 0.0
          %885 = vmatpush.msra.mxu0 0.0
          %886 = vmatpush.msra.mxu0 0.0
          %887 = vmatpush.msra.mxu0 0.0
          %888 = vmatpush.msra.mxu0 0.0
          %889 = vmatpush.msra.mxu0 0.0
          %890 = vmatpush.msra.mxu0 0.0
          %891 = vmatpush.msra.mxu0 0.0
          %892 = vmatpush.msra.mxu0 0.0
          %893 = vmatpush.msra.mxu0 0.0
          %894 = vmatpush.msra.mxu0 0.0
          %895 = vmatpush.msra.mxu0 0.0
          %896 = vmatpush.msra.mxu0 0.0
          %897 = vmatpush.msra.mxu0 0.0
          %v898 = vand.u32 %v735, 4294901760
          %v899 = vsub.f32 %v735, %v898
          %v900 = vand.u32 %v899, 4294901760
          %v901 = vsub.f32 %v899, %v900
          %v902 = vand.u32 %v901, 4294901760
          %903 = vmatpush.msra.mxu0 %v902
          %v904 = vand.u32 %v686, 4294901760
          %905 = vmatmul.f32.gmra.mxu0 %v904
          %v906 = vpop.f32.mrf.mxu0
          %v907 = vadd.f32 %v761, %v906
          %v908 = vand.u32 %v689, 4294901760
          %909 = vmatmul.f32.gmra.mxu0 %v908
          %v910 = vpop.f32.mrf.mxu0
          %v911 = vadd.f32 %v769, %v910
          %v912 = vand.u32 %v692, 4294901760
          %913 = vmatmul.f32.gmra.mxu0 %v912
          %v914 = vpop.f32.mrf.mxu0
          %v915 = vadd.f32 %v777, %v914
          %v916 = vand.u32 %v695, 4294901760
          %917 = vmatmul.f32.gmra.mxu0 %v916
          %v918 = vpop.f32.mrf.mxu0
          %v919 = vadd.f32 %v785, %v918
          %v920 = vand.u32 %v698, 4294901760
          %921 = vmatmul.f32.gmra.mxu0 %v920
          %v922 = vpop.f32.mrf.mxu0
          %v923 = vadd.f32 %v793, %v922
          %v924 = vand.u32 %v701, 4294901760
          %925 = vmatmul.f32.gmra.mxu0 %v924
          %v926 = vpop.f32.mrf.mxu0
          %v927 = vadd.f32 %v801, %v926
          %v928 = vand.u32 %v704, 4294901760
          %929 = vmatmul.f32.gmra.mxu0 %v928
          %v930 = vpop.f32.mrf.mxu0
          %v931 = vadd.f32 %v809, %v930
          %v932 = vand.u32 %v707, 4294901760
          %933 = vmatmul.f32.gmra.mxu0 %v932
          %v934 = vpop.f32.mrf.mxu0
          %v935 = vadd.f32 %v817, %v934
          %v936 = vand.u32 %v710, 4294901760
          %937 = vmatmul.f32.gmra.mxu0 %v936
          %v938 = vpop.f32.mrf.mxu0
          %v939 = vadd.f32 %v825, %v938
          %v940 = vand.u32 %v713, 4294901760
          %941 = vmatmul.f32.gmra.mxu0 %v940
          %v942 = vpop.f32.mrf.mxu0
          %v943 = vadd.f32 %v833, %v942
          %v944 = vand.u32 %v716, 4294901760
          %945 = vmatmul.f32.gmra.mxu0 %v944
          %v946 = vpop.f32.mrf.mxu0
          %v947 = vadd.f32 %v841, %v946
          %v948 = vand.u32 %v719, 4294901760
          %949 = vmatmul.f32.gmra.mxu0 %v948
          %v950 = vpop.f32.mrf.mxu0
          %v951 = vadd.f32 %v849, %v950
          %v952 = vand.u32 %v722, 4294901760
          %953 = vmatmul.f32.gmra.mxu0 %v952
          %v954 = vpop.f32.mrf.mxu0
          %v955 = vadd.f32 %v857, %v954
          %v956 = vand.u32 %v725, 4294901760
          %957 = vmatmul.f32.gmra.mxu0 %v956
          %v958 = vpop.f32.mrf.mxu0
          %v959 = vadd.f32 %v865, %v958
          %v960 = vand.u32 %v728, 4294901760
          %961 = vmatmul.f32.gmra.mxu0 %v960
          %v962 = vpop.f32.mrf.mxu0
          %v963 = vadd.f32 %v873, %v962
          %v964 = vand.u32 %v731, 4294901760
          %965 = vmatmul.f32.gmra.mxu0 %v964
          %v966 = vpop.f32.mrf.mxu0
          %v967 = vadd.f32 %v881, %v966
          %968 = vdwg.mxu0
          %969 = vmatpush.msra.mxu0 0.0
          %970 = vmatpush.msra.mxu0 0.0
          %971 = vmatpush.msra.mxu0 0.0
          %972 = vmatpush.msra.mxu0 0.0
          %973 = vmatpush.msra.mxu0 0.0
          %974 = vmatpush.msra.mxu0 0.0
          %975 = vmatpush.msra.mxu0 0.0
          %976 = vmatpush.msra.mxu0 0.0
          %977 = vmatpush.msra.mxu0 0.0
          %978 = vmatpush.msra.mxu0 0.0
          %979 = vmatpush.msra.mxu0 0.0
          %980 = vmatpush.msra.mxu0 0.0
          %981 = vmatpush.msra.mxu0 0.0
          %982 = vmatpush.msra.mxu0 0.0
          %983 = vmatpush.msra.mxu0 0.0
          %v984 = vand.u32 %v735, 4294901760
          %v985 = vsub.f32 %v735, %v984
          %986 = vmatpush.msra.mxu0 %v985
          %v987 = vand.u32 %v686, 4294901760
          %v988 = vsub.f32 %v686, %v987
          %989 = vmatmul.f32.gmra.mxu0 %v988
          %v990 = vpop.f32.mrf.mxu0
          %v991 = vadd.f32 %v907, %v990
          %v992 = vand.u32 %v689, 4294901760
          %v993 = vsub.f32 %v689, %v992
          %994 = vmatmul.f32.gmra.mxu0 %v993
          %v995 = vpop.f32.mrf.mxu0
          %v996 = vadd.f32 %v911, %v995
          %v997 = vand.u32 %v692, 4294901760
          %v998 = vsub.f32 %v692, %v997
          %999 = vmatmul.f32.gmra.mxu0 %v998
          %v1000 = vpop.f32.mrf.mxu0
          %v1001 = vadd.f32 %v915, %v1000
          %v1002 = vand.u32 %v695, 4294901760
          %v1003 = vsub.f32 %v695, %v1002
          %1004 = vmatmul.f32.gmra.mxu0 %v1003
          %v1005 = vpop.f32.mrf.mxu0
          %v1006 = vadd.f32 %v919, %v1005
          %v1007 = vand.u32 %v698, 4294901760
          %v1008 = vsub.f32 %v698, %v1007
          %1009 = vmatmul.f32.gmra.mxu0 %v1008
          %v1010 = vpop.f32.mrf.mxu0
          %v1011 = vadd.f32 %v923, %v1010
          %v1012 = vand.u32 %v701, 4294901760
          %v1013 = vsub.f32 %v701, %v1012
          %1014 = vmatmul.f32.gmra.mxu0 %v1013
          %v1015 = vpop.f32.mrf.mxu0
          %v1016 = vadd.f32 %v927, %v1015
          %v1017 = vand.u32 %v704, 4294901760
          %v1018 = vsub.f32 %v704, %v1017
          %1019 = vmatmul.f32.gmra.mxu0 %v1018
          %v1020 = vpop.f32.mrf.mxu0
          %v1021 = vadd.f32 %v931, %v1020
          %v1022 = vand.u32 %v707, 4294901760
          %v1023 = vsub.f32 %v707, %v1022
          %1024 = vmatmul.f32.gmra.mxu0 %v1023
          %v1025 = vpop.f32.mrf.mxu0
          %v1026 = vadd.f32 %v935, %v1025
          %v1027 = vand.u32 %v710, 4294901760
          %v1028 = vsub.f32 %v710, %v1027
          %1029 = vmatmul.f32.gmra.mxu0 %v1028
          %v1030 = vpop.f32.mrf.mxu0
          %v1031 = vadd.f32 %v939, %v1030
          %v1032 = vand.u32 %v713, 4294901760
          %v1033 = vsub.f32 %v713, %v1032
          %1034 = vmatmul.f32.gmra.mxu0 %v1033
          %v1035 = vpop.f32.mrf.mxu0
          %v1036 = vadd.f32 %v943, %v1035
          %v1037 = vand.u32 %v716, 4294901760
          %v1038 = vsub.f32 %v716, %v1037
          %1039 = vmatmul.f32.gmra.mxu0 %v1038
          %v1040 = vpop.f32.mrf.mxu0
          %v1041 = vadd.f32 %v947, %v1040
          %v1042 = vand.u32 %v719, 4294901760
          %v1043 = vsub.f32 %v719, %v1042
          %1044 = vmatmul.f32.gmra.mxu0 %v1043
          %v1045 = vpop.f32.mrf.mxu0
          %v1046 = vadd.f32 %v951, %v1045
          %v1047 = vand.u32 %v722, 4294901760
          %v1048 = vsub.f32 %v722, %v1047
          %1049 = vmatmul.f32.gmra.mxu0 %v1048
          %v1050 = vpop.f32.mrf.mxu0
          %v1051 = vadd.f32 %v955, %v1050
          %v1052 = vand.u32 %v725, 4294901760
          %v1053 = vsub.f32 %v725, %v1052
          %1054 = vmatmul.f32.gmra.mxu0 %v1053
          %v1055 = vpop.f32.mrf.mxu0
          %v1056 = vadd.f32 %v959, %v1055
          %v1057 = vand.u32 %v728, 4294901760
          %v1058 = vsub.f32 %v728, %v1057
          %1059 = vmatmul.f32.gmra.mxu0 %v1058
          %v1060 = vpop.f32.mrf.mxu0
          %v1061 = vadd.f32 %v963, %v1060
          %v1062 = vand.u32 %v731, 4294901760
          %v1063 = vsub.f32 %v731, %v1062
          %1064 = vmatmul.f32.gmra.mxu0 %v1063
          %v1065 = vpop.f32.mrf.mxu0
          %v1066 = vadd.f32 %v967, %v1065
          %1067 = vdwg.mxu0
          %1068 = vmatpush.msra.mxu0 0.0
          %1069 = vmatpush.msra.mxu0 0.0
          %1070 = vmatpush.msra.mxu0 0.0
          %1071 = vmatpush.msra.mxu0 0.0
          %1072 = vmatpush.msra.mxu0 0.0
          %1073 = vmatpush.msra.mxu0 0.0
          %1074 = vmatpush.msra.mxu0 0.0
          %1075 = vmatpush.msra.mxu0 0.0
          %1076 = vmatpush.msra.mxu0 0.0
          %1077 = vmatpush.msra.mxu0 0.0
          %1078 = vmatpush.msra.mxu0 0.0
          %1079 = vmatpush.msra.mxu0 0.0
          %1080 = vmatpush.msra.mxu0 0.0
          %1081 = vmatpush.msra.mxu0 0.0
          %1082 = vmatpush.msra.mxu0 0.0
          %v1083 = vand.u32 %v735, 4294901760
          %1084 = vmatpush.msra.mxu0 %v1083
          %v1085 = vand.u32 %v686, 4294901760
          %v1086 = vsub.f32 %v686, %v1085
          %v1087 = vand.u32 %v1086, 4294901760
          %1088 = vmatmul.f32.gmra.mxu0 %v1087
          %v1089 = vpop.f32.mrf.mxu0
          %v1090 = vadd.f32 %v991, %v1089
          %v1091 = vand.u32 %v689, 4294901760
          %v1092 = vsub.f32 %v689, %v1091
          %v1093 = vand.u32 %v1092, 4294901760
          %1094 = vmatmul.f32.gmra.mxu0 %v1093
          %v1095 = vpop.f32.mrf.mxu0
          %v1096 = vadd.f32 %v996, %v1095
          %v1097 = vand.u32 %v692, 4294901760
          %v1098 = vsub.f32 %v692, %v1097
          %v1099 = vand.u32 %v1098, 4294901760
          %1100 = vmatmul.f32.gmra.mxu0 %v1099
          %v1101 = vpop.f32.mrf.mxu0
          %v1102 = vadd.f32 %v1001, %v1101
          %v1103 = vand.u32 %v695, 4294901760
          %v1104 = vsub.f32 %v695, %v1103
          %v1105 = vand.u32 %v1104, 4294901760
          %1106 = vmatmul.f32.gmra.mxu0 %v1105
          %v1107 = vpop.f32.mrf.mxu0
          %v1108 = vadd.f32 %v1006, %v1107
          %v1109 = vand.u32 %v698, 4294901760
          %v1110 = vsub.f32 %v698, %v1109
          %v1111 = vand.u32 %v1110, 4294901760
          %1112 = vmatmul.f32.gmra.mxu0 %v1111
          %v1113 = vpop.f32.mrf.mxu0
          %v1114 = vadd.f32 %v1011, %v1113
          %v1115 = vand.u32 %v701, 4294901760
          %v1116 = vsub.f32 %v701, %v1115
          %v1117 = vand.u32 %v1116, 4294901760
          %1118 = vmatmul.f32.gmra.mxu0 %v1117
          %v1119 = vpop.f32.mrf.mxu0
          %v1120 = vadd.f32 %v1016, %v1119
          %v1121 = vand.u32 %v704, 4294901760
          %v1122 = vsub.f32 %v704, %v1121
          %v1123 = vand.u32 %v1122, 4294901760
          %1124 = vmatmul.f32.gmra.mxu0 %v1123
          %v1125 = vpop.f32.mrf.mxu0
          %v1126 = vadd.f32 %v1021, %v1125
          %v1127 = vand.u32 %v707, 4294901760
          %v1128 = vsub.f32 %v707, %v1127
          %v1129 = vand.u32 %v1128, 4294901760
          %1130 = vmatmul.f32.gmra.mxu0 %v1129
          %v1131 = vpop.f32.mrf.mxu0
          %v1132 = vadd.f32 %v1026, %v1131
          %v1133 = vand.u32 %v710, 4294901760
          %v1134 = vsub.f32 %v710, %v1133
          %v1135 = vand.u32 %v1134, 4294901760
          %1136 = vmatmul.f32.gmra.mxu0 %v1135
          %v1137 = vpop.f32.mrf.mxu0
          %v1138 = vadd.f32 %v1031, %v1137
          %v1139 = vand.u32 %v713, 4294901760
          %v1140 = vsub.f32 %v713, %v1139
          %v1141 = vand.u32 %v1140, 4294901760
          %1142 = vmatmul.f32.gmra.mxu0 %v1141
          %v1143 = vpop.f32.mrf.mxu0
          %v1144 = vadd.f32 %v1036, %v1143
          %v1145 = vand.u32 %v716, 4294901760
          %v1146 = vsub.f32 %v716, %v1145
          %v1147 = vand.u32 %v1146, 4294901760
          %1148 = vmatmul.f32.gmra.mxu0 %v1147
          %v1149 = vpop.f32.mrf.mxu0
          %v1150 = vadd.f32 %v1041, %v1149
          %v1151 = vand.u32 %v719, 4294901760
          %v1152 = vsub.f32 %v719, %v1151
          %v1153 = vand.u32 %v1152, 4294901760
          %1154 = vmatmul.f32.gmra.mxu0 %v1153
          %v1155 = vpop.f32.mrf.mxu0
          %v1156 = vadd.f32 %v1046, %v1155
          %v1157 = vand.u32 %v722, 4294901760
          %v1158 = vsub.f32 %v722, %v1157
          %v1159 = vand.u32 %v1158, 4294901760
          %1160 = vmatmul.f32.gmra.mxu0 %v1159
          %v1161 = vpop.f32.mrf.mxu0
          %v1162 = vadd.f32 %v1051, %v1161
          %v1163 = vand.u32 %v725, 4294901760
          %v1164 = vsub.f32 %v725, %v1163
          %v1165 = vand.u32 %v1164, 4294901760
          %1166 = vmatmul.f32.gmra.mxu0 %v1165
          %v1167 = vpop.f32.mrf.mxu0
          %v1168 = vadd.f32 %v1056, %v1167
          %v1169 = vand.u32 %v728, 4294901760
          %v1170 = vsub.f32 %v728, %v1169
          %v1171 = vand.u32 %v1170, 4294901760
          %1172 = vmatmul.f32.gmra.mxu0 %v1171
          %v1173 = vpop.f32.mrf.mxu0
          %v1174 = vadd.f32 %v1061, %v1173
          %v1175 = vand.u32 %v731, 4294901760
          %v1176 = vsub.f32 %v731, %v1175
          %v1177 = vand.u32 %v1176, 4294901760
          %1178 = vmatmul.f32.gmra.mxu0 %v1177
          %v1179 = vpop.f32.mrf.mxu0
          %v1180 = vadd.f32 %v1066, %v1179
          %1181 = vdwg.mxu0
          %1182 = vmatpush.msra.mxu0 0.0
          %1183 = vmatpush.msra.mxu0 0.0
          %1184 = vmatpush.msra.mxu0 0.0
          %1185 = vmatpush.msra.mxu0 0.0
          %1186 = vmatpush.msra.mxu0 0.0
          %1187 = vmatpush.msra.mxu0 0.0
          %1188 = vmatpush.msra.mxu0 0.0
          %1189 = vmatpush.msra.mxu0 0.0
          %1190 = vmatpush.msra.mxu0 0.0
          %1191 = vmatpush.msra.mxu0 0.0
          %1192 = vmatpush.msra.mxu0 0.0
          %1193 = vmatpush.msra.mxu0 0.0
          %1194 = vmatpush.msra.mxu0 0.0
          %1195 = vmatpush.msra.mxu0 0.0
          %1196 = vmatpush.msra.mxu0 0.0
          %v1197 = vand.u32 %v735, 4294901760
          %v1198 = vsub.f32 %v735, %v1197
          %v1199 = vand.u32 %v1198, 4294901760
          %1200 = vmatpush.msra.mxu0 %v1199
          %v1201 = vand.u32 %v686, 4294901760
          %1202 = vmatmul.f32.gmra.mxu0 %v1201
          %v1203 = vpop.f32.mrf.mxu0
          %v1204 = vadd.f32 %v1090, %v1203
          %v1205 = vand.u32 %v689, 4294901760
          %1206 = vmatmul.f32.gmra.mxu0 %v1205
          %v1207 = vpop.f32.mrf.mxu0
          %v1208 = vadd.f32 %v1096, %v1207
          %v1209 = vand.u32 %v692, 4294901760
          %1210 = vmatmul.f32.gmra.mxu0 %v1209
          %v1211 = vpop.f32.mrf.mxu0
          %v1212 = vadd.f32 %v1102, %v1211
          %v1213 = vand.u32 %v695, 4294901760
          %1214 = vmatmul.f32.gmra.mxu0 %v1213
          %v1215 = vpop.f32.mrf.mxu0
          %v1216 = vadd.f32 %v1108, %v1215
          %v1217 = vand.u32 %v698, 4294901760
          %1218 = vmatmul.f32.gmra.mxu0 %v1217
          %v1219 = vpop.f32.mrf.mxu0
          %v1220 = vadd.f32 %v1114, %v1219
          %v1221 = vand.u32 %v701, 4294901760
          %1222 = vmatmul.f32.gmra.mxu0 %v1221
          %v1223 = vpop.f32.mrf.mxu0
          %v1224 = vadd.f32 %v1120, %v1223
          %v1225 = vand.u32 %v704, 4294901760
          %1226 = vmatmul.f32.gmra.mxu0 %v1225
          %v1227 = vpop.f32.mrf.mxu0
          %v1228 = vadd.f32 %v1126, %v1227
          %v1229 = vand.u32 %v707, 4294901760
          %1230 = vmatmul.f32.gmra.mxu0 %v1229
          %v1231 = vpop.f32.mrf.mxu0
          %v1232 = vadd.f32 %v1132, %v1231
          %v1233 = vand.u32 %v710, 4294901760
          %1234 = vmatmul.f32.gmra.mxu0 %v1233
          %v1235 = vpop.f32.mrf.mxu0
          %v1236 = vadd.f32 %v1138, %v1235
          %v1237 = vand.u32 %v713, 4294901760
          %1238 = vmatmul.f32.gmra.mxu0 %v1237
          %v1239 = vpop.f32.mrf.mxu0
          %v1240 = vadd.f32 %v1144, %v1239
          %v1241 = vand.u32 %v716, 4294901760
          %1242 = vmatmul.f32.gmra.mxu0 %v1241
          %v1243 = vpop.f32.mrf.mxu0
          %v1244 = vadd.f32 %v1150, %v1243
          %v1245 = vand.u32 %v719, 4294901760
          %1246 = vmatmul.f32.gmra.mxu0 %v1245
          %v1247 = vpop.f32.mrf.mxu0
          %v1248 = vadd.f32 %v1156, %v1247
          %v1249 = vand.u32 %v722, 4294901760
          %1250 = vmatmul.f32.gmra.mxu0 %v1249
          %v1251 = vpop.f32.mrf.mxu0
          %v1252 = vadd.f32 %v1162, %v1251
          %v1253 = vand.u32 %v725, 4294901760
          %1254 = vmatmul.f32.gmra.mxu0 %v1253
          %v1255 = vpop.f32.mrf.mxu0
          %v1256 = vadd.f32 %v1168, %v1255
          %v1257 = vand.u32 %v728, 4294901760
          %1258 = vmatmul.f32.gmra.mxu0 %v1257
          %v1259 = vpop.f32.mrf.mxu0
          %v1260 = vadd.f32 %v1174, %v1259
          %v1261 = vand.u32 %v731, 4294901760
          %1262 = vmatmul.f32.gmra.mxu0 %v1261
          %v1263 = vpop.f32.mrf.mxu0
          %v1264 = vadd.f32 %v1180, %v1263
          %1265 = vdwg.mxu0
          %1266 = vmatpush.msra.mxu0 0.0
          %1267 = vmatpush.msra.mxu0 0.0
          %1268 = vmatpush.msra.mxu0 0.0
          %1269 = vmatpush.msra.mxu0 0.0
          %1270 = vmatpush.msra.mxu0 0.0
          %1271 = vmatpush.msra.mxu0 0.0
          %1272 = vmatpush.msra.mxu0 0.0
          %1273 = vmatpush.msra.mxu0 0.0
          %1274 = vmatpush.msra.mxu0 0.0
          %1275 = vmatpush.msra.mxu0 0.0
          %1276 = vmatpush.msra.mxu0 0.0
          %1277 = vmatpush.msra.mxu0 0.0
          %1278 = vmatpush.msra.mxu0 0.0
          %1279 = vmatpush.msra.mxu0 0.0
          %1280 = vmatpush.msra.mxu0 0.0
          %v1281 = vand.u32 %v735, 4294901760
          %1282 = vmatpush.msra.mxu0 %v1281
          %v1283 = vand.u32 %v686, 4294901760
          %1284 = vmatmul.f32.gmra.mxu0 %v1283
          %v1285 = vpop.f32.mrf.mxu0
          %v1286 = vadd.f32 %v1204, %v1285
          %v1287 = vand.u32 %v689, 4294901760
          %1288 = vmatmul.f32.gmra.mxu0 %v1287
          %v1289 = vpop.f32.mrf.mxu0
          %v1290 = vadd.f32 %v1208, %v1289
          %v1291 = vand.u32 %v692, 4294901760
          %1292 = vmatmul.f32.gmra.mxu0 %v1291
          %v1293 = vpop.f32.mrf.mxu0
          %v1294 = vadd.f32 %v1212, %v1293
          %v1295 = vand.u32 %v695, 4294901760
          %1296 = vmatmul.f32.gmra.mxu0 %v1295
          %v1297 = vpop.f32.mrf.mxu0
          %v1298 = vadd.f32 %v1216, %v1297
          %v1299 = vand.u32 %v698, 4294901760
          %1300 = vmatmul.f32.gmra.mxu0 %v1299
          %v1301 = vpop.f32.mrf.mxu0
          %v1302 = vadd.f32 %v1220, %v1301
          %v1303 = vand.u32 %v701, 4294901760
          %1304 = vmatmul.f32.gmra.mxu0 %v1303
          %v1305 = vpop.f32.mrf.mxu0
          %v1306 = vadd.f32 %v1224, %v1305
          %v1307 = vand.u32 %v704, 4294901760
          %1308 = vmatmul.f32.gmra.mxu0 %v1307
          %v1309 = vpop.f32.mrf.mxu0
          %v1310 = vadd.f32 %v1228, %v1309
          %v1311 = vand.u32 %v707, 4294901760
          %1312 = vmatmul.f32.gmra.mxu0 %v1311
          %v1313 = vpop.f32.mrf.mxu0
          %v1314 = vadd.f32 %v1232, %v1313
          %v1315 = vand.u32 %v710, 4294901760
          %1316 = vmatmul.f32.gmra.mxu0 %v1315
          %v1317 = vpop.f32.mrf.mxu0
          %v1318 = vadd.f32 %v1236, %v1317
          %v1319 = vand.u32 %v713, 4294901760
          %1320 = vmatmul.f32.gmra.mxu0 %v1319
          %v1321 = vpop.f32.mrf.mxu0
          %v1322 = vadd.f32 %v1240, %v1321
          %v1323 = vand.u32 %v716, 4294901760
          %1324 = vmatmul.f32.gmra.mxu0 %v1323
          %v1325 = vpop.f32.mrf.mxu0
          %v1326 = vadd.f32 %v1244, %v1325
          %v1327 = vand.u32 %v719, 4294901760
          %1328 = vmatmul.f32.gmra.mxu0 %v1327
          %v1329 = vpop.f32.mrf.mxu0
          %v1330 = vadd.f32 %v1248, %v1329
          %v1331 = vand.u32 %v722, 4294901760
          %1332 = vmatmul.f32.gmra.mxu0 %v1331
          %v1333 = vpop.f32.mrf.mxu0
          %v1334 = vadd.f32 %v1252, %v1333
          %v1335 = vand.u32 %v725, 4294901760
          %1336 = vmatmul.f32.gmra.mxu0 %v1335
          %v1337 = vpop.f32.mrf.mxu0
          %v1338 = vadd.f32 %v1256, %v1337
          %v1339 = vand.u32 %v728, 4294901760
          %1340 = vmatmul.f32.gmra.mxu0 %v1339
          %v1341 = vpop.f32.mrf.mxu0
          %v1342 = vadd.f32 %v1260, %v1341
          %v1343 = vand.u32 %v731, 4294901760
          %1344 = vmatmul.f32.gmra.mxu0 %v1343
          %v1345 = vpop.f32.mrf.mxu0
          %v1346 = vadd.f32 %v1264, %v1345
          %1347 = vdwg.mxu0
          %s1348 = smul.u32 %s28, 128
          %v1349 = vlaneseq
          %v1350 = vshrl.u32 %v1349, 7
          %v1351 = vadd.s32 %v1350, 8
          %v1352 = vadd.s32 %v1350, 16
          %v1353 = vadd.s32 %v1350, 24
          %v1354 = vadd.s32 %v1350, 32
          %v1355 = vadd.s32 %v1350, 40
          %v1356 = vadd.s32 %v1350, 48
          %v1357 = vadd.s32 %v1350, 56
          %v1358 = vadd.s32 %v1350, 64
          %v1359 = vadd.s32 %v1350, 72
          %v1360 = vadd.s32 %v1350, 80
          %v1361 = vadd.s32 %v1350, 88
          %v1362 = vadd.s32 %v1350, 96
          %v1363 = vadd.s32 %v1350, 104
          %v1364 = vadd.s32 %v1350, 112
          %v1365 = vadd.s32 %v1350, 120
          %v1366 = vstv %s1348
          %v1367 = vadd.s32 %v1366, %v1350
          %v1368 = vadd.s32 %v1366, %v1351
          %v1369 = vadd.s32 %v1366, %v1352
          %v1370 = vadd.s32 %v1366, %v1353
          %v1371 = vadd.s32 %v1366, %v1354
          %v1372 = vadd.s32 %v1366, %v1355
          %v1373 = vadd.s32 %v1366, %v1356
          %v1374 = vadd.s32 %v1366, %v1357
          %v1375 = vadd.s32 %v1366, %v1358
          %v1376 = vadd.s32 %v1366, %v1359
          %v1377 = vadd.s32 %v1366, %v1360
          %v1378 = vadd.s32 %v1366, %v1361
          %v1379 = vadd.s32 %v1366, %v1362
          %v1380 = vadd.s32 %v1366, %v1363
          %v1381 = vadd.s32 %v1366, %v1364
          %v1382 = vadd.s32 %v1366, %v1365
          %vm1383 = vcmp.lt.s32.totalorder %v1367, 64
          %vm1384 = vcmp.lt.s32.totalorder %v1368, 64
          %vm1385 = vcmp.lt.s32.totalorder %v1369, 64
          %vm1386 = vcmp.lt.s32.totalorder %v1370, 64
          %vm1387 = vcmp.lt.s32.totalorder %v1371, 64
          %vm1388 = vcmp.lt.s32.totalorder %v1372, 64
          %vm1389 = vcmp.lt.s32.totalorder %v1373, 64
          %vm1390 = vcmp.lt.s32.totalorder %v1374, 64
          %vm1391 = vcmp.lt.s32.totalorder %v1375, 64
          %vm1392 = vcmp.lt.s32.totalorder %v1376, 64
          %vm1393 = vcmp.lt.s32.totalorder %v1377, 64
          %vm1394 = vcmp.lt.s32.totalorder %v1378, 64
          %vm1395 = vcmp.lt.s32.totalorder %v1379, 64
          %vm1396 = vcmp.lt.s32.totalorder %v1380, 64
          %vm1397 = vcmp.lt.s32.totalorder %v1381, 64
          %vm1398 = vcmp.lt.s32.totalorder %v1382, 64
          %v1399 = vsel %vm1383, 1, 0
          %v1400 = vsel %vm1384, 1, 0
          %v1401 = vsel %vm1385, 1, 0
          %v1402 = vsel %vm1386, 1, 0
          %v1403 = vsel %vm1387, 1, 0
          %v1404 = vsel %vm1388, 1, 0
          %v1405 = vsel %vm1389, 1, 0
          %v1406 = vsel %vm1390, 1, 0
          %v1407 = vsel %vm1391, 1, 0
          %v1408 = vsel %vm1392, 1, 0
          %v1409 = vsel %vm1393, 1, 0
          %v1410 = vsel %vm1394, 1, 0
          %v1411 = vsel %vm1395, 1, 0
          %v1412 = vsel %vm1396, 1, 0
          %v1413 = vsel %vm1397, 1, 0
          %v1414 = vsel %vm1398, 1, 0
          %vm1415 = vcmp.eq.s32.totalorder %v1399, 1
          %vm1416 = vcmp.eq.s32.totalorder %v1400, 1
          %vm1417 = vcmp.eq.s32.totalorder %v1401, 1
          %vm1418 = vcmp.eq.s32.totalorder %v1402, 1
          %vm1419 = vcmp.eq.s32.totalorder %v1403, 1
          %vm1420 = vcmp.eq.s32.totalorder %v1404, 1
          %vm1421 = vcmp.eq.s32.totalorder %v1405, 1
          %vm1422 = vcmp.eq.s32.totalorder %v1406, 1
          %vm1423 = vcmp.eq.s32.totalorder %v1407, 1
          %vm1424 = vcmp.eq.s32.totalorder %v1408, 1
          %vm1425 = vcmp.eq.s32.totalorder %v1409, 1
          %vm1426 = vcmp.eq.s32.totalorder %v1410, 1
          %vm1427 = vcmp.eq.s32.totalorder %v1411, 1
          %vm1428 = vcmp.eq.s32.totalorder %v1412, 1
          %vm1429 = vcmp.eq.s32.totalorder %v1413, 1
          %vm1430 = vcmp.eq.s32.totalorder %v1414, 1
          %v1431 = vsel %vm1415, %v1286, -1e+30
          %v1432 = vsel %vm1416, %v1290, -1e+30
          %v1433 = vsel %vm1417, %v1294, -1e+30
          %v1434 = vsel %vm1418, %v1298, -1e+30
          %v1435 = vsel %vm1419, %v1302, -1e+30
          %v1436 = vsel %vm1420, %v1306, -1e+30
          %v1437 = vsel %vm1421, %v1310, -1e+30
          %v1438 = vsel %vm1422, %v1314, -1e+30
          %v1439 = vsel %vm1423, %v1318, -1e+30
          %v1440 = vsel %vm1424, %v1322, -1e+30
          %v1441 = vsel %vm1425, %v1326, -1e+30
          %v1442 = vsel %vm1426, %v1330, -1e+30
          %v1443 = vsel %vm1427, %v1334, -1e+30
          %v1444 = vsel %vm1428, %v1338, -1e+30
          %v1445 = vsel %vm1429, %v1342, -1e+30
          %v1446 = vsel %vm1430, %v1346, -1e+30
          %v1447 = vld [vmem:[#allocation3] sm:$0x1]
          %v1448 = vmax.f32 %v1431, %v1435
          %v1449 = vmax.f32 %v1432, %v1436
          %v1450 = vmax.f32 %v1433, %v1437
          %v1451 = vmax.f32 %v1434, %v1438
          %v1452 = vmax.f32 %v1448, %v1439
          %v1453 = vmax.f32 %v1449, %v1440
          %v1454 = vmax.f32 %v1450, %v1441
          %v1455 = vmax.f32 %v1451, %v1442
          %v1456 = vmax.f32 %v1452, %v1443
          %v1457 = vmax.f32 %v1453, %v1444
          %v1458 = vmax.f32 %v1454, %v1445
          %v1459 = vmax.f32 %v1455, %v1446
          %v1460 = vmax.f32 %v1456, %v1457
          %v1461 = vmax.f32 %v1458, %v1459
          %v1462 = vmax.f32 %v1460, %v1461
          %v1463 = vrot.slane %v1462, 4
          %v1464 = vmax.f32 %v1462, %v1463
          %v1465 = vrot.slane %v1464, 2
          %v1466 = vmax.f32 %v1464, %v1465
          %v1467 = vrot.slane %v1466, 1
          %v1468 = vmax.f32 %v1466, %v1467
          %v1469 = vmax.f32 %v1447, %v1468
          %v1470 = vsub.f32 %v1447, %v1469
          %v1471 = vmul.f32 %v1470, 1.442695
          %v1472 = vpow.pop %v1471
          %v1474 = vperm.slane %v1469, 0
          %v1476 = vsub.f32 %v1431, %v1474
          %v1477 = vsub.f32 %v1432, %v1474
          %v1478 = vsub.f32 %v1433, %v1474
          %v1479 = vsub.f32 %v1434, %v1474
          %v1480 = vsub.f32 %v1435, %v1474
          %v1481 = vsub.f32 %v1436, %v1474
          %v1482 = vsub.f32 %v1437, %v1474
          %v1483 = vsub.f32 %v1438, %v1474
          %v1484 = vsub.f32 %v1439, %v1474
          %v1485 = vsub.f32 %v1440, %v1474
          %v1486 = vsub.f32 %v1441, %v1474
          %v1487 = vsub.f32 %v1442, %v1474
          %v1488 = vsub.f32 %v1443, %v1474
          %v1489 = vsub.f32 %v1444, %v1474
          %v1490 = vsub.f32 %v1445, %v1474
          %v1491 = vsub.f32 %v1446, %v1474
          %v1492 = vmul.f32 %v1476, 1.442695
          %v1493 = vpow.pop %v1492
          %v1494 = vmul.f32 %v1477, 1.442695
          %v1495 = vpow.pop %v1494
          %v1496 = vmul.f32 %v1478, 1.442695
          %v1497 = vpow.pop %v1496
          %v1498 = vmul.f32 %v1479, 1.442695
          %v1499 = vpow.pop %v1498
          %v1500 = vmul.f32 %v1480, 1.442695
          %v1501 = vpow.pop %v1500
          %v1502 = vmul.f32 %v1481, 1.442695
          %v1503 = vpow.pop %v1502
          %v1504 = vmul.f32 %v1482, 1.442695
          %v1505 = vpow.pop %v1504
          %v1506 = vmul.f32 %v1483, 1.442695
          %v1507 = vpow.pop %v1506
          %v1508 = vmul.f32 %v1484, 1.442695
          %v1509 = vpow.pop %v1508
          %v1510 = vmul.f32 %v1485, 1.442695
          %v1511 = vpow.pop %v1510
          %v1512 = vmul.f32 %v1486, 1.442695
          %v1513 = vpow.pop %v1512
          %v1514 = vmul.f32 %v1487, 1.442695
          %v1515 = vpow.pop %v1514
          %v1516 = vmul.f32 %v1488, 1.442695
          %v1517 = vpow.pop %v1516
          %v1518 = vmul.f32 %v1489, 1.442695
          %v1519 = vpow.pop %v1518
          %v1520 = vmul.f32 %v1490, 1.442695
          %v1521 = vpow.pop %v1520
          %v1522 = vmul.f32 %v1491, 1.442695
          %v1523 = vpow.pop %v1522
          %v1524 = vld [vmem:[#allocation4] sm:$0x1]
          %v1525 = vmul.f32 %v1472, %v1524
          %v1526 = vadd.f32 %v1493, %v1495
          %v1527 = vadd.f32 %v1526, %v1497
          %v1528 = vadd.f32 %v1527, %v1499
          %v1529 = vadd.f32 %v1528, %v1501
          %v1530 = vadd.f32 %v1529, %v1503
          %v1531 = vadd.f32 %v1530, %v1505
          %v1532 = vadd.f32 %v1531, %v1507
          %v1533 = vadd.f32 %v1532, %v1509
          %v1534 = vadd.f32 %v1533, %v1511
          %v1535 = vadd.f32 %v1534, %v1513
          %v1536 = vadd.f32 %v1535, %v1515
          %v1537 = vadd.f32 %v1536, %v1517
          %v1538 = vadd.f32 %v1537, %v1519
          %v1539 = vadd.f32 %v1538, %v1521
          %v1540 = vadd.f32 %v1539, %v1523
          %v1541 = vrot.slane %v1540, 4
          %v1542 = vadd.f32 %v1540, %v1541
          %v1543 = vrot.slane %v1542, 2
          %v1544 = vadd.f32 %v1542, %v1543
          %v1545 = vrot.slane %v1544, 1
          %v1546 = vadd.f32 %v1544, %v1545
          %v1547 = vadd.f32 %v1525, %v1546
          %1548 = vst [vmem:[#allocation4] sm:$0x1] %v1547
          %v1549 = vld [vmem:[#allocation5] sm:$0xff]
          %v1550 = vld [vmem:[#allocation5 + $0x8] sm:$0xff]
          %v1552 = vperm.slane %v1472, 0
          %v1554 = vmul.f32 %v1552, %v1549
          %v1555 = vmul.f32 %v1552, %v1550
          %v1556 = vand.u32 %v1523, 4294901760
          %1557 = vmatpush.msra.mxu0 %v1556
          %v1558 = vand.u32 %v1521, 4294901760
          %1559 = vmatpush.msra.mxu0 %v1558
          %v1560 = vand.u32 %v1519, 4294901760
          %1561 = vmatpush.msra.mxu0 %v1560
          %v1562 = vand.u32 %v1517, 4294901760
          %1563 = vmatpush.msra.mxu0 %v1562
          %v1564 = vand.u32 %v1515, 4294901760
          %1565 = vmatpush.msra.mxu0 %v1564
          %v1566 = vand.u32 %v1513, 4294901760
          %1567 = vmatpush.msra.mxu0 %v1566
          %v1568 = vand.u32 %v1511, 4294901760
          %1569 = vmatpush.msra.mxu0 %v1568
          %v1570 = vand.u32 %v1509, 4294901760
          %1571 = vmatpush.msra.mxu0 %v1570
          %v1572 = vand.u32 %v1507, 4294901760
          %1573 = vmatpush.msra.mxu0 %v1572
          %v1574 = vand.u32 %v1505, 4294901760
          %1575 = vmatpush.msra.mxu0 %v1574
          %v1576 = vand.u32 %v1503, 4294901760
          %1577 = vmatpush.msra.mxu0 %v1576
          %v1578 = vand.u32 %v1501, 4294901760
          %1579 = vmatpush.msra.mxu0 %v1578
          %v1580 = vand.u32 %v1499, 4294901760
          %1581 = vmatpush.msra.mxu0 %v1580
          %v1582 = vand.u32 %v1497, 4294901760
          %1583 = vmatpush.msra.mxu0 %v1582
          %v1584 = vand.u32 %v1495, 4294901760
          %1585 = vmatpush.msra.mxu0 %v1584
          %v1586 = vand.u32 %v1493, 4294901760
          %1587 = vmatpush.msra.mxu0 %v1586
          %v1588 = vand.u32 %v645, 4294901760
          %v1589 = vsub.f32 %v645, %v1588
          %v1590 = vand.u32 %v1589, 4294901760
          %v1591 = vsub.f32 %v1589, %v1590
          %v1592 = vand.u32 %v1591, 4294901760
          %1593 = vmatmul.f32.gmra.mxu0 %v1592
          %v1594 = vpop.f32.mrf.mxu0
          %v1595 = vadd.f32 0.0, %v1594
          %v1596 = vand.u32 %v646, 4294901760
          %v1597 = vsub.f32 %v646, %v1596
          %v1598 = vand.u32 %v1597, 4294901760
          %v1599 = vsub.f32 %v1597, %v1598
          %v1600 = vand.u32 %v1599, 4294901760
          %1601 = vmatmul.f32.gmra.mxu0 %v1600
          %v1602 = vpop.f32.mrf.mxu0
          %v1603 = vadd.f32 0.0, %v1602
          %1604 = vdwg.mxu0
          %v1605 = vand.u32 %v1523, 4294901760
          %v1606 = vsub.f32 %v1523, %v1605
          %v1607 = vand.u32 %v1606, 4294901760
          %v1608 = vsub.f32 %v1606, %v1607
          %v1609 = vand.u32 %v1608, 4294901760
          %1610 = vmatpush.msra.mxu0 %v1609
          %v1611 = vand.u32 %v1521, 4294901760
          %v1612 = vsub.f32 %v1521, %v1611
          %v1613 = vand.u32 %v1612, 4294901760
          %v1614 = vsub.f32 %v1612, %v1613
          %v1615 = vand.u32 %v1614, 4294901760
          %1616 = vmatpush.msra.mxu0 %v1615
          %v1617 = vand.u32 %v1519, 4294901760
          %v1618 = vsub.f32 %v1519, %v1617
          %v1619 = vand.u32 %v1618, 4294901760
          %v1620 = vsub.f32 %v1618, %v1619
          %v1621 = vand.u32 %v1620, 4294901760
          %1622 = vmatpush.msra.mxu0 %v1621
          %v1623 = vand.u32 %v1517, 4294901760
          %v1624 = vsub.f32 %v1517, %v1623
          %v1625 = vand.u32 %v1624, 4294901760
          %v1626 = vsub.f32 %v1624, %v1625
          %v1627 = vand.u32 %v1626, 4294901760
          %1628 = vmatpush.msra.mxu0 %v1627
          %v1629 = vand.u32 %v1515, 4294901760
          %v1630 = vsub.f32 %v1515, %v1629
          %v1631 = vand.u32 %v1630, 4294901760
          %v1632 = vsub.f32 %v1630, %v1631
          %v1633 = vand.u32 %v1632, 4294901760
          %1634 = vmatpush.msra.mxu0 %v1633
          %v1635 = vand.u32 %v1513, 4294901760
          %v1636 = vsub.f32 %v1513, %v1635
          %v1637 = vand.u32 %v1636, 4294901760
          %v1638 = vsub.f32 %v1636, %v1637
          %v1639 = vand.u32 %v1638, 4294901760
          %1640 = vmatpush.msra.mxu0 %v1639
          %v1641 = vand.u32 %v1511, 4294901760
          %v1642 = vsub.f32 %v1511, %v1641
          %v1643 = vand.u32 %v1642, 4294901760
          %v1644 = vsub.f32 %v1642, %v1643
          %v1645 = vand.u32 %v1644, 4294901760
          %1646 = vmatpush.msra.mxu0 %v1645
          %v1647 = vand.u32 %v1509, 4294901760
          %v1648 = vsub.f32 %v1509, %v1647
          %v1649 = vand.u32 %v1648, 4294901760
          %v1650 = vsub.f32 %v1648, %v1649
          %v1651 = vand.u32 %v1650, 4294901760
          %1652 = vmatpush.msra.mxu0 %v1651
          %v1653 = vand.u32 %v1507, 4294901760
          %v1654 = vsub.f32 %v1507, %v1653
          %v1655 = vand.u32 %v1654, 4294901760
          %v1656 = vsub.f32 %v1654, %v1655
          %v1657 = vand.u32 %v1656, 4294901760
          %1658 = vmatpush.msra.mxu0 %v1657
          %v1659 = vand.u32 %v1505, 4294901760
          %v1660 = vsub.f32 %v1505, %v1659
          %v1661 = vand.u32 %v1660, 4294901760
          %v1662 = vsub.f32 %v1660, %v1661
          %v1663 = vand.u32 %v1662, 4294901760
          %1664 = vmatpush.msra.mxu0 %v1663
          %v1665 = vand.u32 %v1503, 4294901760
          %v1666 = vsub.f32 %v1503, %v1665
          %v1667 = vand.u32 %v1666, 4294901760
          %v1668 = vsub.f32 %v1666, %v1667
          %v1669 = vand.u32 %v1668, 4294901760
          %1670 = vmatpush.msra.mxu0 %v1669
          %v1671 = vand.u32 %v1501, 4294901760
          %v1672 = vsub.f32 %v1501, %v1671
          %v1673 = vand.u32 %v1672, 4294901760
          %v1674 = vsub.f32 %v1672, %v1673
          %v1675 = vand.u32 %v1674, 4294901760
          %1676 = vmatpush.msra.mxu0 %v1675
          %v1677 = vand.u32 %v1499, 4294901760
          %v1678 = vsub.f32 %v1499, %v1677
          %v1679 = vand.u32 %v1678, 4294901760
          %v1680 = vsub.f32 %v1678, %v1679
          %v1681 = vand.u32 %v1680, 4294901760
          %1682 = vmatpush.msra.mxu0 %v1681
          %v1683 = vand.u32 %v1497, 4294901760
          %v1684 = vsub.f32 %v1497, %v1683
          %v1685 = vand.u32 %v1684, 4294901760
          %v1686 = vsub.f32 %v1684, %v1685
          %v1687 = vand.u32 %v1686, 4294901760
          %1688 = vmatpush.msra.mxu0 %v1687
          %v1689 = vand.u32 %v1495, 4294901760
          %v1690 = vsub.f32 %v1495, %v1689
          %v1691 = vand.u32 %v1690, 4294901760
          %v1692 = vsub.f32 %v1690, %v1691
          %v1693 = vand.u32 %v1692, 4294901760
          %1694 = vmatpush.msra.mxu0 %v1693
          %v1695 = vand.u32 %v1493, 4294901760
          %v1696 = vsub.f32 %v1493, %v1695
          %v1697 = vand.u32 %v1696, 4294901760
          %v1698 = vsub.f32 %v1696, %v1697
          %v1699 = vand.u32 %v1698, 4294901760
          %1700 = vmatpush.msra.mxu0 %v1699
          %v1701 = vand.u32 %v645, 4294901760
          %1702 = vmatmul.f32.gmra.mxu0 %v1701
          %v1703 = vpop.f32.mrf.mxu0
          %v1704 = vadd.f32 %v1595, %v1703
          %v1705 = vand.u32 %v646, 4294901760
          %1706 = vmatmul.f32.gmra.mxu0 %v1705
          %v1707 = vpop.f32.mrf.mxu0
          %v1708 = vadd.f32 %v1603, %v1707
          %1709 = vdwg.mxu0
          %v1710 = vand.u32 %v1523, 4294901760
          %v1711 = vsub.f32 %v1523, %v1710
          %1712 = vmatpush.msra.mxu0 %v1711
          %v1713 = vand.u32 %v1521, 4294901760
          %v1714 = vsub.f32 %v1521, %v1713
          %1715 = vmatpush.msra.mxu0 %v1714
          %v1716 = vand.u32 %v1519, 4294901760
          %v1717 = vsub.f32 %v1519, %v1716
          %1718 = vmatpush.msra.mxu0 %v1717
          %v1719 = vand.u32 %v1517, 4294901760
          %v1720 = vsub.f32 %v1517, %v1719
          %1721 = vmatpush.msra.mxu0 %v1720
          %v1722 = vand.u32 %v1515, 4294901760
          %v1723 = vsub.f32 %v1515, %v1722
          %1724 = vmatpush.msra.mxu0 %v1723
          %v1725 = vand.u32 %v1513, 4294901760
          %v1726 = vsub.f32 %v1513, %v1725
          %1727 = vmatpush.msra.mxu0 %v1726
          %v1728 = vand.u32 %v1511, 4294901760
          %v1729 = vsub.f32 %v1511, %v1728
          %1730 = vmatpush.msra.mxu0 %v1729
          %v1731 = vand.u32 %v1509, 4294901760
          %v1732 = vsub.f32 %v1509, %v1731
          %1733 = vmatpush.msra.mxu0 %v1732
          %v1734 = vand.u32 %v1507, 4294901760
          %v1735 = vsub.f32 %v1507, %v1734
          %1736 = vmatpush.msra.mxu0 %v1735
          %v1737 = vand.u32 %v1505, 4294901760
          %v1738 = vsub.f32 %v1505, %v1737
          %1739 = vmatpush.msra.mxu0 %v1738
          %v1740 = vand.u32 %v1503, 4294901760
          %v1741 = vsub.f32 %v1503, %v1740
          %1742 = vmatpush.msra.mxu0 %v1741
          %v1743 = vand.u32 %v1501, 4294901760
          %v1744 = vsub.f32 %v1501, %v1743
          %1745 = vmatpush.msra.mxu0 %v1744
          %v1746 = vand.u32 %v1499, 4294901760
          %v1747 = vsub.f32 %v1499, %v1746
          %1748 = vmatpush.msra.mxu0 %v1747
          %v1749 = vand.u32 %v1497, 4294901760
          %v1750 = vsub.f32 %v1497, %v1749
          %1751 = vmatpush.msra.mxu0 %v1750
          %v1752 = vand.u32 %v1495, 4294901760
          %v1753 = vsub.f32 %v1495, %v1752
          %1754 = vmatpush.msra.mxu0 %v1753
          %v1755 = vand.u32 %v1493, 4294901760
          %v1756 = vsub.f32 %v1493, %v1755
          %1757 = vmatpush.msra.mxu0 %v1756
          %v1758 = vand.u32 %v645, 4294901760
          %v1759 = vsub.f32 %v645, %v1758
          %1760 = vmatmul.f32.gmra.mxu0 %v1759
          %v1761 = vpop.f32.mrf.mxu0
          %v1762 = vadd.f32 %v1704, %v1761
          %v1763 = vand.u32 %v646, 4294901760
          %v1764 = vsub.f32 %v646, %v1763
          %1765 = vmatmul.f32.gmra.mxu0 %v1764
          %v1766 = vpop.f32.mrf.mxu0
          %v1767 = vadd.f32 %v1708, %v1766
          %1768 = vdwg.mxu0
          %v1769 = vand.u32 %v1523, 4294901760
          %1770 = vmatpush.msra.mxu0 %v1769
          %v1771 = vand.u32 %v1521, 4294901760
          %1772 = vmatpush.msra.mxu0 %v1771
          %v1773 = vand.u32 %v1519, 4294901760
          %1774 = vmatpush.msra.mxu0 %v1773
          %v1775 = vand.u32 %v1517, 4294901760
          %1776 = vmatpush.msra.mxu0 %v1775
          %v1777 = vand.u32 %v1515, 4294901760
          %1778 = vmatpush.msra.mxu0 %v1777
          %v1779 = vand.u32 %v1513, 4294901760
          %1780 = vmatpush.msra.mxu0 %v1779
          %v1781 = vand.u32 %v1511, 4294901760
          %1782 = vmatpush.msra.mxu0 %v1781
          %v1783 = vand.u32 %v1509, 4294901760
          %1784 = vmatpush.msra.mxu0 %v1783
          %v1785 = vand.u32 %v1507, 4294901760
          %1786 = vmatpush.msra.mxu0 %v1785
          %v1787 = vand.u32 %v1505, 4294901760
          %1788 = vmatpush.msra.mxu0 %v1787
          %v1789 = vand.u32 %v1503, 4294901760
          %1790 = vmatpush.msra.mxu0 %v1789
          %v1791 = vand.u32 %v1501, 4294901760
          %1792 = vmatpush.msra.mxu0 %v1791
          %v1793 = vand.u32 %v1499, 4294901760
          %1794 = vmatpush.msra.mxu0 %v1793
          %v1795 = vand.u32 %v1497, 4294901760
          %1796 = vmatpush.msra.mxu0 %v1795
          %v1797 = vand.u32 %v1495, 4294901760
          %1798 = vmatpush.msra.mxu0 %v1797
          %v1799 = vand.u32 %v1493, 4294901760
          %1800 = vmatpush.msra.mxu0 %v1799
          %v1801 = vand.u32 %v645, 4294901760
          %v1802 = vsub.f32 %v645, %v1801
          %v1803 = vand.u32 %v1802, 4294901760
          %1804 = vmatmul.f32.gmra.mxu0 %v1803
          %v1805 = vpop.f32.mrf.mxu0
          %v1806 = vadd.f32 %v1762, %v1805
          %v1807 = vand.u32 %v646, 4294901760
          %v1808 = vsub.f32 %v646, %v1807
          %v1809 = vand.u32 %v1808, 4294901760
          %1810 = vmatmul.f32.gmra.mxu0 %v1809
          %v1811 = vpop.f32.mrf.mxu0
          %v1812 = vadd.f32 %v1767, %v1811
          %1813 = vdwg.mxu0
          %v1814 = vand.u32 %v1523, 4294901760
          %v1815 = vsub.f32 %v1523, %v1814
          %v1816 = vand.u32 %v1815, 4294901760
          %1817 = vmatpush.msra.mxu0 %v1816
          %v1818 = vand.u32 %v1521, 4294901760
          %v1819 = vsub.f32 %v1521, %v1818
          %v1820 = vand.u32 %v1819, 4294901760
          %1821 = vmatpush.msra.mxu0 %v1820
          %v1822 = vand.u32 %v1519, 4294901760
          %v1823 = vsub.f32 %v1519, %v1822
          %v1824 = vand.u32 %v1823, 4294901760
          %1825 = vmatpush.msra.mxu0 %v1824
          %v1826 = vand.u32 %v1517, 4294901760
          %v1827 = vsub.f32 %v1517, %v1826
          %v1828 = vand.u32 %v1827, 4294901760
          %1829 = vmatpush.msra.mxu0 %v1828
          %v1830 = vand.u32 %v1515, 4294901760
          %v1831 = vsub.f32 %v1515, %v1830
          %v1832 = vand.u32 %v1831, 4294901760
          %1833 = vmatpush.msra.mxu0 %v1832
          %v1834 = vand.u32 %v1513, 4294901760
          %v1835 = vsub.f32 %v1513, %v1834
          %v1836 = vand.u32 %v1835, 4294901760
          %1837 = vmatpush.msra.mxu0 %v1836
          %v1838 = vand.u32 %v1511, 4294901760
          %v1839 = vsub.f32 %v1511, %v1838
          %v1840 = vand.u32 %v1839, 4294901760
          %1841 = vmatpush.msra.mxu0 %v1840
          %v1842 = vand.u32 %v1509, 4294901760
          %v1843 = vsub.f32 %v1509, %v1842
          %v1844 = vand.u32 %v1843, 4294901760
          %1845 = vmatpush.msra.mxu0 %v1844
          %v1846 = vand.u32 %v1507, 4294901760
          %v1847 = vsub.f32 %v1507, %v1846
          %v1848 = vand.u32 %v1847, 4294901760
          %1849 = vmatpush.msra.mxu0 %v1848
          %v1850 = vand.u32 %v1505, 4294901760
          %v1851 = vsub.f32 %v1505, %v1850
          %v1852 = vand.u32 %v1851, 4294901760
          %1853 = vmatpush.msra.mxu0 %v1852
          %v1854 = vand.u32 %v1503, 4294901760
          %v1855 = vsub.f32 %v1503, %v1854
          %v1856 = vand.u32 %v1855, 4294901760
          %1857 = vmatpush.msra.mxu0 %v1856
          %v1858 = vand.u32 %v1501, 4294901760
          %v1859 = vsub.f32 %v1501, %v1858
          %v1860 = vand.u32 %v1859, 4294901760
          %1861 = vmatpush.msra.mxu0 %v1860
          %v1862 = vand.u32 %v1499, 4294901760
          %v1863 = vsub.f32 %v1499, %v1862
          %v1864 = vand.u32 %v1863, 4294901760
          %1865 = vmatpush.msra.mxu0 %v1864
          %v1866 = vand.u32 %v1497, 4294901760
          %v1867 = vsub.f32 %v1497, %v1866
          %v1868 = vand.u32 %v1867, 4294901760
          %1869 = vmatpush.msra.mxu0 %v1868
          %v1870 = vand.u32 %v1495, 4294901760
          %v1871 = vsub.f32 %v1495, %v1870
          %v1872 = vand.u32 %v1871, 4294901760
          %1873 = vmatpush.msra.mxu0 %v1872
          %v1874 = vand.u32 %v1493, 4294901760
          %v1875 = vsub.f32 %v1493, %v1874
          %v1876 = vand.u32 %v1875, 4294901760
          %1877 = vmatpush.msra.mxu0 %v1876
          %v1878 = vand.u32 %v645, 4294901760
          %1879 = vmatmul.f32.gmra.mxu0 %v1878
          %v1880 = vpop.f32.mrf.mxu0
          %v1881 = vadd.f32 %v1806, %v1880
          %v1882 = vand.u32 %v646, 4294901760
          %1883 = vmatmul.f32.gmra.mxu0 %v1882
          %v1884 = vpop.f32.mrf.mxu0
          %v1885 = vadd.f32 %v1812, %v1884
          %1886 = vdwg.mxu0
          %v1887 = vand.u32 %v1523, 4294901760
          %1888 = vmatpush.msra.mxu0 %v1887
          %v1889 = vand.u32 %v1521, 4294901760
          %1890 = vmatpush.msra.mxu0 %v1889
          %v1891 = vand.u32 %v1519, 4294901760
          %1892 = vmatpush.msra.mxu0 %v1891
          %v1893 = vand.u32 %v1517, 4294901760
          %1894 = vmatpush.msra.mxu0 %v1893
          %v1895 = vand.u32 %v1515, 4294901760
          %1896 = vmatpush.msra.mxu0 %v1895
          %v1897 = vand.u32 %v1513, 4294901760
          %1898 = vmatpush.msra.mxu0 %v1897
          %v1899 = vand.u32 %v1511, 4294901760
          %1900 = vmatpush.msra.mxu0 %v1899
          %v1901 = vand.u32 %v1509, 4294901760
          %1902 = vmatpush.msra.mxu0 %v1901
          %v1903 = vand.u32 %v1507, 4294901760
          %1904 = vmatpush.msra.mxu0 %v1903
          %v1905 = vand.u32 %v1505, 4294901760
          %1906 = vmatpush.msra.mxu0 %v1905
          %v1907 = vand.u32 %v1503, 4294901760
          %1908 = vmatpush.msra.mxu0 %v1907
          %v1909 = vand.u32 %v1501, 4294901760
          %1910 = vmatpush.msra.mxu0 %v1909
          %v1911 = vand.u32 %v1499, 4294901760
          %1912 = vmatpush.msra.mxu0 %v1911
          %v1913 = vand.u32 %v1497, 4294901760
          %1914 = vmatpush.msra.mxu0 %v1913
          %v1915 = vand.u32 %v1495, 4294901760
          %1916 = vmatpush.msra.mxu0 %v1915
          %v1917 = vand.u32 %v1493, 4294901760
          %1918 = vmatpush.msra.mxu0 %v1917
          %v1919 = vand.u32 %v645, 4294901760
          %1920 = vmatmul.f32.gmra.mxu0 %v1919
          %v1921 = vpop.f32.mrf.mxu0
          %v1922 = vadd.f32 %v1881, %v1921
          %v1923 = vand.u32 %v646, 4294901760
          %1924 = vmatmul.f32.gmra.mxu0 %v1923
          %v1925 = vpop.f32.mrf.mxu0
          %v1926 = vadd.f32 %v1885, %v1925
          %1927 = vdwg.mxu0
          %v1928 = vadd.f32 %v1554, %v1922
          %v1929 = vadd.f32 %v1555, %v1926
          %1930 = vst [vmem:[#allocation5] sm:$0xff] %v1928
          %1931 = vst [vmem:[#allocation5 + $0x8] sm:$0xff] %v1929
          %1932 = vst [vmem:[#allocation3] sm:$0x1] %v1469
        $region68: #{dan_forward.3} parent=55 // pred_fallthru
          _
        %p1933 = scmp.lt.s32.totalorder %s28, 0
        // Predicated region
        $region69: #{dan_forward.3} parent=55 // pred_check
          %p1934 = pneg %p1933
        $region70: #{dan_forward.3} parent=55 // pred_check_branch
          %1936 = sbr.rel (%p1934) target = $region72
        $region71: #{dan_forward.3} parent=55 // pred_region
          %v1937 = vld [vmem:[#allocation2] sm:$0x3]
          %1938 = vxpose.xlu0.b32.start [1/16] %v647, 128
          %1939 = vxpose.xlu0.b32.cont [2/16] 0.0, 128
          %1940 = vxpose.xlu0.b32.cont [3/16] 0.0, 128
          %1941 = vxpose.xlu0.b32.cont [4/16] 0.0, 128
          %1942 = vxpose.xlu0.b32.cont [5/16] 0.0, 128
          %1943 = vxpose.xlu0.b32.cont [6/16] 0.0, 128
          %1944 = vxpose.xlu0.b32.cont [7/16] 0.0, 128
          %1945 = vxpose.xlu0.b32.cont [8/16] 0.0, 128
          %1946 = vxpose.xlu0.b32.cont [9/16] 0.0, 128
          %1947 = vxpose.xlu0.b32.cont [10/16] 0.0, 128
          %1948 = vxpose.xlu0.b32.cont [11/16] 0.0, 128
          %1949 = vxpose.xlu0.b32.cont [12/16] 0.0, 128
          %1950 = vxpose.xlu0.b32.cont [13/16] 0.0, 128
          %1951 = vxpose.xlu0.b32.cont [14/16] 0.0, 128
          %1952 = vxpose.xlu0.b32.cont [15/16] 0.0, 128
          %1953 = vxpose.xlu0.b32.end [16/16] 0.0, 128
          %v1954 = vpop.trf.xlu0
          %v1955 = vpop.trf.xlu0
          %v1956 = vpop.trf.xlu0
          %v1957 = vpop.trf.xlu0
          %v1958 = vpop.trf.xlu0
          %v1959 = vpop.trf.xlu0
          %v1960 = vpop.trf.xlu0
          %v1961 = vpop.trf.xlu0
          %v1962 = vpop.trf.xlu0
          %v1963 = vpop.trf.xlu0
          %v1964 = vpop.trf.xlu0
          %v1965 = vpop.trf.xlu0
          %v1966 = vpop.trf.xlu0
          %v1967 = vpop.trf.xlu0
          %v1968 = vpop.trf.xlu0
          %v1969 = vpop.trf.xlu0
          %vm1970 = vcmask 15360
          %v1972 = vsel %vm1970, %v1954, 0
          %v1975 = vsel %vm1970, %v1955, 0
          %v1978 = vsel %vm1970, %v1956, 0
          %v1981 = vsel %vm1970, %v1957, 0
          %v1984 = vsel %vm1970, %v1958, 0
          %v1987 = vsel %vm1970, %v1959, 0
          %v1990 = vsel %vm1970, %v1960, 0
          %v1993 = vsel %vm1970, %v1961, 0
          %v1996 = vsel %vm1970, %v1962, 0
          %v1999 = vsel %vm1970, %v1963, 0
          %v2002 = vsel %vm1970, %v1964, 0
          %v2005 = vsel %vm1970, %v1965, 0
          %v2008 = vsel %vm1970, %v1966, 0
          %v2011 = vsel %vm1970, %v1967, 0
          %v2014 = vsel %vm1970, %v1968, 0
          %v2017 = vsel %vm1970, %v1969, 0
          %vm2019 = vcmask 1041408
          %v2021 = vsel %vm2019, %v1937, 0
          %2023 = vmatpush.msra.mxu0 0.0
          %2024 = vmatpush.msra.mxu0 0.0
          %2025 = vmatpush.msra.mxu0 0.0
          %2026 = vmatpush.msra.mxu0 0.0
          %2027 = vmatpush.msra.mxu0 0.0
          %2028 = vmatpush.msra.mxu0 0.0
          %2029 = vmatpush.msra.mxu0 0.0
          %2030 = vmatpush.msra.mxu0 0.0
          %2031 = vmatpush.msra.mxu0 0.0
          %2032 = vmatpush.msra.mxu0 0.0
          %2033 = vmatpush.msra.mxu0 0.0
          %2034 = vmatpush.msra.mxu0 0.0
          %2035 = vmatpush.msra.mxu0 0.0
          %2036 = vmatpush.msra.mxu0 0.0
          %2037 = vmatpush.msra.mxu0 0.0
          %v2038 = vand.u32 %v2021, 4294901760
          %2039 = vmatpush.msra.mxu0 %v2038
          %v2040 = vand.u32 %v1972, 4294901760
          %v2041 = vsub.f32 %v1972, %v2040
          %v2042 = vand.u32 %v2041, 4294901760
          %v2043 = vsub.f32 %v2041, %v2042
          %v2044 = vand.u32 %v2043, 4294901760
          %2045 = vmatmul.f32.gmra.mxu0 %v2044
          %v2046 = vpop.f32.mrf.mxu0
          %v2047 = vadd.f32 0.0, %v2046
          %v2048 = vand.u32 %v1975, 4294901760
          %v2049 = vsub.f32 %v1975, %v2048
          %v2050 = vand.u32 %v2049, 4294901760
          %v2051 = vsub.f32 %v2049, %v2050
          %v2052 = vand.u32 %v2051, 4294901760
          %2053 = vmatmul.f32.gmra.mxu0 %v2052
          %v2054 = vpop.f32.mrf.mxu0
          %v2055 = vadd.f32 0.0, %v2054
          %v2056 = vand.u32 %v1978, 4294901760
          %v2057 = vsub.f32 %v1978, %v2056
          %v2058 = vand.u32 %v2057, 4294901760
          %v2059 = vsub.f32 %v2057, %v2058
          %v2060 = vand.u32 %v2059, 4294901760
          %2061 = vmatmul.f32.gmra.mxu0 %v2060
          %v2062 = vpop.f32.mrf.mxu0
          %v2063 = vadd.f32 0.0, %v2062
          %v2064 = vand.u32 %v1981, 4294901760
          %v2065 = vsub.f32 %v1981, %v2064
          %v2066 = vand.u32 %v2065, 4294901760
          %v2067 = vsub.f32 %v2065, %v2066
          %v2068 = vand.u32 %v2067, 4294901760
          %2069 = vmatmul.f32.gmra.mxu0 %v2068
          %v2070 = vpop.f32.mrf.mxu0
          %v2071 = vadd.f32 0.0, %v2070
          %v2072 = vand.u32 %v1984, 4294901760
          %v2073 = vsub.f32 %v1984, %v2072
          %v2074 = vand.u32 %v2073, 4294901760
          %v2075 = vsub.f32 %v2073, %v2074
          %v2076 = vand.u32 %v2075, 4294901760
          %2077 = vmatmul.f32.gmra.mxu0 %v2076
          %v2078 = vpop.f32.mrf.mxu0
          %v2079 = vadd.f32 0.0, %v2078
          %v2080 = vand.u32 %v1987, 4294901760
          %v2081 = vsub.f32 %v1987, %v2080
          %v2082 = vand.u32 %v2081, 4294901760
          %v2083 = vsub.f32 %v2081, %v2082
          %v2084 = vand.u32 %v2083, 4294901760
          %2085 = vmatmul.f32.gmra.mxu0 %v2084
          %v2086 = vpop.f32.mrf.mxu0
          %v2087 = vadd.f32 0.0, %v2086
          %v2088 = vand.u32 %v1990, 4294901760
          %v2089 = vsub.f32 %v1990, %v2088
          %v2090 = vand.u32 %v2089, 4294901760
          %v2091 = vsub.f32 %v2089, %v2090
          %v2092 = vand.u32 %v2091, 4294901760
          %2093 = vmatmul.f32.gmra.mxu0 %v2092
          %v2094 = vpop.f32.mrf.mxu0
          %v2095 = vadd.f32 0.0, %v2094
          %v2096 = vand.u32 %v1993, 4294901760
          %v2097 = vsub.f32 %v1993, %v2096
          %v2098 = vand.u32 %v2097, 4294901760
          %v2099 = vsub.f32 %v2097, %v2098
          %v2100 = vand.u32 %v2099, 4294901760
          %2101 = vmatmul.f32.gmra.mxu0 %v2100
          %v2102 = vpop.f32.mrf.mxu0
          %v2103 = vadd.f32 0.0, %v2102
          %v2104 = vand.u32 %v1996, 4294901760
          %v2105 = vsub.f32 %v1996, %v2104
          %v2106 = vand.u32 %v2105, 4294901760
          %v2107 = vsub.f32 %v2105, %v2106
          %v2108 = vand.u32 %v2107, 4294901760
          %2109 = vmatmul.f32.gmra.mxu0 %v2108
          %v2110 = vpop.f32.mrf.mxu0
          %v2111 = vadd.f32 0.0, %v2110
          %v2112 = vand.u32 %v1999, 4294901760
          %v2113 = vsub.f32 %v1999, %v2112
          %v2114 = vand.u32 %v2113, 4294901760
          %v2115 = vsub.f32 %v2113, %v2114
          %v2116 = vand.u32 %v2115, 4294901760
          %2117 = vmatmul.f32.gmra.mxu0 %v2116
          %v2118 = vpop.f32.mrf.mxu0
          %v2119 = vadd.f32 0.0, %v2118
          %v2120 = vand.u32 %v2002, 4294901760
          %v2121 = vsub.f32 %v2002, %v2120
          %v2122 = vand.u32 %v2121, 4294901760
          %v2123 = vsub.f32 %v2121, %v2122
          %v2124 = vand.u32 %v2123, 4294901760
          %2125 = vmatmul.f32.gmra.mxu0 %v2124
          %v2126 = vpop.f32.mrf.mxu0
          %v2127 = vadd.f32 0.0, %v2126
          %v2128 = vand.u32 %v2005, 4294901760
          %v2129 = vsub.f32 %v2005, %v2128
          %v2130 = vand.u32 %v2129, 4294901760
          %v2131 = vsub.f32 %v2129, %v2130
          %v2132 = vand.u32 %v2131, 4294901760
          %2133 = vmatmul.f32.gmra.mxu0 %v2132
          %v2134 = vpop.f32.mrf.mxu0
          %v2135 = vadd.f32 0.0, %v2134
          %v2136 = vand.u32 %v2008, 4294901760
          %v2137 = vsub.f32 %v2008, %v2136
          %v2138 = vand.u32 %v2137, 4294901760
          %v2139 = vsub.f32 %v2137, %v2138
          %v2140 = vand.u32 %v2139, 4294901760
          %2141 = vmatmul.f32.gmra.mxu0 %v2140
          %v2142 = vpop.f32.mrf.mxu0
          %v2143 = vadd.f32 0.0, %v2142
          %v2144 = vand.u32 %v2011, 4294901760
          %v2145 = vsub.f32 %v2011, %v2144
          %v2146 = vand.u32 %v2145, 4294901760
          %v2147 = vsub.f32 %v2145, %v2146
          %v2148 = vand.u32 %v2147, 4294901760
          %2149 = vmatmul.f32.gmra.mxu0 %v2148
          %v2150 = vpop.f32.mrf.mxu0
          %v2151 = vadd.f32 0.0, %v2150
          %v2152 = vand.u32 %v2014, 4294901760
          %v2153 = vsub.f32 %v2014, %v2152
          %v2154 = vand.u32 %v2153, 4294901760
          %v2155 = vsub.f32 %v2153, %v2154
          %v2156 = vand.u32 %v2155, 4294901760
          %2157 = vmatmul.f32.gmra.mxu0 %v2156
          %v2158 = vpop.f32.mrf.mxu0
          %v2159 = vadd.f32 0.0, %v2158
          %v2160 = vand.u32 %v2017, 4294901760
          %v2161 = vsub.f32 %v2017, %v2160
          %v2162 = vand.u32 %v2161, 4294901760
          %v2163 = vsub.f32 %v2161, %v2162
          %v2164 = vand.u32 %v2163, 4294901760
          %2165 = vmatmul.f32.gmra.mxu0 %v2164
          %v2166 = vpop.f32.mrf.mxu0
          %v2167 = vadd.f32 0.0, %v2166
          %2168 = vdwg.mxu0
          %2169 = vmatpush.msra.mxu0 0.0
          %2170 = vmatpush.msra.mxu0 0.0
          %2171 = vmatpush.msra.mxu0 0.0
          %2172 = vmatpush.msra.mxu0 0.0
          %2173 = vmatpush.msra.mxu0 0.0
          %2174 = vmatpush.msra.mxu0 0.0
          %2175 = vmatpush.msra.mxu0 0.0
          %2176 = vmatpush.msra.mxu0 0.0
          %2177 = vmatpush.msra.mxu0 0.0
          %2178 = vmatpush.msra.mxu0 0.0
          %2179 = vmatpush.msra.mxu0 0.0
          %2180 = vmatpush.msra.mxu0 0.0
          %2181 = vmatpush.msra.mxu0 0.0
          %2182 = vmatpush.msra.mxu0 0.0
          %2183 = vmatpush.msra.mxu0 0.0
          %v2184 = vand.u32 %v2021, 4294901760
          %v2185 = vsub.f32 %v2021, %v2184
          %v2186 = vand.u32 %v2185, 4294901760
          %v2187 = vsub.f32 %v2185, %v2186
          %v2188 = vand.u32 %v2187, 4294901760
          %2189 = vmatpush.msra.mxu0 %v2188
          %v2190 = vand.u32 %v1972, 4294901760
          %2191 = vmatmul.f32.gmra.mxu0 %v2190
          %v2192 = vpop.f32.mrf.mxu0
          %v2193 = vadd.f32 %v2047, %v2192
          %v2194 = vand.u32 %v1975, 4294901760
          %2195 = vmatmul.f32.gmra.mxu0 %v2194
          %v2196 = vpop.f32.mrf.mxu0
          %v2197 = vadd.f32 %v2055, %v2196
          %v2198 = vand.u32 %v1978, 4294901760
          %2199 = vmatmul.f32.gmra.mxu0 %v2198
          %v2200 = vpop.f32.mrf.mxu0
          %v2201 = vadd.f32 %v2063, %v2200
          %v2202 = vand.u32 %v1981, 4294901760
          %2203 = vmatmul.f32.gmra.mxu0 %v2202
          %v2204 = vpop.f32.mrf.mxu0
          %v2205 = vadd.f32 %v2071, %v2204
          %v2206 = vand.u32 %v1984, 4294901760
          %2207 = vmatmul.f32.gmra.mxu0 %v2206
          %v2208 = vpop.f32.mrf.mxu0
          %v2209 = vadd.f32 %v2079, %v2208
          %v2210 = vand.u32 %v1987, 4294901760
          %2211 = vmatmul.f32.gmra.mxu0 %v2210
          %v2212 = vpop.f32.mrf.mxu0
          %v2213 = vadd.f32 %v2087, %v2212
          %v2214 = vand.u32 %v1990, 4294901760
          %2215 = vmatmul.f32.gmra.mxu0 %v2214
          %v2216 = vpop.f32.mrf.mxu0
          %v2217 = vadd.f32 %v2095, %v2216
          %v2218 = vand.u32 %v1993, 4294901760
          %2219 = vmatmul.f32.gmra.mxu0 %v2218
          %v2220 = vpop.f32.mrf.mxu0
          %v2221 = vadd.f32 %v2103, %v2220
          %v2222 = vand.u32 %v1996, 4294901760
          %2223 = vmatmul.f32.gmra.mxu0 %v2222
          %v2224 = vpop.f32.mrf.mxu0
          %v2225 = vadd.f32 %v2111, %v2224
          %v2226 = vand.u32 %v1999, 4294901760
          %2227 = vmatmul.f32.gmra.mxu0 %v2226
          %v2228 = vpop.f32.mrf.mxu0
          %v2229 = vadd.f32 %v2119, %v2228
          %v2230 = vand.u32 %v2002, 4294901760
          %2231 = vmatmul.f32.gmra.mxu0 %v2230
          %v2232 = vpop.f32.mrf.mxu0
          %v2233 = vadd.f32 %v2127, %v2232
          %v2234 = vand.u32 %v2005, 4294901760
          %2235 = vmatmul.f32.gmra.mxu0 %v2234
          %v2236 = vpop.f32.mrf.mxu0
          %v2237 = vadd.f32 %v2135, %v2236
          %v2238 = vand.u32 %v2008, 4294901760
          %2239 = vmatmul.f32.gmra.mxu0 %v2238
          %v2240 = vpop.f32.mrf.mxu0
          %v2241 = vadd.f32 %v2143, %v2240
          %v2242 = vand.u32 %v2011, 4294901760
          %2243 = vmatmul.f32.gmra.mxu0 %v2242
          %v2244 = vpop.f32.mrf.mxu0
          %v2245 = vadd.f32 %v2151, %v2244
          %v2246 = vand.u32 %v2014, 4294901760
          %2247 = vmatmul.f32.gmra.mxu0 %v2246
          %v2248 = vpop.f32.mrf.mxu0
          %v2249 = vadd.f32 %v2159, %v2248
          %v2250 = vand.u32 %v2017, 4294901760
          %2251 = vmatmul.f32.gmra.mxu0 %v2250
          %v2252 = vpop.f32.mrf.mxu0
          %v2253 = vadd.f32 %v2167, %v2252
          %2254 = vdwg.mxu0
          %2255 = vmatpush.msra.mxu0 0.0
          %2256 = vmatpush.msra.mxu0 0.0
          %2257 = vmatpush.msra.mxu0 0.0
          %2258 = vmatpush.msra.mxu0 0.0
          %2259 = vmatpush.msra.mxu0 0.0
          %2260 = vmatpush.msra.mxu0 0.0
          %2261 = vmatpush.msra.mxu0 0.0
          %2262 = vmatpush.msra.mxu0 0.0
          %2263 = vmatpush.msra.mxu0 0.0
          %2264 = vmatpush.msra.mxu0 0.0
          %2265 = vmatpush.msra.mxu0 0.0
          %2266 = vmatpush.msra.mxu0 0.0
          %2267 = vmatpush.msra.mxu0 0.0
          %2268 = vmatpush.msra.mxu0 0.0
          %2269 = vmatpush.msra.mxu0 0.0
          %v2270 = vand.u32 %v2021, 4294901760
          %v2271 = vsub.f32 %v2021, %v2270
          %2272 = vmatpush.msra.mxu0 %v2271
          %v2273 = vand.u32 %v1972, 4294901760
          %v2274 = vsub.f32 %v1972, %v2273
          %2275 = vmatmul.f32.gmra.mxu0 %v2274
          %v2276 = vpop.f32.mrf.mxu0
          %v2277 = vadd.f32 %v2193, %v2276
          %v2278 = vand.u32 %v1975, 4294901760
          %v2279 = vsub.f32 %v1975, %v2278
          %2280 = vmatmul.f32.gmra.mxu0 %v2279
          %v2281 = vpop.f32.mrf.mxu0
          %v2282 = vadd.f32 %v2197, %v2281
          %v2283 = vand.u32 %v1978, 4294901760
          %v2284 = vsub.f32 %v1978, %v2283
          %2285 = vmatmul.f32.gmra.mxu0 %v2284
          %v2286 = vpop.f32.mrf.mxu0
          %v2287 = vadd.f32 %v2201, %v2286
          %v2288 = vand.u32 %v1981, 4294901760
          %v2289 = vsub.f32 %v1981, %v2288
          %2290 = vmatmul.f32.gmra.mxu0 %v2289
          %v2291 = vpop.f32.mrf.mxu0
          %v2292 = vadd.f32 %v2205, %v2291
          %v2293 = vand.u32 %v1984, 4294901760
          %v2294 = vsub.f32 %v1984, %v2293
          %2295 = vmatmul.f32.gmra.mxu0 %v2294
          %v2296 = vpop.f32.mrf.mxu0
          %v2297 = vadd.f32 %v2209, %v2296
          %v2298 = vand.u32 %v1987, 4294901760
          %v2299 = vsub.f32 %v1987, %v2298
          %2300 = vmatmul.f32.gmra.mxu0 %v2299
          %v2301 = vpop.f32.mrf.mxu0
          %v2302 = vadd.f32 %v2213, %v2301
          %v2303 = vand.u32 %v1990, 4294901760
          %v2304 = vsub.f32 %v1990, %v2303
          %2305 = vmatmul.f32.gmra.mxu0 %v2304
          %v2306 = vpop.f32.mrf.mxu0
          %v2307 = vadd.f32 %v2217, %v2306
          %v2308 = vand.u32 %v1993, 4294901760
          %v2309 = vsub.f32 %v1993, %v2308
          %2310 = vmatmul.f32.gmra.mxu0 %v2309
          %v2311 = vpop.f32.mrf.mxu0
          %v2312 = vadd.f32 %v2221, %v2311
          %v2313 = vand.u32 %v1996, 4294901760
          %v2314 = vsub.f32 %v1996, %v2313
          %2315 = vmatmul.f32.gmra.mxu0 %v2314
          %v2316 = vpop.f32.mrf.mxu0
          %v2317 = vadd.f32 %v2225, %v2316
          %v2318 = vand.u32 %v1999, 4294901760
          %v2319 = vsub.f32 %v1999, %v2318
          %2320 = vmatmul.f32.gmra.mxu0 %v2319
          %v2321 = vpop.f32.mrf.mxu0
          %v2322 = vadd.f32 %v2229, %v2321
          %v2323 = vand.u32 %v2002, 4294901760
          %v2324 = vsub.f32 %v2002, %v2323
          %2325 = vmatmul.f32.gmra.mxu0 %v2324
          %v2326 = vpop.f32.mrf.mxu0
          %v2327 = vadd.f32 %v2233, %v2326
          %v2328 = vand.u32 %v2005, 4294901760
          %v2329 = vsub.f32 %v2005, %v2328
          %2330 = vmatmul.f32.gmra.mxu0 %v2329
          %v2331 = vpop.f32.mrf.mxu0
          %v2332 = vadd.f32 %v2237, %v2331
          %v2333 = vand.u32 %v2008, 4294901760
          %v2334 = vsub.f32 %v2008, %v2333
          %2335 = vmatmul.f32.gmra.mxu0 %v2334
          %v2336 = vpop.f32.mrf.mxu0
          %v2337 = vadd.f32 %v2241, %v2336
          %v2338 = vand.u32 %v2011, 4294901760
          %v2339 = vsub.f32 %v2011, %v2338
          %2340 = vmatmul.f32.gmra.mxu0 %v2339
          %v2341 = vpop.f32.mrf.mxu0
          %v2342 = vadd.f32 %v2245, %v2341
          %v2343 = vand.u32 %v2014, 4294901760
          %v2344 = vsub.f32 %v2014, %v2343
          %2345 = vmatmul.f32.gmra.mxu0 %v2344
          %v2346 = vpop.f32.mrf.mxu0
          %v2347 = vadd.f32 %v2249, %v2346
          %v2348 = vand.u32 %v2017, 4294901760
          %v2349 = vsub.f32 %v2017, %v2348
          %2350 = vmatmul.f32.gmra.mxu0 %v2349
          %v2351 = vpop.f32.mrf.mxu0
          %v2352 = vadd.f32 %v2253, %v2351
          %2353 = vdwg.mxu0
          %2354 = vmatpush.msra.mxu0 0.0
          %2355 = vmatpush.msra.mxu0 0.0
          %2356 = vmatpush.msra.mxu0 0.0
          %2357 = vmatpush.msra.mxu0 0.0
          %2358 = vmatpush.msra.mxu0 0.0
          %2359 = vmatpush.msra.mxu0 0.0
          %2360 = vmatpush.msra.mxu0 0.0
          %2361 = vmatpush.msra.mxu0 0.0
          %2362 = vmatpush.msra.mxu0 0.0
          %2363 = vmatpush.msra.mxu0 0.0
          %2364 = vmatpush.msra.mxu0 0.0
          %2365 = vmatpush.msra.mxu0 0.0
          %2366 = vmatpush.msra.mxu0 0.0
          %2367 = vmatpush.msra.mxu0 0.0
          %2368 = vmatpush.msra.mxu0 0.0
          %v2369 = vand.u32 %v2021, 4294901760
          %2370 = vmatpush.msra.mxu0 %v2369
          %v2371 = vand.u32 %v1972, 4294901760
          %v2372 = vsub.f32 %v1972, %v2371
          %v2373 = vand.u32 %v2372, 4294901760
          %2374 = vmatmul.f32.gmra.mxu0 %v2373
          %v2375 = vpop.f32.mrf.mxu0
          %v2376 = vadd.f32 %v2277, %v2375
          %v2377 = vand.u32 %v1975, 4294901760
          %v2378 = vsub.f32 %v1975, %v2377
          %v2379 = vand.u32 %v2378, 4294901760
          %2380 = vmatmul.f32.gmra.mxu0 %v2379
          %v2381 = vpop.f32.mrf.mxu0
          %v2382 = vadd.f32 %v2282, %v2381
          %v2383 = vand.u32 %v1978, 4294901760
          %v2384 = vsub.f32 %v1978, %v2383
          %v2385 = vand.u32 %v2384, 4294901760
          %2386 = vmatmul.f32.gmra.mxu0 %v2385
          %v2387 = vpop.f32.mrf.mxu0
          %v2388 = vadd.f32 %v2287, %v2387
          %v2389 = vand.u32 %v1981, 4294901760
          %v2390 = vsub.f32 %v1981, %v2389
          %v2391 = vand.u32 %v2390, 4294901760
          %2392 = vmatmul.f32.gmra.mxu0 %v2391
          %v2393 = vpop.f32.mrf.mxu0
          %v2394 = vadd.f32 %v2292, %v2393
          %v2395 = vand.u32 %v1984, 4294901760
          %v2396 = vsub.f32 %v1984, %v2395
          %v2397 = vand.u32 %v2396, 4294901760
          %2398 = vmatmul.f32.gmra.mxu0 %v2397
          %v2399 = vpop.f32.mrf.mxu0
          %v2400 = vadd.f32 %v2297, %v2399
          %v2401 = vand.u32 %v1987, 4294901760
          %v2402 = vsub.f32 %v1987, %v2401
          %v2403 = vand.u32 %v2402, 4294901760
          %2404 = vmatmul.f32.gmra.mxu0 %v2403
          %v2405 = vpop.f32.mrf.mxu0
          %v2406 = vadd.f32 %v2302, %v2405
          %v2407 = vand.u32 %v1990, 4294901760
          %v2408 = vsub.f32 %v1990, %v2407
          %v2409 = vand.u32 %v2408, 4294901760
          %2410 = vmatmul.f32.gmra.mxu0 %v2409
          %v2411 = vpop.f32.mrf.mxu0
          %v2412 = vadd.f32 %v2307, %v2411
          %v2413 = vand.u32 %v1993, 4294901760
          %v2414 = vsub.f32 %v1993, %v2413
          %v2415 = vand.u32 %v2414, 4294901760
          %2416 = vmatmul.f32.gmra.mxu0 %v2415
          %v2417 = vpop.f32.mrf.mxu0
          %v2418 = vadd.f32 %v2312, %v2417
          %v2419 = vand.u32 %v1996, 4294901760
          %v2420 = vsub.f32 %v1996, %v2419
          %v2421 = vand.u32 %v2420, 4294901760
          %2422 = vmatmul.f32.gmra.mxu0 %v2421
          %v2423 = vpop.f32.mrf.mxu0
          %v2424 = vadd.f32 %v2317, %v2423
          %v2425 = vand.u32 %v1999, 4294901760
          %v2426 = vsub.f32 %v1999, %v2425
          %v2427 = vand.u32 %v2426, 4294901760
          %2428 = vmatmul.f32.gmra.mxu0 %v2427
          %v2429 = vpop.f32.mrf.mxu0
          %v2430 = vadd.f32 %v2322, %v2429
          %v2431 = vand.u32 %v2002, 4294901760
          %v2432 = vsub.f32 %v2002, %v2431
          %v2433 = vand.u32 %v2432, 4294901760
          %2434 = vmatmul.f32.gmra.mxu0 %v2433
          %v2435 = vpop.f32.mrf.mxu0
          %v2436 = vadd.f32 %v2327, %v2435
          %v2437 = vand.u32 %v2005, 4294901760
          %v2438 = vsub.f32 %v2005, %v2437
          %v2439 = vand.u32 %v2438, 4294901760
          %2440 = vmatmul.f32.gmra.mxu0 %v2439
          %v2441 = vpop.f32.mrf.mxu0
          %v2442 = vadd.f32 %v2332, %v2441
          %v2443 = vand.u32 %v2008, 4294901760
          %v2444 = vsub.f32 %v2008, %v2443
          %v2445 = vand.u32 %v2444, 4294901760
          %2446 = vmatmul.f32.gmra.mxu0 %v2445
          %v2447 = vpop.f32.mrf.mxu0
          %v2448 = vadd.f32 %v2337, %v2447
          %v2449 = vand.u32 %v2011, 4294901760
          %v2450 = vsub.f32 %v2011, %v2449
          %v2451 = vand.u32 %v2450, 4294901760
          %2452 = vmatmul.f32.gmra.mxu0 %v2451
          %v2453 = vpop.f32.mrf.mxu0
          %v2454 = vadd.f32 %v2342, %v2453
          %v2455 = vand.u32 %v2014, 4294901760
          %v2456 = vsub.f32 %v2014, %v2455
          %v2457 = vand.u32 %v2456, 4294901760
          %2458 = vmatmul.f32.gmra.mxu0 %v2457
          %v2459 = vpop.f32.mrf.mxu0
          %v2460 = vadd.f32 %v2347, %v2459
          %v2461 = vand.u32 %v2017, 4294901760
          %v2462 = vsub.f32 %v2017, %v2461
          %v2463 = vand.u32 %v2462, 4294901760
          %2464 = vmatmul.f32.gmra.mxu0 %v2463
          %v2465 = vpop.f32.mrf.mxu0
          %v2466 = vadd.f32 %v2352, %v2465
          %2467 = vdwg.mxu0
          %2468 = vmatpush.msra.mxu0 0.0
          %2469 = vmatpush.msra.mxu0 0.0
          %2470 = vmatpush.msra.mxu0 0.0
          %2471 = vmatpush.msra.mxu0 0.0
          %2472 = vmatpush.msra.mxu0 0.0
          %2473 = vmatpush.msra.mxu0 0.0
          %2474 = vmatpush.msra.mxu0 0.0
          %2475 = vmatpush.msra.mxu0 0.0
          %2476 = vmatpush.msra.mxu0 0.0
          %2477 = vmatpush.msra.mxu0 0.0
          %2478 = vmatpush.msra.mxu0 0.0
          %2479 = vmatpush.msra.mxu0 0.0
          %2480 = vmatpush.msra.mxu0 0.0
          %2481 = vmatpush.msra.mxu0 0.0
          %2482 = vmatpush.msra.mxu0 0.0
          %v2483 = vand.u32 %v2021, 4294901760
          %v2484 = vsub.f32 %v2021, %v2483
          %v2485 = vand.u32 %v2484, 4294901760
          %2486 = vmatpush.msra.mxu0 %v2485
          %v2487 = vand.u32 %v1972, 4294901760
          %2488 = vmatmul.f32.gmra.mxu0 %v2487
          %v2489 = vpop.f32.mrf.mxu0
          %v2490 = vadd.f32 %v2376, %v2489
          %v2491 = vand.u32 %v1975, 4294901760
          %2492 = vmatmul.f32.gmra.mxu0 %v2491
          %v2493 = vpop.f32.mrf.mxu0
          %v2494 = vadd.f32 %v2382, %v2493
          %v2495 = vand.u32 %v1978, 4294901760
          %2496 = vmatmul.f32.gmra.mxu0 %v2495
          %v2497 = vpop.f32.mrf.mxu0
          %v2498 = vadd.f32 %v2388, %v2497
          %v2499 = vand.u32 %v1981, 4294901760
          %2500 = vmatmul.f32.gmra.mxu0 %v2499
          %v2501 = vpop.f32.mrf.mxu0
          %v2502 = vadd.f32 %v2394, %v2501
          %v2503 = vand.u32 %v1984, 4294901760
          %2504 = vmatmul.f32.gmra.mxu0 %v2503
          %v2505 = vpop.f32.mrf.mxu0
          %v2506 = vadd.f32 %v2400, %v2505
          %v2507 = vand.u32 %v1987, 4294901760
          %2508 = vmatmul.f32.gmra.mxu0 %v2507
          %v2509 = vpop.f32.mrf.mxu0
          %v2510 = vadd.f32 %v2406, %v2509
          %v2511 = vand.u32 %v1990, 4294901760
          %2512 = vmatmul.f32.gmra.mxu0 %v2511
          %v2513 = vpop.f32.mrf.mxu0
          %v2514 = vadd.f32 %v2412, %v2513
          %v2515 = vand.u32 %v1993, 4294901760
          %2516 = vmatmul.f32.gmra.mxu0 %v2515
          %v2517 = vpop.f32.mrf.mxu0
          %v2518 = vadd.f32 %v2418, %v2517
          %v2519 = vand.u32 %v1996, 4294901760
          %2520 = vmatmul.f32.gmra.mxu0 %v2519
          %v2521 = vpop.f32.mrf.mxu0
          %v2522 = vadd.f32 %v2424, %v2521
          %v2523 = vand.u32 %v1999, 4294901760
          %2524 = vmatmul.f32.gmra.mxu0 %v2523
          %v2525 = vpop.f32.mrf.mxu0
          %v2526 = vadd.f32 %v2430, %v2525
          %v2527 = vand.u32 %v2002, 4294901760
          %2528 = vmatmul.f32.gmra.mxu0 %v2527
          %v2529 = vpop.f32.mrf.mxu0
          %v2530 = vadd.f32 %v2436, %v2529
          %v2531 = vand.u32 %v2005, 4294901760
          %2532 = vmatmul.f32.gmra.mxu0 %v2531
          %v2533 = vpop.f32.mrf.mxu0
          %v2534 = vadd.f32 %v2442, %v2533
          %v2535 = vand.u32 %v2008, 4294901760
          %2536 = vmatmul.f32.gmra.mxu0 %v2535
          %v2537 = vpop.f32.mrf.mxu0
          %v2538 = vadd.f32 %v2448, %v2537
          %v2539 = vand.u32 %v2011, 4294901760
          %2540 = vmatmul.f32.gmra.mxu0 %v2539
          %v2541 = vpop.f32.mrf.mxu0
          %v2542 = vadd.f32 %v2454, %v2541
          %v2543 = vand.u32 %v2014, 4294901760
          %2544 = vmatmul.f32.gmra.mxu0 %v2543
          %v2545 = vpop.f32.mrf.mxu0
          %v2546 = vadd.f32 %v2460, %v2545
          %v2547 = vand.u32 %v2017, 4294901760
          %2548 = vmatmul.f32.gmra.mxu0 %v2547
          %v2549 = vpop.f32.mrf.mxu0
          %v2550 = vadd.f32 %v2466, %v2549
          %2551 = vdwg.mxu0
          %2552 = vmatpush.msra.mxu0 0.0
          %2553 = vmatpush.msra.mxu0 0.0
          %2554 = vmatpush.msra.mxu0 0.0
          %2555 = vmatpush.msra.mxu0 0.0
          %2556 = vmatpush.msra.mxu0 0.0
          %2557 = vmatpush.msra.mxu0 0.0
          %2558 = vmatpush.msra.mxu0 0.0
          %2559 = vmatpush.msra.mxu0 0.0
          %2560 = vmatpush.msra.mxu0 0.0
          %2561 = vmatpush.msra.mxu0 0.0
          %2562 = vmatpush.msra.mxu0 0.0
          %2563 = vmatpush.msra.mxu0 0.0
          %2564 = vmatpush.msra.mxu0 0.0
          %2565 = vmatpush.msra.mxu0 0.0
          %2566 = vmatpush.msra.mxu0 0.0
          %v2567 = vand.u32 %v2021, 4294901760
          %2568 = vmatpush.msra.mxu0 %v2567
          %v2569 = vand.u32 %v1972, 4294901760
          %2570 = vmatmul.f32.gmra.mxu0 %v2569
          %v2571 = vpop.f32.mrf.mxu0
          %v2572 = vadd.f32 %v2490, %v2571
          %v2573 = vand.u32 %v1975, 4294901760
          %2574 = vmatmul.f32.gmra.mxu0 %v2573
          %v2575 = vpop.f32.mrf.mxu0
          %v2576 = vadd.f32 %v2494, %v2575
          %v2577 = vand.u32 %v1978, 4294901760
          %2578 = vmatmul.f32.gmra.mxu0 %v2577
          %v2579 = vpop.f32.mrf.mxu0
          %v2580 = vadd.f32 %v2498, %v2579
          %v2581 = vand.u32 %v1981, 4294901760
          %2582 = vmatmul.f32.gmra.mxu0 %v2581
          %v2583 = vpop.f32.mrf.mxu0
          %v2584 = vadd.f32 %v2502, %v2583
          %v2585 = vand.u32 %v1984, 4294901760
          %2586 = vmatmul.f32.gmra.mxu0 %v2585
          %v2587 = vpop.f32.mrf.mxu0
          %v2588 = vadd.f32 %v2506, %v2587
          %v2589 = vand.u32 %v1987, 4294901760
          %2590 = vmatmul.f32.gmra.mxu0 %v2589
          %v2591 = vpop.f32.mrf.mxu0
          %v2592 = vadd.f32 %v2510, %v2591
          %v2593 = vand.u32 %v1990, 4294901760
          %2594 = vmatmul.f32.gmra.mxu0 %v2593
          %v2595 = vpop.f32.mrf.mxu0
          %v2596 = vadd.f32 %v2514, %v2595
          %v2597 = vand.u32 %v1993, 4294901760
          %2598 = vmatmul.f32.gmra.mxu0 %v2597
          %v2599 = vpop.f32.mrf.mxu0
          %v2600 = vadd.f32 %v2518, %v2599
          %v2601 = vand.u32 %v1996, 4294901760
          %2602 = vmatmul.f32.gmra.mxu0 %v2601
          %v2603 = vpop.f32.mrf.mxu0
          %v2604 = vadd.f32 %v2522, %v2603
          %v2605 = vand.u32 %v1999, 4294901760
          %2606 = vmatmul.f32.gmra.mxu0 %v2605
          %v2607 = vpop.f32.mrf.mxu0
          %v2608 = vadd.f32 %v2526, %v2607
          %v2609 = vand.u32 %v2002, 4294901760
          %2610 = vmatmul.f32.gmra.mxu0 %v2609
          %v2611 = vpop.f32.mrf.mxu0
          %v2612 = vadd.f32 %v2530, %v2611
          %v2613 = vand.u32 %v2005, 4294901760
          %2614 = vmatmul.f32.gmra.mxu0 %v2613
          %v2615 = vpop.f32.mrf.mxu0
          %v2616 = vadd.f32 %v2534, %v2615
          %v2617 = vand.u32 %v2008, 4294901760
          %2618 = vmatmul.f32.gmra.mxu0 %v2617
          %v2619 = vpop.f32.mrf.mxu0
          %v2620 = vadd.f32 %v2538, %v2619
          %v2621 = vand.u32 %v2011, 4294901760
          %2622 = vmatmul.f32.gmra.mxu0 %v2621
          %v2623 = vpop.f32.mrf.mxu0
          %v2624 = vadd.f32 %v2542, %v2623
          %v2625 = vand.u32 %v2014, 4294901760
          %2626 = vmatmul.f32.gmra.mxu0 %v2625
          %v2627 = vpop.f32.mrf.mxu0
          %v2628 = vadd.f32 %v2546, %v2627
          %v2629 = vand.u32 %v2017, 4294901760
          %2630 = vmatmul.f32.gmra.mxu0 %v2629
          %v2631 = vpop.f32.mrf.mxu0
          %v2632 = vadd.f32 %v2550, %v2631
          %2633 = vdwg.mxu0
          %v2634 = vld [vmem:[#allocation3] sm:$0x1]
          %v2635 = vmax.f32 %v2572, %v2588
          %v2636 = vmax.f32 %v2576, %v2592
          %v2637 = vmax.f32 %v2580, %v2596
          %v2638 = vmax.f32 %v2584, %v2600
          %v2639 = vmax.f32 %v2635, %v2604
          %v2640 = vmax.f32 %v2636, %v2608
          %v2641 = vmax.f32 %v2637, %v2612
          %v2642 = vmax.f32 %v2638, %v2616
          %v2643 = vmax.f32 %v2639, %v2620
          %v2644 = vmax.f32 %v2640, %v2624
          %v2645 = vmax.f32 %v2641, %v2628
          %v2646 = vmax.f32 %v2642, %v2632
          %v2647 = vmax.f32 %v2643, %v2644
          %v2648 = vmax.f32 %v2645, %v2646
          %v2649 = vmax.f32 %v2647, %v2648
          %v2650 = vrot.slane %v2649, 4
          %v2651 = vmax.f32 %v2649, %v2650
          %v2652 = vrot.slane %v2651, 2
          %v2653 = vmax.f32 %v2651, %v2652
          %v2654 = vrot.slane %v2653, 1
          %v2655 = vmax.f32 %v2653, %v2654
          %v2656 = vmax.f32 %v2634, %v2655
          %v2657 = vsub.f32 %v2634, %v2656
          %v2658 = vmul.f32 %v2657, 1.442695
          %v2659 = vpow.pop %v2658
          %v2661 = vperm.slane %v2656, 0
          %v2663 = vsub.f32 %v2572, %v2661
          %v2664 = vsub.f32 %v2576, %v2661
          %v2665 = vsub.f32 %v2580, %v2661
          %v2666 = vsub.f32 %v2584, %v2661
          %v2667 = vsub.f32 %v2588, %v2661
          %v2668 = vsub.f32 %v2592, %v2661
          %v2669 = vsub.f32 %v2596, %v2661
          %v2670 = vsub.f32 %v2600, %v2661
          %v2671 = vsub.f32 %v2604, %v2661
          %v2672 = vsub.f32 %v2608, %v2661
          %v2673 = vsub.f32 %v2612, %v2661
          %v2674 = vsub.f32 %v2616, %v2661
          %v2675 = vsub.f32 %v2620, %v2661
          %v2676 = vsub.f32 %v2624, %v2661
          %v2677 = vsub.f32 %v2628, %v2661
          %v2678 = vsub.f32 %v2632, %v2661
          %v2679 = vmul.f32 %v2663, 1.442695
          %v2680 = vpow.pop %v2679
          %v2681 = vmul.f32 %v2664, 1.442695
          %v2682 = vpow.pop %v2681
          %v2683 = vmul.f32 %v2665, 1.442695
          %v2684 = vpow.pop %v2683
          %v2685 = vmul.f32 %v2666, 1.442695
          %v2686 = vpow.pop %v2685
          %v2687 = vmul.f32 %v2667, 1.442695
          %v2688 = vpow.pop %v2687
          %v2689 = vmul.f32 %v2668, 1.442695
          %v2690 = vpow.pop %v2689
          %v2691 = vmul.f32 %v2669, 1.442695
          %v2692 = vpow.pop %v2691
          %v2693 = vmul.f32 %v2670, 1.442695
          %v2694 = vpow.pop %v2693
          %v2695 = vmul.f32 %v2671, 1.442695
          %v2696 = vpow.pop %v2695
          %v2697 = vmul.f32 %v2672, 1.442695
          %v2698 = vpow.pop %v2697
          %v2699 = vmul.f32 %v2673, 1.442695
          %v2700 = vpow.pop %v2699
          %v2701 = vmul.f32 %v2674, 1.442695
          %v2702 = vpow.pop %v2701
          %v2703 = vmul.f32 %v2675, 1.442695
          %v2704 = vpow.pop %v2703
          %v2705 = vmul.f32 %v2676, 1.442695
          %v2706 = vpow.pop %v2705
          %v2707 = vmul.f32 %v2677, 1.442695
          %v2708 = vpow.pop %v2707
          %v2709 = vmul.f32 %v2678, 1.442695
          %v2710 = vpow.pop %v2709
          %v2711 = vld [vmem:[#allocation4] sm:$0x1]
          %v2712 = vmul.f32 %v2659, %v2711
          %v2713 = vadd.f32 %v2680, %v2682
          %v2714 = vadd.f32 %v2713, %v2684
          %v2715 = vadd.f32 %v2714, %v2686
          %v2716 = vadd.f32 %v2715, %v2688
          %v2717 = vadd.f32 %v2716, %v2690
          %v2718 = vadd.f32 %v2717, %v2692
          %v2719 = vadd.f32 %v2718, %v2694
          %v2720 = vadd.f32 %v2719, %v2696
          %v2721 = vadd.f32 %v2720, %v2698
          %v2722 = vadd.f32 %v2721, %v2700
          %v2723 = vadd.f32 %v2722, %v2702
          %v2724 = vadd.f32 %v2723, %v2704
          %v2725 = vadd.f32 %v2724, %v2706
          %v2726 = vadd.f32 %v2725, %v2708
          %v2727 = vadd.f32 %v2726, %v2710
          %v2728 = vrot.slane %v2727, 4
          %v2729 = vadd.f32 %v2727, %v2728
          %v2730 = vrot.slane %v2729, 2
          %v2731 = vadd.f32 %v2729, %v2730
          %v2732 = vrot.slane %v2731, 1
          %v2733 = vadd.f32 %v2731, %v2732
          %v2734 = vadd.f32 %v2712, %v2733
          %2735 = vst [vmem:[#allocation4] sm:$0x1] %v2734
          %v2736 = vld [vmem:[#allocation5] sm:$0xff]
          %v2737 = vld [vmem:[#allocation5 + $0x8] sm:$0xff]
          %v2739 = vperm.slane %v2659, 0
          %v2741 = vmul.f32 %v2739, %v2736
          %v2742 = vmul.f32 %v2739, %v2737
          %v2743 = vand.u32 %v2710, 4294901760
          %2744 = vmatpush.msra.mxu0 %v2743
          %v2745 = vand.u32 %v2708, 4294901760
          %2746 = vmatpush.msra.mxu0 %v2745
          %v2747 = vand.u32 %v2706, 4294901760
          %2748 = vmatpush.msra.mxu0 %v2747
          %v2749 = vand.u32 %v2704, 4294901760
          %2750 = vmatpush.msra.mxu0 %v2749
          %v2751 = vand.u32 %v2702, 4294901760
          %2752 = vmatpush.msra.mxu0 %v2751
          %v2753 = vand.u32 %v2700, 4294901760
          %2754 = vmatpush.msra.mxu0 %v2753
          %v2755 = vand.u32 %v2698, 4294901760
          %2756 = vmatpush.msra.mxu0 %v2755
          %v2757 = vand.u32 %v2696, 4294901760
          %2758 = vmatpush.msra.mxu0 %v2757
          %v2759 = vand.u32 %v2694, 4294901760
          %2760 = vmatpush.msra.mxu0 %v2759
          %v2761 = vand.u32 %v2692, 4294901760
          %2762 = vmatpush.msra.mxu0 %v2761
          %v2763 = vand.u32 %v2690, 4294901760
          %2764 = vmatpush.msra.mxu0 %v2763
          %v2765 = vand.u32 %v2688, 4294901760
          %2766 = vmatpush.msra.mxu0 %v2765
          %v2767 = vand.u32 %v2686, 4294901760
          %2768 = vmatpush.msra.mxu0 %v2767
          %v2769 = vand.u32 %v2684, 4294901760
          %2770 = vmatpush.msra.mxu0 %v2769
          %v2771 = vand.u32 %v2682, 4294901760
          %2772 = vmatpush.msra.mxu0 %v2771
          %v2773 = vand.u32 %v2680, 4294901760
          %2774 = vmatpush.msra.mxu0 %v2773
          %v2775 = vand.u32 %v645, 4294901760
          %v2776 = vsub.f32 %v645, %v2775
          %v2777 = vand.u32 %v2776, 4294901760
          %v2778 = vsub.f32 %v2776, %v2777
          %v2779 = vand.u32 %v2778, 4294901760
          %2780 = vmatmul.f32.gmra.mxu0 %v2779
          %v2781 = vpop.f32.mrf.mxu0
          %v2782 = vadd.f32 0.0, %v2781
          %v2783 = vand.u32 %v646, 4294901760
          %v2784 = vsub.f32 %v646, %v2783
          %v2785 = vand.u32 %v2784, 4294901760
          %v2786 = vsub.f32 %v2784, %v2785
          %v2787 = vand.u32 %v2786, 4294901760
          %2788 = vmatmul.f32.gmra.mxu0 %v2787
          %v2789 = vpop.f32.mrf.mxu0
          %v2790 = vadd.f32 0.0, %v2789
          %2791 = vdwg.mxu0
          %v2792 = vand.u32 %v2710, 4294901760
          %v2793 = vsub.f32 %v2710, %v2792
          %v2794 = vand.u32 %v2793, 4294901760
          %v2795 = vsub.f32 %v2793, %v2794
          %v2796 = vand.u32 %v2795, 4294901760
          %2797 = vmatpush.msra.mxu0 %v2796
          %v2798 = vand.u32 %v2708, 4294901760
          %v2799 = vsub.f32 %v2708, %v2798
          %v2800 = vand.u32 %v2799, 4294901760
          %v2801 = vsub.f32 %v2799, %v2800
          %v2802 = vand.u32 %v2801, 4294901760
          %2803 = vmatpush.msra.mxu0 %v2802
          %v2804 = vand.u32 %v2706, 4294901760
          %v2805 = vsub.f32 %v2706, %v2804
          %v2806 = vand.u32 %v2805, 4294901760
          %v2807 = vsub.f32 %v2805, %v2806
          %v2808 = vand.u32 %v2807, 4294901760
          %2809 = vmatpush.msra.mxu0 %v2808
          %v2810 = vand.u32 %v2704, 4294901760
          %v2811 = vsub.f32 %v2704, %v2810
          %v2812 = vand.u32 %v2811, 4294901760
          %v2813 = vsub.f32 %v2811, %v2812
          %v2814 = vand.u32 %v2813, 4294901760
          %2815 = vmatpush.msra.mxu0 %v2814
          %v2816 = vand.u32 %v2702, 4294901760
          %v2817 = vsub.f32 %v2702, %v2816
          %v2818 = vand.u32 %v2817, 4294901760
          %v2819 = vsub.f32 %v2817, %v2818
          %v2820 = vand.u32 %v2819, 4294901760
          %2821 = vmatpush.msra.mxu0 %v2820
          %v2822 = vand.u32 %v2700, 4294901760
          %v2823 = vsub.f32 %v2700, %v2822
          %v2824 = vand.u32 %v2823, 4294901760
          %v2825 = vsub.f32 %v2823, %v2824
          %v2826 = vand.u32 %v2825, 4294901760
          %2827 = vmatpush.msra.mxu0 %v2826
          %v2828 = vand.u32 %v2698, 4294901760
          %v2829 = vsub.f32 %v2698, %v2828
          %v2830 = vand.u32 %v2829, 4294901760
          %v2831 = vsub.f32 %v2829, %v2830
          %v2832 = vand.u32 %v2831, 4294901760
          %2833 = vmatpush.msra.mxu0 %v2832
          %v2834 = vand.u32 %v2696, 4294901760
          %v2835 = vsub.f32 %v2696, %v2834
          %v2836 = vand.u32 %v2835, 4294901760
          %v2837 = vsub.f32 %v2835, %v2836
          %v2838 = vand.u32 %v2837, 4294901760
          %2839 = vmatpush.msra.mxu0 %v2838
          %v2840 = vand.u32 %v2694, 4294901760
          %v2841 = vsub.f32 %v2694, %v2840
          %v2842 = vand.u32 %v2841, 4294901760
          %v2843 = vsub.f32 %v2841, %v2842
          %v2844 = vand.u32 %v2843, 4294901760
          %2845 = vmatpush.msra.mxu0 %v2844
          %v2846 = vand.u32 %v2692, 4294901760
          %v2847 = vsub.f32 %v2692, %v2846
          %v2848 = vand.u32 %v2847, 4294901760
          %v2849 = vsub.f32 %v2847, %v2848
          %v2850 = vand.u32 %v2849, 4294901760
          %2851 = vmatpush.msra.mxu0 %v2850
          %v2852 = vand.u32 %v2690, 4294901760
          %v2853 = vsub.f32 %v2690, %v2852
          %v2854 = vand.u32 %v2853, 4294901760
          %v2855 = vsub.f32 %v2853, %v2854
          %v2856 = vand.u32 %v2855, 4294901760
          %2857 = vmatpush.msra.mxu0 %v2856
          %v2858 = vand.u32 %v2688, 4294901760
          %v2859 = vsub.f32 %v2688, %v2858
          %v2860 = vand.u32 %v2859, 4294901760
          %v2861 = vsub.f32 %v2859, %v2860
          %v2862 = vand.u32 %v2861, 4294901760
          %2863 = vmatpush.msra.mxu0 %v2862
          %v2864 = vand.u32 %v2686, 4294901760
          %v2865 = vsub.f32 %v2686, %v2864
          %v2866 = vand.u32 %v2865, 4294901760
          %v2867 = vsub.f32 %v2865, %v2866
          %v2868 = vand.u32 %v2867, 4294901760
          %2869 = vmatpush.msra.mxu0 %v2868
          %v2870 = vand.u32 %v2684, 4294901760
          %v2871 = vsub.f32 %v2684, %v2870
          %v2872 = vand.u32 %v2871, 4294901760
          %v2873 = vsub.f32 %v2871, %v2872
          %v2874 = vand.u32 %v2873, 4294901760
          %2875 = vmatpush.msra.mxu0 %v2874
          %v2876 = vand.u32 %v2682, 4294901760
          %v2877 = vsub.f32 %v2682, %v2876
          %v2878 = vand.u32 %v2877, 4294901760
          %v2879 = vsub.f32 %v2877, %v2878
          %v2880 = vand.u32 %v2879, 4294901760
          %2881 = vmatpush.msra.mxu0 %v2880
          %v2882 = vand.u32 %v2680, 4294901760
          %v2883 = vsub.f32 %v2680, %v2882
          %v2884 = vand.u32 %v2883, 4294901760
          %v2885 = vsub.f32 %v2883, %v2884
          %v2886 = vand.u32 %v2885, 4294901760
          %2887 = vmatpush.msra.mxu0 %v2886
          %v2888 = vand.u32 %v645, 4294901760
          %2889 = vmatmul.f32.gmra.mxu0 %v2888
          %v2890 = vpop.f32.mrf.mxu0
          %v2891 = vadd.f32 %v2782, %v2890
          %v2892 = vand.u32 %v646, 4294901760
          %2893 = vmatmul.f32.gmra.mxu0 %v2892
          %v2894 = vpop.f32.mrf.mxu0
          %v2895 = vadd.f32 %v2790, %v2894
          %2896 = vdwg.mxu0
          %v2897 = vand.u32 %v2710, 4294901760
          %v2898 = vsub.f32 %v2710, %v2897
          %2899 = vmatpush.msra.mxu0 %v2898
          %v2900 = vand.u32 %v2708, 4294901760
          %v2901 = vsub.f32 %v2708, %v2900
          %2902 = vmatpush.msra.mxu0 %v2901
          %v2903 = vand.u32 %v2706, 4294901760
          %v2904 = vsub.f32 %v2706, %v2903
          %2905 = vmatpush.msra.mxu0 %v2904
          %v2906 = vand.u32 %v2704, 4294901760
          %v2907 = vsub.f32 %v2704, %v2906
          %2908 = vmatpush.msra.mxu0 %v2907
          %v2909 = vand.u32 %v2702, 4294901760
          %v2910 = vsub.f32 %v2702, %v2909
          %2911 = vmatpush.msra.mxu0 %v2910
          %v2912 = vand.u32 %v2700, 4294901760
          %v2913 = vsub.f32 %v2700, %v2912
          %2914 = vmatpush.msra.mxu0 %v2913
          %v2915 = vand.u32 %v2698, 4294901760
          %v2916 = vsub.f32 %v2698, %v2915
          %2917 = vmatpush.msra.mxu0 %v2916
          %v2918 = vand.u32 %v2696, 4294901760
          %v2919 = vsub.f32 %v2696, %v2918
          %2920 = vmatpush.msra.mxu0 %v2919
          %v2921 = vand.u32 %v2694, 4294901760
          %v2922 = vsub.f32 %v2694, %v2921
          %2923 = vmatpush.msra.mxu0 %v2922
          %v2924 = vand.u32 %v2692, 4294901760
          %v2925 = vsub.f32 %v2692, %v2924
          %2926 = vmatpush.msra.mxu0 %v2925
          %v2927 = vand.u32 %v2690, 4294901760
          %v2928 = vsub.f32 %v2690, %v2927
          %2929 = vmatpush.msra.mxu0 %v2928
          %v2930 = vand.u32 %v2688, 4294901760
          %v2931 = vsub.f32 %v2688, %v2930
          %2932 = vmatpush.msra.mxu0 %v2931
          %v2933 = vand.u32 %v2686, 4294901760
          %v2934 = vsub.f32 %v2686, %v2933
          %2935 = vmatpush.msra.mxu0 %v2934
          %v2936 = vand.u32 %v2684, 4294901760
          %v2937 = vsub.f32 %v2684, %v2936
          %2938 = vmatpush.msra.mxu0 %v2937
          %v2939 = vand.u32 %v2682, 4294901760
          %v2940 = vsub.f32 %v2682, %v2939
          %2941 = vmatpush.msra.mxu0 %v2940
          %v2942 = vand.u32 %v2680, 4294901760
          %v2943 = vsub.f32 %v2680, %v2942
          %2944 = vmatpush.msra.mxu0 %v2943
          %v2945 = vand.u32 %v645, 4294901760
          %v2946 = vsub.f32 %v645, %v2945
          %2947 = vmatmul.f32.gmra.mxu0 %v2946
          %v2948 = vpop.f32.mrf.mxu0
          %v2949 = vadd.f32 %v2891, %v2948
          %v2950 = vand.u32 %v646, 4294901760
          %v2951 = vsub.f32 %v646, %v2950
          %2952 = vmatmul.f32.gmra.mxu0 %v2951
          %v2953 = vpop.f32.mrf.mxu0
          %v2954 = vadd.f32 %v2895, %v2953
          %2955 = vdwg.mxu0
          %v2956 = vand.u32 %v2710, 4294901760
          %2957 = vmatpush.msra.mxu0 %v2956
          %v2958 = vand.u32 %v2708, 4294901760
          %2959 = vmatpush.msra.mxu0 %v2958
          %v2960 = vand.u32 %v2706, 4294901760
          %2961 = vmatpush.msra.mxu0 %v2960
          %v2962 = vand.u32 %v2704, 4294901760
          %2963 = vmatpush.msra.mxu0 %v2962
          %v2964 = vand.u32 %v2702, 4294901760
          %2965 = vmatpush.msra.mxu0 %v2964
          %v2966 = vand.u32 %v2700, 4294901760
          %2967 = vmatpush.msra.mxu0 %v2966
          %v2968 = vand.u32 %v2698, 4294901760
          %2969 = vmatpush.msra.mxu0 %v2968
          %v2970 = vand.u32 %v2696, 4294901760
          %2971 = vmatpush.msra.mxu0 %v2970
          %v2972 = vand.u32 %v2694, 4294901760
          %2973 = vmatpush.msra.mxu0 %v2972
          %v2974 = vand.u32 %v2692, 4294901760
          %2975 = vmatpush.msra.mxu0 %v2974
          %v2976 = vand.u32 %v2690, 4294901760
          %2977 = vmatpush.msra.mxu0 %v2976
          %v2978 = vand.u32 %v2688, 4294901760
          %2979 = vmatpush.msra.mxu0 %v2978
          %v2980 = vand.u32 %v2686, 4294901760
          %2981 = vmatpush.msra.mxu0 %v2980
          %v2982 = vand.u32 %v2684, 4294901760
          %2983 = vmatpush.msra.mxu0 %v2982
          %v2984 = vand.u32 %v2682, 4294901760
          %2985 = vmatpush.msra.mxu0 %v2984
          %v2986 = vand.u32 %v2680, 4294901760
          %2987 = vmatpush.msra.mxu0 %v2986
          %v2988 = vand.u32 %v645, 4294901760
          %v2989 = vsub.f32 %v645, %v2988
          %v2990 = vand.u32 %v2989, 4294901760
          %2991 = vmatmul.f32.gmra.mxu0 %v2990
          %v2992 = vpop.f32.mrf.mxu0
          %v2993 = vadd.f32 %v2949, %v2992
          %v2994 = vand.u32 %v646, 4294901760
          %v2995 = vsub.f32 %v646, %v2994
          %v2996 = vand.u32 %v2995, 4294901760
          %2997 = vmatmul.f32.gmra.mxu0 %v2996
          %v2998 = vpop.f32.mrf.mxu0
          %v2999 = vadd.f32 %v2954, %v2998
          %3000 = vdwg.mxu0
          %v3001 = vand.u32 %v2710, 4294901760
          %v3002 = vsub.f32 %v2710, %v3001
          %v3003 = vand.u32 %v3002, 4294901760
          %3004 = vmatpush.msra.mxu0 %v3003
          %v3005 = vand.u32 %v2708, 4294901760
          %v3006 = vsub.f32 %v2708, %v3005
          %v3007 = vand.u32 %v3006, 4294901760
          %3008 = vmatpush.msra.mxu0 %v3007
          %v3009 = vand.u32 %v2706, 4294901760
          %v3010 = vsub.f32 %v2706, %v3009
          %v3011 = vand.u32 %v3010, 4294901760
          %3012 = vmatpush.msra.mxu0 %v3011
          %v3013 = vand.u32 %v2704, 4294901760
          %v3014 = vsub.f32 %v2704, %v3013
          %v3015 = vand.u32 %v3014, 4294901760
          %3016 = vmatpush.msra.mxu0 %v3015
          %v3017 = vand.u32 %v2702, 4294901760
          %v3018 = vsub.f32 %v2702, %v3017
          %v3019 = vand.u32 %v3018, 4294901760
          %3020 = vmatpush.msra.mxu0 %v3019
          %v3021 = vand.u32 %v2700, 4294901760
          %v3022 = vsub.f32 %v2700, %v3021
          %v3023 = vand.u32 %v3022, 4294901760
          %3024 = vmatpush.msra.mxu0 %v3023
          %v3025 = vand.u32 %v2698, 4294901760
          %v3026 = vsub.f32 %v2698, %v3025
          %v3027 = vand.u32 %v3026, 4294901760
          %3028 = vmatpush.msra.mxu0 %v3027
          %v3029 = vand.u32 %v2696, 4294901760
          %v3030 = vsub.f32 %v2696, %v3029
          %v3031 = vand.u32 %v3030, 4294901760
          %3032 = vmatpush.msra.mxu0 %v3031
          %v3033 = vand.u32 %v2694, 4294901760
          %v3034 = vsub.f32 %v2694, %v3033
          %v3035 = vand.u32 %v3034, 4294901760
          %3036 = vmatpush.msra.mxu0 %v3035
          %v3037 = vand.u32 %v2692, 4294901760
          %v3038 = vsub.f32 %v2692, %v3037
          %v3039 = vand.u32 %v3038, 4294901760
          %3040 = vmatpush.msra.mxu0 %v3039
          %v3041 = vand.u32 %v2690, 4294901760
          %v3042 = vsub.f32 %v2690, %v3041
          %v3043 = vand.u32 %v3042, 4294901760
          %3044 = vmatpush.msra.mxu0 %v3043
          %v3045 = vand.u32 %v2688, 4294901760
          %v3046 = vsub.f32 %v2688, %v3045
          %v3047 = vand.u32 %v3046, 4294901760
          %3048 = vmatpush.msra.mxu0 %v3047
          %v3049 = vand.u32 %v2686, 4294901760
          %v3050 = vsub.f32 %v2686, %v3049
          %v3051 = vand.u32 %v3050, 4294901760
          %3052 = vmatpush.msra.mxu0 %v3051
          %v3053 = vand.u32 %v2684, 4294901760
          %v3054 = vsub.f32 %v2684, %v3053
          %v3055 = vand.u32 %v3054, 4294901760
          %3056 = vmatpush.msra.mxu0 %v3055
          %v3057 = vand.u32 %v2682, 4294901760
          %v3058 = vsub.f32 %v2682, %v3057
          %v3059 = vand.u32 %v3058, 4294901760
          %3060 = vmatpush.msra.mxu0 %v3059
          %v3061 = vand.u32 %v2680, 4294901760
          %v3062 = vsub.f32 %v2680, %v3061
          %v3063 = vand.u32 %v3062, 4294901760
          %3064 = vmatpush.msra.mxu0 %v3063
          %v3065 = vand.u32 %v645, 4294901760
          %3066 = vmatmul.f32.gmra.mxu0 %v3065
          %v3067 = vpop.f32.mrf.mxu0
          %v3068 = vadd.f32 %v2993, %v3067
          %v3069 = vand.u32 %v646, 4294901760
          %3070 = vmatmul.f32.gmra.mxu0 %v3069
          %v3071 = vpop.f32.mrf.mxu0
          %v3072 = vadd.f32 %v2999, %v3071
          %3073 = vdwg.mxu0
          %v3074 = vand.u32 %v2710, 4294901760
          %3075 = vmatpush.msra.mxu0 %v3074
          %v3076 = vand.u32 %v2708, 4294901760
          %3077 = vmatpush.msra.mxu0 %v3076
          %v3078 = vand.u32 %v2706, 4294901760
          %3079 = vmatpush.msra.mxu0 %v3078
          %v3080 = vand.u32 %v2704, 4294901760
          %3081 = vmatpush.msra.mxu0 %v3080
          %v3082 = vand.u32 %v2702, 4294901760
          %3083 = vmatpush.msra.mxu0 %v3082
          %v3084 = vand.u32 %v2700, 4294901760
          %3085 = vmatpush.msra.mxu0 %v3084
          %v3086 = vand.u32 %v2698, 4294901760
          %3087 = vmatpush.msra.mxu0 %v3086
          %v3088 = vand.u32 %v2696, 4294901760
          %3089 = vmatpush.msra.mxu0 %v3088
          %v3090 = vand.u32 %v2694, 4294901760
          %3091 = vmatpush.msra.mxu0 %v3090
          %v3092 = vand.u32 %v2692, 4294901760
          %3093 = vmatpush.msra.mxu0 %v3092
          %v3094 = vand.u32 %v2690, 4294901760
          %3095 = vmatpush.msra.mxu0 %v3094
          %v3096 = vand.u32 %v2688, 4294901760
          %3097 = vmatpush.msra.mxu0 %v3096
          %v3098 = vand.u32 %v2686, 4294901760
          %3099 = vmatpush.msra.mxu0 %v3098
          %v3100 = vand.u32 %v2684, 4294901760
          %3101 = vmatpush.msra.mxu0 %v3100
          %v3102 = vand.u32 %v2682, 4294901760
          %3103 = vmatpush.msra.mxu0 %v3102
          %v3104 = vand.u32 %v2680, 4294901760
          %3105 = vmatpush.msra.mxu0 %v3104
          %v3106 = vand.u32 %v645, 4294901760
          %3107 = vmatmul.f32.gmra.mxu0 %v3106
          %v3108 = vpop.f32.mrf.mxu0
          %v3109 = vadd.f32 %v3068, %v3108
          %v3110 = vand.u32 %v646, 4294901760
          %3111 = vmatmul.f32.gmra.mxu0 %v3110
          %v3112 = vpop.f32.mrf.mxu0
          %v3113 = vadd.f32 %v3072, %v3112
          %3114 = vdwg.mxu0
          %v3115 = vadd.f32 %v2741, %v3109
          %v3116 = vadd.f32 %v2742, %v3113
          %3117 = vst [vmem:[#allocation5] sm:$0xff] %v3115
          %3118 = vst [vmem:[#allocation5 + $0x8] sm:$0xff] %v3116
          %3119 = vst [vmem:[#allocation3] sm:$0x1] %v2656
        $region72: #{dan_forward.3} parent=55 // pred_fallthru
          _
        // Predicated region
        $region73: #{dan_forward.3} parent=55 // pred_check
          %p3120 = pneg %p464
        $region74: #{dan_forward.3} parent=55 // pred_check_branch
          %3122 = sbr.rel (%p3120) target = $region76
        $region75: #{dan_forward.3} parent=55 // pred_region
          %v3123 = vld [vmem:[%s435] sm:$0xff]
          %v3124 = vld [vmem:[%s435 + $0x8] sm:$0xff]
          %v3125 = vld [vmem:[#allocation5] sm:$0xff]
          %v3126 = vld [vmem:[#allocation5 + $0x8] sm:$0xff]
          %v3127 = vld [vmem:[#allocation4] sm:$0x1]
          %v3129 = vperm.slane %v3127, 0
          %v3131 = vrcp.pop %v3129
          %v3132 = vmul.f32 %v3129, %v3131
          %v3133 = vsub.f32 1.0, %v3132
          %v3134 = vmul.f32 %v3131, %v3133
          %v3135 = vadd.f32 %v3131, %v3134
          %vm3136 = vweird.f32 %v3129
          %vm3137 = vweird.f32 %v3131
          %vm3138 = vmor %vm3136, %vm3137
          %v3139 = vsel %vm3138, %v3131, %v3135
          %v3140 = vand.u32 2147483647, %v3129
          %vm3141 = vcmp.eq.f32.partialorder %v3140, 8.507059e+37
          %v3142 = vand.u32 %v3129, 2147483648
          %v3143 = vor.u32 1.1754944e-38, %v3142
          %v3144 = vsel %vm3141, %v3143, %v3139
          %v3145 = vmul.f32 %v3125, %v3144
          %v3146 = vmul.f32 %v3126, %v3144
          %v3147 = vld [vmem:[%s7] sm:$0xff]
          %v3148 = vld [vmem:[%s7 + $0x8] sm:$0xff]
          %v3149 = vld [vmem:[%s8] sm:$0xff]
          %v3150 = vld [vmem:[%s8 + $0x8] sm:$0xff]
          %3152 = vset.pattern.permute.xlu0 0
          %3153 = vperm.xlu0 %3152, %v3149
          %v3154 = vpop.permute.xlu0 %3153
          %3157 = vset.pattern.permute.xlu0 0
          %3158 = vperm.xlu0 %3157, %v3150
          %v3159 = vpop.permute.xlu0 %3158
          %vm3161 = vcmask 130048
          %v3163 = vsel %vm3161, %v3147, 0
          %v3166 = vsel %vm3161, %v3148, 0
          %3168 = vmatpush.msra.mxu0 0.0
          %3169 = vmatpush.msra.mxu0 0.0
          %3170 = vmatpush.msra.mxu0 0.0
          %3171 = vmatpush.msra.mxu0 0.0
          %3172 = vmatpush.msra.mxu0 0.0
          %3173 = vmatpush.msra.mxu0 0.0
          %3174 = vmatpush.msra.mxu0 0.0
          %3175 = vmatpush.msra.mxu0 0.0
          %3176 = vmatpush.msra.mxu0 0.0
          %3177 = vmatpush.msra.mxu0 0.0
          %3178 = vmatpush.msra.mxu0 0.0
          %3179 = vmatpush.msra.mxu0 0.0
          %3180 = vmatpush.msra.mxu0 0.0
          %3181 = vmatpush.msra.mxu0 0.0
          %v3182 = vand.u32 %v3146, 4294901760
          %3183 = vmatpush.msra.mxu0 %v3182
          %v3184 = vand.u32 %v3145, 4294901760
          %3185 = vmatpush.msra.mxu0 %v3184
          %v3186 = vand.u32 %v3163, 4294901760
          %v3187 = vsub.f32 %v3163, %v3186
          %v3188 = vand.u32 %v3187, 4294901760
          %v3189 = vsub.f32 %v3187, %v3188
          %v3190 = vand.u32 %v3189, 4294901760
          %3191 = vmatmul.f32.gmra.mxu0 %v3190
          %v3192 = vpop.f32.mrf.mxu0
          %v3193 = vadd.f32 %v3154, %v3192
          %v3194 = vand.u32 %v3166, 4294901760
          %v3195 = vsub.f32 %v3166, %v3194
          %v3196 = vand.u32 %v3195, 4294901760
          %v3197 = vsub.f32 %v3195, %v3196
          %v3198 = vand.u32 %v3197, 4294901760
          %3199 = vmatmul.f32.gmra.mxu0 %v3198
          %v3200 = vpop.f32.mrf.mxu0
          %v3201 = vadd.f32 %v3159, %v3200
          %3202 = vdwg.mxu0
          %3203 = vmatpush.msra.mxu0 0.0
          %3204 = vmatpush.msra.mxu0 0.0
          %3205 = vmatpush.msra.mxu0 0.0
          %3206 = vmatpush.msra.mxu0 0.0
          %3207 = vmatpush.msra.mxu0 0.0
          %3208 = vmatpush.msra.mxu0 0.0
          %3209 = vmatpush.msra.mxu0 0.0
          %3210 = vmatpush.msra.mxu0 0.0
          %3211 = vmatpush.msra.mxu0 0.0
          %3212 = vmatpush.msra.mxu0 0.0
          %3213 = vmatpush.msra.mxu0 0.0
          %3214 = vmatpush.msra.mxu0 0.0
          %3215 = vmatpush.msra.mxu0 0.0
          %3216 = vmatpush.msra.mxu0 0.0
          %v3217 = vand.u32 %v3146, 4294901760
          %v3218 = vsub.f32 %v3146, %v3217
          %v3219 = vand.u32 %v3218, 4294901760
          %v3220 = vsub.f32 %v3218, %v3219
          %v3221 = vand.u32 %v3220, 4294901760
          %3222 = vmatpush.msra.mxu0 %v3221
          %v3223 = vand.u32 %v3145, 4294901760
          %v3224 = vsub.f32 %v3145, %v3223
          %v3225 = vand.u32 %v3224, 4294901760
          %v3226 = vsub.f32 %v3224, %v3225
          %v3227 = vand.u32 %v3226, 4294901760
          %3228 = vmatpush.msra.mxu0 %v3227
          %v3229 = vand.u32 %v3163, 4294901760
          %3230 = vmatmul.f32.gmra.mxu0 %v3229
          %v3231 = vpop.f32.mrf.mxu0
          %v3232 = vadd.f32 %v3193, %v3231
          %v3233 = vand.u32 %v3166, 4294901760
          %3234 = vmatmul.f32.gmra.mxu0 %v3233
          %v3235 = vpop.f32.mrf.mxu0
          %v3236 = vadd.f32 %v3201, %v3235
          %3237 = vdwg.mxu0
          %3238 = vmatpush.msra.mxu0 0.0
          %3239 = vmatpush.msra.mxu0 0.0
          %3240 = vmatpush.msra.mxu0 0.0
          %3241 = vmatpush.msra.mxu0 0.0
          %3242 = vmatpush.msra.mxu0 0.0
          %3243 = vmatpush.msra.mxu0 0.0
          %3244 = vmatpush.msra.mxu0 0.0
          %3245 = vmatpush.msra.mxu0 0.0
          %3246 = vmatpush.msra.mxu0 0.0
          %3247 = vmatpush.msra.mxu0 0.0
          %3248 = vmatpush.msra.mxu0 0.0
          %3249 = vmatpush.msra.mxu0 0.0
          %3250 = vmatpush.msra.mxu0 0.0
          %3251 = vmatpush.msra.mxu0 0.0
          %v3252 = vand.u32 %v3146, 4294901760
          %v3253 = vsub.f32 %v3146, %v3252
          %3254 = vmatpush.msra.mxu0 %v3253
          %v3255 = vand.u32 %v3145, 4294901760
          %v3256 = vsub.f32 %v3145, %v3255
          %3257 = vmatpush.msra.mxu0 %v3256
          %v3258 = vand.u32 %v3163, 4294901760
          %v3259 = vsub.f32 %v3163, %v3258
          %3260 = vmatmul.f32.gmra.mxu0 %v3259
          %v3261 = vpop.f32.mrf.mxu0
          %v3262 = vadd.f32 %v3232, %v3261
          %v3263 = vand.u32 %v3166, 4294901760
          %v3264 = vsub.f32 %v3166, %v3263
          %3265 = vmatmul.f32.gmra.mxu0 %v3264
          %v3266 = vpop.f32.mrf.mxu0
          %v3267 = vadd.f32 %v3236, %v3266
          %3268 = vdwg.mxu0
          %3269 = vmatpush.msra.mxu0 0.0
          %3270 = vmatpush.msra.mxu0 0.0
          %3271 = vmatpush.msra.mxu0 0.0
          %3272 = vmatpush.msra.mxu0 0.0
          %3273 = vmatpush.msra.mxu0 0.0
          %3274 = vmatpush.msra.mxu0 0.0
          %3275 = vmatpush.msra.mxu0 0.0
          %3276 = vmatpush.msra.mxu0 0.0
          %3277 = vmatpush.msra.mxu0 0.0
          %3278 = vmatpush.msra.mxu0 0.0
          %3279 = vmatpush.msra.mxu0 0.0
          %3280 = vmatpush.msra.mxu0 0.0
          %3281 = vmatpush.msra.mxu0 0.0
          %3282 = vmatpush.msra.mxu0 0.0
          %v3283 = vand.u32 %v3146, 4294901760
          %3284 = vmatpush.msra.mxu0 %v3283
          %v3285 = vand.u32 %v3145, 4294901760
          %3286 = vmatpush.msra.mxu0 %v3285
          %v3287 = vand.u32 %v3163, 4294901760
          %v3288 = vsub.f32 %v3163, %v3287
          %v3289 = vand.u32 %v3288, 4294901760
          %3290 = vmatmul.f32.gmra.mxu0 %v3289
          %v3291 = vpop.f32.mrf.mxu0
          %v3292 = vadd.f32 %v3262, %v3291
          %v3293 = vand.u32 %v3166, 4294901760
          %v3294 = vsub.f32 %v3166, %v3293
          %v3295 = vand.u32 %v3294, 4294901760
          %3296 = vmatmul.f32.gmra.mxu0 %v3295
          %v3297 = vpop.f32.mrf.mxu0
          %v3298 = vadd.f32 %v3267, %v3297
          %3299 = vdwg.mxu0
          %3300 = vmatpush.msra.mxu0 0.0
          %3301 = vmatpush.msra.mxu0 0.0
          %3302 = vmatpush.msra.mxu0 0.0
          %3303 = vmatpush.msra.mxu0 0.0
          %3304 = vmatpush.msra.mxu0 0.0
          %3305 = vmatpush.msra.mxu0 0.0
          %3306 = vmatpush.msra.mxu0 0.0
          %3307 = vmatpush.msra.mxu0 0.0
          %3308 = vmatpush.msra.mxu0 0.0
          %3309 = vmatpush.msra.mxu0 0.0
          %3310 = vmatpush.msra.mxu0 0.0
          %3311 = vmatpush.msra.mxu0 0.0
          %3312 = vmatpush.msra.mxu0 0.0
          %3313 = vmatpush.msra.mxu0 0.0
          %v3314 = vand.u32 %v3146, 4294901760
          %v3315 = vsub.f32 %v3146, %v3314
          %v3316 = vand.u32 %v3315, 4294901760
          %3317 = vmatpush.msra.mxu0 %v3316
          %v3318 = vand.u32 %v3145, 4294901760
          %v3319 = vsub.f32 %v3145, %v3318
          %v3320 = vand.u32 %v3319, 4294901760
          %3321 = vmatpush.msra.mxu0 %v3320
          %v3322 = vand.u32 %v3163, 4294901760
          %3323 = vmatmul.f32.gmra.mxu0 %v3322
          %v3324 = vpop.f32.mrf.mxu0
          %v3325 = vadd.f32 %v3292, %v3324
          %v3326 = vand.u32 %v3166, 4294901760
          %3327 = vmatmul.f32.gmra.mxu0 %v3326
          %v3328 = vpop.f32.mrf.mxu0
          %v3329 = vadd.f32 %v3298, %v3328
          %3330 = vdwg.mxu0
          %3331 = vmatpush.msra.mxu0 0.0
          %3332 = vmatpush.msra.mxu0 0.0
          %3333 = vmatpush.msra.mxu0 0.0
          %3334 = vmatpush.msra.mxu0 0.0
          %3335 = vmatpush.msra.mxu0 0.0
          %3336 = vmatpush.msra.mxu0 0.0
          %3337 = vmatpush.msra.mxu0 0.0
          %3338 = vmatpush.msra.mxu0 0.0
          %3339 = vmatpush.msra.mxu0 0.0
          %3340 = vmatpush.msra.mxu0 0.0
          %3341 = vmatpush.msra.mxu0 0.0
          %3342 = vmatpush.msra.mxu0 0.0
          %3343 = vmatpush.msra.mxu0 0.0
          %3344 = vmatpush.msra.mxu0 0.0
          %v3345 = vand.u32 %v3146, 4294901760
          %3346 = vmatpush.msra.mxu0 %v3345
          %v3347 = vand.u32 %v3145, 4294901760
          %3348 = vmatpush.msra.mxu0 %v3347
          %v3349 = vand.u32 %v3163, 4294901760
          %3350 = vmatmul.f32.gmra.mxu0 %v3349
          %v3351 = vpop.f32.mrf.mxu0
          %v3352 = vadd.f32 %v3325, %v3351
          %v3353 = vand.u32 %v3166, 4294901760
          %3354 = vmatmul.f32.gmra.mxu0 %v3353
          %v3355 = vpop.f32.mrf.mxu0
          %v3356 = vadd.f32 %v3329, %v3355
          %3357 = vdwg.mxu0
          %v3358 = vld [vmem:[%s455] sm:$0xff]
          %v3359 = vld [vmem:[%s455 + $0x8] sm:$0xff]
          %v3361 = vsel %vm3161, %v3358, 0
          %v3364 = vsel %vm3161, %v3359, 0
          %3366 = vmatpush.msra.mxu0 0.0
          %3367 = vmatpush.msra.mxu0 0.0
          %3368 = vmatpush.msra.mxu0 0.0
          %3369 = vmatpush.msra.mxu0 0.0
          %3370 = vmatpush.msra.mxu0 0.0
          %3371 = vmatpush.msra.mxu0 0.0
          %3372 = vmatpush.msra.mxu0 0.0
          %3373 = vmatpush.msra.mxu0 0.0
          %3374 = vmatpush.msra.mxu0 0.0
          %3375 = vmatpush.msra.mxu0 0.0
          %3376 = vmatpush.msra.mxu0 0.0
          %3377 = vmatpush.msra.mxu0 0.0
          %3378 = vmatpush.msra.mxu0 0.0
          %3379 = vmatpush.msra.mxu0 0.0
          %v3380 = vand.u32 %v3124, 4294901760
          %3381 = vmatpush.msra.mxu0 %v3380
          %v3382 = vand.u32 %v3123, 4294901760
          %3383 = vmatpush.msra.mxu0 %v3382
          %v3384 = vand.u32 %v3361, 4294901760
          %v3385 = vsub.f32 %v3361, %v3384
          %v3386 = vand.u32 %v3385, 4294901760
          %v3387 = vsub.f32 %v3385, %v3386
          %v3388 = vand.u32 %v3387, 4294901760
          %3389 = vmatmul.f32.gmra.mxu0 %v3388
          %v3390 = vpop.f32.mrf.mxu0
          %v3391 = vadd.f32 0.0, %v3390
          %v3392 = vand.u32 %v3364, 4294901760
          %v3393 = vsub.f32 %v3364, %v3392
          %v3394 = vand.u32 %v3393, 4294901760
          %v3395 = vsub.f32 %v3393, %v3394
          %v3396 = vand.u32 %v3395, 4294901760
          %3397 = vmatmul.f32.gmra.mxu0 %v3396
          %v3398 = vpop.f32.mrf.mxu0
          %v3399 = vadd.f32 0.0, %v3398
          %3400 = vdwg.mxu0
          %3401 = vmatpush.msra.mxu0 0.0
          %3402 = vmatpush.msra.mxu0 0.0
          %3403 = vmatpush.msra.mxu0 0.0
          %3404 = vmatpush.msra.mxu0 0.0
          %3405 = vmatpush.msra.mxu0 0.0
          %3406 = vmatpush.msra.mxu0 0.0
          %3407 = vmatpush.msra.mxu0 0.0
          %3408 = vmatpush.msra.mxu0 0.0
          %3409 = vmatpush.msra.mxu0 0.0
          %3410 = vmatpush.msra.mxu0 0.0
          %3411 = vmatpush.msra.mxu0 0.0
          %3412 = vmatpush.msra.mxu0 0.0
          %3413 = vmatpush.msra.mxu0 0.0
          %3414 = vmatpush.msra.mxu0 0.0
          %v3415 = vand.u32 %v3124, 4294901760
          %v3416 = vsub.f32 %v3124, %v3415
          %v3417 = vand.u32 %v3416, 4294901760
          %v3418 = vsub.f32 %v3416, %v3417
          %v3419 = vand.u32 %v3418, 4294901760
          %3420 = vmatpush.msra.mxu0 %v3419
          %v3421 = vand.u32 %v3123, 4294901760
          %v3422 = vsub.f32 %v3123, %v3421
          %v3423 = vand.u32 %v3422, 4294901760
          %v3424 = vsub.f32 %v3422, %v3423
          %v3425 = vand.u32 %v3424, 4294901760
          %3426 = vmatpush.msra.mxu0 %v3425
          %v3427 = vand.u32 %v3361, 4294901760
          %3428 = vmatmul.f32.gmra.mxu0 %v3427
          %v3429 = vpop.f32.mrf.mxu0
          %v3430 = vadd.f32 %v3391, %v3429
          %v3431 = vand.u32 %v3364, 4294901760
          %3432 = vmatmul.f32.gmra.mxu0 %v3431
          %v3433 = vpop.f32.mrf.mxu0
          %v3434 = vadd.f32 %v3399, %v3433
          %3435 = vdwg.mxu0
          %3436 = vmatpush.msra.mxu0 0.0
          %3437 = vmatpush.msra.mxu0 0.0
          %3438 = vmatpush.msra.mxu0 0.0
          %3439 = vmatpush.msra.mxu0 0.0
          %3440 = vmatpush.msra.mxu0 0.0
          %3441 = vmatpush.msra.mxu0 0.0
          %3442 = vmatpush.msra.mxu0 0.0
          %3443 = vmatpush.msra.mxu0 0.0
          %3444 = vmatpush.msra.mxu0 0.0
          %3445 = vmatpush.msra.mxu0 0.0
          %3446 = vmatpush.msra.mxu0 0.0
          %3447 = vmatpush.msra.mxu0 0.0
          %3448 = vmatpush.msra.mxu0 0.0
          %3449 = vmatpush.msra.mxu0 0.0
          %v3450 = vand.u32 %v3124, 4294901760
          %v3451 = vsub.f32 %v3124, %v3450
          %3452 = vmatpush.msra.mxu0 %v3451
          %v3453 = vand.u32 %v3123, 4294901760
          %v3454 = vsub.f32 %v3123, %v3453
          %3455 = vmatpush.msra.mxu0 %v3454
          %v3456 = vand.u32 %v3361, 4294901760
          %v3457 = vsub.f32 %v3361, %v3456
          %3458 = vmatmul.f32.gmra.mxu0 %v3457
          %v3459 = vpop.f32.mrf.mxu0
          %v3460 = vadd.f32 %v3430, %v3459
          %v3461 = vand.u32 %v3364, 4294901760
          %v3462 = vsub.f32 %v3364, %v3461
          %3463 = vmatmul.f32.gmra.mxu0 %v3462
          %v3464 = vpop.f32.mrf.mxu0
          %v3465 = vadd.f32 %v3434, %v3464
          %3466 = vdwg.mxu0
          %3467 = vmatpush.msra.mxu0 0.0
          %3468 = vmatpush.msra.mxu0 0.0
          %3469 = vmatpush.msra.mxu0 0.0
          %3470 = vmatpush.msra.mxu0 0.0
          %3471 = vmatpush.msra.mxu0 0.0
          %3472 = vmatpush.msra.mxu0 0.0
          %3473 = vmatpush.msra.mxu0 0.0
          %3474 = vmatpush.msra.mxu0 0.0
          %3475 = vmatpush.msra.mxu0 0.0
          %3476 = vmatpush.msra.mxu0 0.0
          %3477 = vmatpush.msra.mxu0 0.0
          %3478 = vmatpush.msra.mxu0 0.0
          %3479 = vmatpush.msra.mxu0 0.0
          %3480 = vmatpush.msra.mxu0 0.0
          %v3481 = vand.u32 %v3124, 4294901760
          %3482 = vmatpush.msra.mxu0 %v3481
          %v3483 = vand.u32 %v3123, 4294901760
          %3484 = vmatpush.msra.mxu0 %v3483
          %v3485 = vand.u32 %v3361, 4294901760
          %v3486 = vsub.f32 %v3361, %v3485
          %v3487 = vand.u32 %v3486, 4294901760
          %3488 = vmatmul.f32.gmra.mxu0 %v3487
          %v3489 = vpop.f32.mrf.mxu0
          %v3490 = vadd.f32 %v3460, %v3489
          %v3491 = vand.u32 %v3364, 4294901760
          %v3492 = vsub.f32 %v3364, %v3491
          %v3493 = vand.u32 %v3492, 4294901760
          %3494 = vmatmul.f32.gmra.mxu0 %v3493
          %v3495 = vpop.f32.mrf.mxu0
          %v3496 = vadd.f32 %v3465, %v3495
          %3497 = vdwg.mxu0
          %3498 = vmatpush.msra.mxu0 0.0
          %3499 = vmatpush.msra.mxu0 0.0
          %3500 = vmatpush.msra.mxu0 0.0
          %3501 = vmatpush.msra.mxu0 0.0
          %3502 = vmatpush.msra.mxu0 0.0
          %3503 = vmatpush.msra.mxu0 0.0
          %3504 = vmatpush.msra.mxu0 0.0
          %3505 = vmatpush.msra.mxu0 0.0
          %3506 = vmatpush.msra.mxu0 0.0
          %3507 = vmatpush.msra.mxu0 0.0
          %3508 = vmatpush.msra.mxu0 0.0
          %3509 = vmatpush.msra.mxu0 0.0
          %3510 = vmatpush.msra.mxu0 0.0
          %3511 = vmatpush.msra.mxu0 0.0
          %v3512 = vand.u32 %v3124, 4294901760
          %v3513 = vsub.f32 %v3124, %v3512
          %v3514 = vand.u32 %v3513, 4294901760
          %3515 = vmatpush.msra.mxu0 %v3514
          %v3516 = vand.u32 %v3123, 4294901760
          %v3517 = vsub.f32 %v3123, %v3516
          %v3518 = vand.u32 %v3517, 4294901760
          %3519 = vmatpush.msra.mxu0 %v3518
          %v3520 = vand.u32 %v3361, 4294901760
          %3521 = vmatmul.f32.gmra.mxu0 %v3520
          %v3522 = vpop.f32.mrf.mxu0
          %v3523 = vadd.f32 %v3490, %v3522
          %v3524 = vand.u32 %v3364, 4294901760
          %3525 = vmatmul.f32.gmra.mxu0 %v3524
          %v3526 = vpop.f32.mrf.mxu0
          %v3527 = vadd.f32 %v3496, %v3526
          %3528 = vdwg.mxu0
          %3529 = vmatpush.msra.mxu0 0.0
          %3530 = vmatpush.msra.mxu0 0.0
          %3531 = vmatpush.msra.mxu0 0.0
          %3532 = vmatpush.msra.mxu0 0.0
          %3533 = vmatpush.msra.mxu0 0.0
          %3534 = vmatpush.msra.mxu0 0.0
          %3535 = vmatpush.msra.mxu0 0.0
          %3536 = vmatpush.msra.mxu0 0.0
          %3537 = vmatpush.msra.mxu0 0.0
          %3538 = vmatpush.msra.mxu0 0.0
          %3539 = vmatpush.msra.mxu0 0.0
          %3540 = vmatpush.msra.mxu0 0.0
          %3541 = vmatpush.msra.mxu0 0.0
          %3542 = vmatpush.msra.mxu0 0.0
          %v3543 = vand.u32 %v3124, 4294901760
          %3544 = vmatpush.msra.mxu0 %v3543
          %v3545 = vand.u32 %v3123, 4294901760
          %3546 = vmatpush.msra.mxu0 %v3545
          %v3547 = vand.u32 %v3361, 4294901760
          %3548 = vmatmul.f32.gmra.mxu0 %v3547
          %v3549 = vpop.f32.mrf.mxu0
          %v3550 = vadd.f32 %v3523, %v3549
          %v3551 = vand.u32 %v3364, 4294901760
          %3552 = vmatmul.f32.gmra.mxu0 %v3551
          %v3553 = vpop.f32.mrf.mxu0
          %v3554 = vadd.f32 %v3527, %v3553
          %3555 = vdwg.mxu0
          %s3556 = sld [smem:[#allocation6]]
          %v3557 = vstv %s3556
          %v3558 = vmul.f32 %v3557, %v3352
          %v3559 = vmul.f32 %v3557, %v3356
          %s3560 = sld [smem:[#allocation6 + $0x1]]
          %v3561 = vstv %s3560
          %v3562 = vmul.f32 %v3561, %v3550
          %v3563 = vmul.f32 %v3561, %v3554
          %v3564 = vadd.f32 %v3558, %v3562
          %v3565 = vadd.f32 %v3559, %v3563
          %v3566 = vmul.f32 %v3123, 2.0
          %v3567 = vmul.f32 %v3124, 2.0
          %v3568 = vadd.f32 %v3564, %v3566
          %v3569 = vadd.f32 %v3565, %v3567
          %3570 = vst [vmem:[%s463] sm:$0xff] %v3568
          %3571 = vst [vmem:[%s463 + $0x8] sm:$0xff] %v3569
        $region76: #{dan_forward.3} parent=55 // pred_fallthru
          _
        %p3572 = scmp.lt.s32.totalorder %s26, 1
        %s3573 = scalar_select %p3572, %s26, 1
        %p3574 = scmp.lt.s32.totalorder %s27, 0
        %s3575 = scalar_select %p3574, %s27, 0
        %s3576 = smul.addr %s3573, 2
        %s3577 = sadd.s32 %s3575, %s3576
        %s3578 = smul.addr %s3577, 8
        %s3579 = scalar_lea.vmem %s9, %s3578
        // Predicated region
        $region77: #{dan_forward.3} parent=55 // pred_check
          %p3580 = pneg %p275
        $region78: #{dan_forward.3} parent=55 // pred_check_branch
          %3582 = sbr.rel (%p3580) target = $region80
        $region79: #{dan_forward.3} parent=55 // pred_region
          _
        $region80: #{dan_forward.3} parent=55 // pred_fallthru
          _
      $region56: #{dan_forward.3} parent=5 // pred_fallthru
        _
      %p3583 = scmp.le.s32.totalorder 2, %s16
      // Predicated region
      $region81: #{dan_forward.3} parent=5 // pred_check
        %p3584 = pneg %p3583
      $region82: #{dan_forward.3} parent=5 // pred_check_branch
        %3586 = sbr.rel (%p3584) target = $region84
      $region83: #{dan_forward.3} parent=5 // pred_region
        %s3587 = ssub.s32 %s16, 2
        // Predicated region
        $region85: #{dan_forward.3} parent=83 // pred_check
          %p3588 = pneg %p281
        $region86: #{dan_forward.3} parent=83 // pred_check_branch
          %3590 = sbr.rel (%p3588) target = $region88
        $region87: #{dan_forward.3} parent=83 // pred_region
          %p3591 = scmp.lt.s32.totalorder %s29, 1
          %s3592 = scalar_select %p3591, %s29, 1
          %p3593 = scmp.lt.s32.totalorder %s30, 0
          %s3594 = scalar_select %p3593, %s30, 0
          %s3595 = smul.addr %s3592, 2
          %s3596 = sadd.s32 %s3594, %s3595
          %s3597 = smul.addr %s3596, 8
          %s3598 = scalar_lea.vmem %s9, %s3597
        $region88: #{dan_forward.3} parent=83 // pred_fallthru
          _
      $region84: #{dan_forward.3} parent=5 // pred_fallthru
        _
    $region6: #{dan_forward.3} parent=1 // loop_footer
      %s20 = sadd.s32 1, %s16
    $region7: #{dan_forward.3} parent=1 // loop_footer_branch
      %15 = sbr.rel target = $region3
    $region8: #{dan_forward.3} parent=1 // loop_exit
      _
    %3599 = vsyncpa [#allocation7], 1
    %s3600 = scalar_lea.sflag [#allocation7], 1
    %3601 = vsyncpa %s3600, 1

</llo_original>
